<compile_context>
chip_gen: v5e
topology: v5e:2x2
jax: 0.10.0
libtpu: 0.0.40
codegen_flags: <defaults>
</compile_context>

<pallas_src>
import functools

import jax
import jax.numpy as jnp
from jax.experimental import pallas as pl
from jax.experimental.pallas import tpu as pltpu


_B_SUB = 8     # sublane-aligned batch padding
_G = 128       # lane padding per gate block / hidden-state width inside the kernel


# ---------------------------------------------------------------------------
# Fused kernel: all LSTM layers + FC head in one pallas_call
# ---------------------------------------------------------------------------
def _make_fused_kernel(seq, b_pad, num_layers, gate_width):
    G = gate_width

    def kernel(*refs):
        # refs layout:
        #   inputs : x_flat, (w_ih_l, w_hh_l, b_l) * num_layers, w1, b1, w2, b2
        #   outputs: out (b_pad, G), h_n (L*b_pad, G), c_n (L*b_pad, G)
        #   scratch: xproj_sc (seq*b_pad, 4G) [, ys_sc (seq*b_pad, G) if num_layers > 1]
        n_in = 1 + 3 * num_layers + 4
        in_refs = refs[:n_in]
        out_ref, hn_ref, cn_ref = refs[n_in:n_in + 3]
        scratch = refs[n_in + 3:]
        xproj_sc = scratch[0]
        ys_sc = scratch[1] if num_layers > 1 else None

        x_ref = in_refs[0]
        w1_ref, b1_ref, w2_ref, b2_ref = in_refs[1 + 3 * num_layers:n_in]

        h_list, c_list = [], []
        h_last = None
        for l in range(num_layers):
            w_ih = in_refs[1 + 3 * l]
            w_hh = in_refs[2 + 3 * l]
            b_l = in_refs[3 + 3 * l]

            # Hoisted, non-recurrent input projection for the whole sequence.
            # Parked in VMEM scratch so the unrolled time loop doesn't keep a
            # (seq*b_pad, 4G) f32 value live across vregs (would spill).
            src = x_ref[...] if l == 0 else ys_sc[...]          # (seq*b_pad, in_pad)
            xproj_sc[...] = (jnp.dot(src, w_ih[...], preferred_element_type=jnp.float32)
                             + b_l[...])                         # (seq*b_pad, 4G)

            # Recurrence: h, c carried as values (registers). All slices are
            # (b_pad=8, 128)-tile aligned -> unmasked vld / vst, no XLU rotates.
            # TODO(synk): hold W_hh resident in the MXU across the time loop via
            # pltpu.matmul_push_rhs / matmul_acc_lhs / matmul_pop to drop the per-step
            # weight push from the serial h-chain.
            h = jnp.zeros((b_pad, G), jnp.float32)
            c = jnp.zeros((b_pad, G), jnp.float32)
            for t in range(seq):                                 # static -> fully unrolled
                gates = (xproj_sc[pl.ds(t * b_pad, b_pad), :]
                         + jnp.dot(h, w_hh[...], preferred_element_type=jnp.float32))
                sg = jax.nn.sigmoid(gates[:, :3 * G])            # [i|f|o] contiguous
                i_g = sg[:, 0 * G:1 * G]                         # 128-lane-aligned slices
                f_g = sg[:, 1 * G:2 * G]
                o_g = sg[:, 2 * G:3 * G]
                g_g = jnp.tanh(gates[:, 3 * G:4 * G])
                c = f_g * c + i_g * g_g
                h = o_g * jnp.tanh(c)
                if l < num_layers - 1:
                    # Only intermediate layers need the full sequence (next layer's input).
                    ys_sc[pl.ds(t * b_pad, b_pad), :] = h

            h_list.append(h)
            c_list.append(c)
            h_last = h

        # Final states: one packed, lane/sublane-dense store each (no per-layer masked writes).
        hn_ref[...] = jnp.concatenate(h_list, axis=0)
        cn_ref[...] = jnp.concatenate(c_list, axis=0)

        # FC head: Linear -> ReLU -> (Dropout = identity at eval) -> Linear, lane-dense output.
        z = jnp.maximum(
            jnp.dot(h_last, w1_ref[...], preferred_element_type=jnp.float32) + b1_ref[...],
            0.0)
        out_ref[...] = (jnp.dot(z, w2_ref[...], preferred_element_type=jnp.float32)
                        + b2_ref[...])

    return kernel


def lstm_motion_predictor_forward(packed, x, *, num_layers, hidden_size, output_size):
    """Fused forward. `packed` holds kernel-ready (padded, gate-reordered) params.

    x: (batch, seq, input_size)  ->  (out (batch, out), (h_n, c_n) each (L, batch, H))
    """
    batch, seq, input_size = x.shape
    G = _G
    b_pad = _B_SUB if batch <= _B_SUB else ((batch + _B_SUB - 1) // _B_SUB) * _B_SUB
    in_pad = packed["w_ih_0"].shape[0]

    # (batch, seq, in) -> time-major (seq, b_pad, in_pad) with zero padding, then flatten.
    x_t = jnp.transpose(x, (1, 0, 2)).astype(jnp.float32)
    x_flat = (jnp.zeros((seq, b_pad, in_pad), jnp.float32)
              .at[:, :batch, :input_size].set(x_t)
              .reshape(seq * b_pad, in_pad))

    args = [x_flat]
    for l in range(num_layers):
        args += [packed[f"w_ih_{l}"], packed[f"w_hh_{l}"], packed[f"b_{l}"]]
    args += [packed["w1"], packed["b1"], packed["w2"], packed["b2"]]

    vmem = pl.BlockSpec(memory_space=pltpu.MemorySpace.VMEM)
    scratch_shapes = [pltpu.VMEM((seq * b_pad, 4 * G), jnp.float32)]
    if num_layers > 1:
        scratch_shapes.append(pltpu.VMEM((seq * b_pad, G), jnp.float32))

    kernel = _make_fused_kernel(seq, b_pad, num_layers, G)
    out_p, hn_p, cn_p = pl.pallas_call(
        kernel,
        out_shape=(
            jax.ShapeDtypeStruct((b_pad, G), jnp.float32),
            jax.ShapeDtypeStruct((num_layers * b_pad, G), jnp.float32),
            jax.ShapeDtypeStruct((num_layers * b_pad, G), jnp.float32),
        ),
        in_specs=[vmem] * len(args),
        out_specs=(vmem, vmem, vmem),
        scratch_shapes=scratch_shapes,
    )(*args)
    # TODO(synk): at production sizes (large H / many layers) stream per-layer weights with a
    # double-buffered manual DMA (memory_space=pl.ANY) and set vmem_limit_bytes for v7x's
    # 64 MiB VMEM; add a leading batch-tile grid axis (dimension_semantics=("parallel",...))
    # to use both v7x TensorCores; optionally cast matmul operands to bf16 on v6e/v7x.

    out = out_p[:batch, :output_size]
    h_n = hn_p.reshape(num_layers, b_pad, G)[:, :batch, :hidden_size]
    c_n = cn_p.reshape(num_layers, b_pad, G)[:, :batch, :hidden_size]
    return out, (h_n, c_n)


# ---------------------------------------------------------------------------
# Parameter init (PyTorch layout: gate order i,f,g,o) + kernel packing
# ---------------------------------------------------------------------------
def init_params(key, input_size, hidden_size, num_layers, output_size):
    params = {}
    bound = 1.0 / jnp.sqrt(jnp.float32(hidden_size))
    keys = jax.random.split(key, num_layers * 4 + 4)
    ki = 0
    for l in range(num_layers):
        in_feat = input_size if l == 0 else hidden_size
        w_ih = jax.random.uniform(keys[ki], (in_feat, 4 * hidden_size),
                                  jnp.float32, -bound, bound); ki += 1
        w_hh = jax.random.uniform(keys[ki], (hidden_size, 4 * hidden_size),
                                  jnp.float32, -bound, bound); ki += 1
        b_ih = jax.random.uniform(keys[ki], (4 * hidden_size,),
                                  jnp.float32, -bound, bound); ki += 1
        b_hh = jax.random.uniform(keys[ki], (4 * hidden_size,),
                                  jnp.float32, -bound, bound); ki += 1
        params[f"w_ih_{l}"] = w_ih
        params[f"w_hh_{l}"] = w_hh
        params[f"b_{l}"] = (b_ih + b_hh).reshape(1, 4 * hidden_size)   # PyTorch order i,f,g,o
    params["w1"] = jax.random.uniform(keys[ki], (hidden_size, hidden_size),
                                      jnp.float32, -bound, bound); ki += 1
    params["b1"] = jax.random.uniform(keys[ki], (1, hidden_size),
                                      jnp.float32, -bound, bound); ki += 1
    params["w2"] = jax.random.uniform(keys[ki], (hidden_size, output_size),
                                      jnp.float32, -bound, bound); ki += 1
    params["b2"] = jax.random.uniform(keys[ki], (1, output_size),
                                      jnp.float32, -bound, bound); ki += 1
    return params


def _reorder_and_pad_gates(w, H, G=_G):
    """Last-dim [i|f|g|o] (4H) -> [i|f|o|g] with each gate block zero-padded H -> G (4G lanes)."""
    i, f, g, o = w[..., :H], w[..., H:2 * H], w[..., 2 * H:3 * H], w[..., 3 * H:]
    pad = [(0, 0)] * (w.ndim - 1) + [(0, G - H)]
    return jnp.concatenate([jnp.pad(b, pad) for b in (i, f, o, g)], axis=-1)


def _pad_rows(w, rows):
    return jnp.pad(w, ((0, rows - w.shape[0]), (0, 0)))


def _pad_cols(w, cols):
    return jnp.pad(w, ((0, 0), (0, cols - w.shape[1])))


def pack_params(params, num_layers, input_size, hidden_size, output_size):
    """Gate reorder [i|f|g|o]->[i|f|o|g], pad gate blocks to 128 lanes, pad contraction rows
    to the kernel's padded feature widths, pad head to 128 lanes. Paid once, offline."""
    G = _G
    assert hidden_size <= G and output_size <= G
    in_pad = ((input_size + G - 1) // G) * G
    packed = {}
    for l in range(num_layers):
        rows_pad = in_pad if l == 0 else G
        packed[f"w_ih_{l}"] = _pad_rows(
            _reorder_and_pad_gates(params[f"w_ih_{l}"], hidden_size), rows_pad)
        packed[f"w_hh_{l}"] = _pad_rows(
            _reorder_and_pad_gates(params[f"w_hh_{l}"], hidden_size), G)
        packed[f"b_{l}"] = _reorder_and_pad_gates(params[f"b_{l}"], hidden_size)
    packed["w1"] = _pad_cols(_pad_rows(params["w1"], G), G)
    packed["b1"] = _pad_cols(params["b1"], G)
    packed["w2"] = _pad_cols(_pad_rows(params["w2"], G), G)
    packed["b2"] = _pad_cols(params["b2"], G)
    return packed


# ---------------------------------------------------------------------------
# Pure-JAX reference (PyTorch gate order) for correctness checking
# ---------------------------------------------------------------------------
def ref_forward(params, x, *, num_layers, hidden_size):
    batch, seq, _ = x.shape
    layer_in = x
    hs, cs = [], []
    for l in range(num_layers):
        h = jnp.zeros((batch, hidden_size), jnp.float32)
        c = jnp.zeros((batch, hidden_size), jnp.float32)
        outs = []
        for t in range(seq):
            g = (layer_in[:, t, :] @ params[f"w_ih_{l}"]
                 + h @ params[f"w_hh_{l}"] + params[f"b_{l}"][0])
            i = jax.nn.sigmoid(g[:, :hidden_size])
            f = jax.nn.sigmoid(g[:, hidden_size:2 * hidden_size])
            gg = jnp.tanh(g[:, 2 * hidden_size:3 * hidden_size])
            o = jax.nn.sigmoid(g[:, 3 * hidden_size:])
            c = f * c + i * gg
            h = o * jnp.tanh(c)
            outs.append(h)
        layer_in = jnp.stack(outs, axis=1)
        hs.append(h)
        cs.append(c)
    z = jnp.maximum(layer_in[:, -1, :] @ params["w1"] + params["b1"][0], 0.0)
    out = z @ params["w2"] + params["b2"][0]
    return out, (jnp.stack(hs, axis=0), jnp.stack(cs, axis=0))


if __name__ == "__main__":
    INPUT_SIZE, HIDDEN_SIZE, NUM_LAYERS, OUTPUT_SIZE = 4, 32, 2, 3
    BATCH, SEQ = 2, 8

    key = jax.random.PRNGKey(0)
    k_param, k_x = jax.random.split(key)
    params = init_params(k_param, INPUT_SIZE, HIDDEN_SIZE, NUM_LAYERS, OUTPUT_SIZE)
    packed = pack_params(params, NUM_LAYERS, INPUT_SIZE, HIDDEN_SIZE, OUTPUT_SIZE)
    x = jax.random.normal(k_x, (BATCH, SEQ, INPUT_SIZE), jnp.float32)

    fwd = jax.jit(functools.partial(lstm_motion_predictor_forward,
                                    num_layers=NUM_LAYERS, hidden_size=HIDDEN_SIZE,
                                    output_size=OUTPUT_SIZE))
    out, (h_n, c_n) = fwd(packed, x)
    jax.block_until_ready((out, h_n, c_n))

    ref_out, (ref_h, ref_c) = ref_forward(
        params, x, num_layers=NUM_LAYERS, hidden_size=HIDDEN_SIZE)

    assert out.shape == (BATCH, OUTPUT_SIZE)
    assert h_n.shape == (NUM_LAYERS, BATCH, HIDDEN_SIZE)
    assert c_n.shape == (NUM_LAYERS, BATCH, HIDDEN_SIZE)
    assert jnp.allclose(out, ref_out, atol=1e-4, rtol=1e-4)
    assert jnp.allclose(h_n, ref_h, atol=1e-4, rtol=1e-4)
    assert jnp.allclose(c_n, ref_c, atol=1e-4, rtol=1e-4)

    print("KERNEL_OK")
</pallas_src>

<mosaic_0001>
module attributes {stable_mosaic.version = 11 : i64} {
  func.func @kernel(%arg0: memref<64x128xf32, #tpu.memory_space<vmem>>, %arg1: memref<128x512xf32, #tpu.memory_space<vmem>>, %arg2: memref<128x512xf32, #tpu.memory_space<vmem>>, %arg3: memref<1x512xf32, #tpu.memory_space<vmem>>, %arg4: memref<128x512xf32, #tpu.memory_space<vmem>>, %arg5: memref<128x512xf32, #tpu.memory_space<vmem>>, %arg6: memref<1x512xf32, #tpu.memory_space<vmem>>, %arg7: memref<128x128xf32, #tpu.memory_space<vmem>>, %arg8: memref<1x128xf32, #tpu.memory_space<vmem>>, %arg9: memref<128x128xf32, #tpu.memory_space<vmem>>, %arg10: memref<1x128xf32, #tpu.memory_space<vmem>>, %arg11: memref<8x128xf32, #tpu.memory_space<vmem>>, %arg12: memref<16x128xf32, #tpu.memory_space<vmem>>, %arg13: memref<16x128xf32, #tpu.memory_space<vmem>>, %arg14: memref<64x512xf32, #tpu.memory_space<vmem>>, %arg15: memref<64x128xf32, #tpu.memory_space<vmem>>) attributes {dimension_semantics = [], scalar_prefetch = 0 : i64, scratch_operands = 2 : i64, tpu.core_type = #tpu.core_type<tc>} {
    %c0 = arith.constant 0 : index
    %c0_0 = arith.constant 0 : index
    %0 = vector.load %arg0[%c0, %c0_0] : memref<64x128xf32, #tpu.memory_space<vmem>>, vector<64x128xf32>
    %c0_1 = arith.constant 0 : index
    %c0_2 = arith.constant 0 : index
    %1 = vector.load %arg1[%c0_1, %c0_2] : memref<128x512xf32, #tpu.memory_space<vmem>>, vector<128x512xf32>
    %cst = arith.constant dense<0.000000e+00> : vector<64x512xf32>
    %2 = tpu.matmul %0, %1, %cst {dimension_numbers = #tpu.dot_dimension_numbers<[1], [0], [0], [1], [0, 0, 1, 1], [], []>} : vector<64x128xf32>, vector<128x512xf32>, vector<64x512xf32> -> vector<64x512xf32>
    %c0_3 = arith.constant 0 : index
    %c0_4 = arith.constant 0 : index
    %3 = vector.load %arg3[%c0_3, %c0_4] : memref<1x512xf32, #tpu.memory_space<vmem>>, vector<1x512xf32>
    %4 = vector.broadcast %3 : vector<1x512xf32> to vector<64x512xf32>
    %5 = arith.addf %2, %4 : vector<64x512xf32>
    %c0_5 = arith.constant 0 : index
    %c0_6 = arith.constant 0 : index
    %6 = vector.load %arg14[%c0_5, %c0_6] : memref<64x512xf32, #tpu.memory_space<vmem>>, vector<64x512xf32>
    tpu.vector_store %arg14[%c0_5, %c0_6], %5 {strides = array<i32>} : memref<64x512xf32, #tpu.memory_space<vmem>>, vector<64x512xf32>,
    %cst_7 = arith.constant 0.000000e+00 : f32
    %7 = vector.broadcast %cst_7 : f32 to vector<8x128xf32>
    %cst_8 = arith.constant 0.000000e+00 : f32
    %8 = vector.broadcast %cst_8 : f32 to vector<8x128xf32>
    %c0_9 = arith.constant 0 : index
    %c0_10 = arith.constant 0 : index
    %9 = vector.load %arg14[%c0_9, %c0_10] : memref<64x512xf32, #tpu.memory_space<vmem>>, vector<8x512xf32>
    %c0_11 = arith.constant 0 : index
    %c0_12 = arith.constant 0 : index
    %10 = vector.load %arg2[%c0_11, %c0_12] : memref<128x512xf32, #tpu.memory_space<vmem>>, vector<128x512xf32>
    %cst_13 = arith.constant dense<0.000000e+00> : vector<8x512xf32>
    %11 = tpu.matmul %7, %10, %cst_13 {dimension_numbers = #tpu.dot_dimension_numbers<[1], [0], [0], [1], [0, 0, 1, 1], [], []>} : vector<8x128xf32>, vector<128x512xf32>, vector<8x512xf32> -> vector<8x512xf32>
    %12 = arith.addf %9, %11 : vector<8x512xf32>
    %13 = vector.extract_strided_slice %12 {offsets = [0, 0], sizes = [8, 384], strides = [1, 1]} : vector<8x512xf32> to vector<8x384xf32>
    %14 = arith.negf %13 : vector<8x384xf32>
    %15 = math.exp %14 : vector<8x384xf32>
    %cst_14 = arith.constant 1.000000e+00 : f32
    %16 = vector.broadcast %cst_14 : f32 to vector<8x384xf32>
    %17 = arith.addf %16, %15 : vector<8x384xf32>
    %18 = arith.divf %16, %17 : vector<8x384xf32>
    %19 = vector.extract_strided_slice %18 {offsets = [0, 0], sizes = [8, 128], strides = [1, 1]} : vector<8x384xf32> to vector<8x128xf32>
    %20 = vector.extract_strided_slice %18 {offsets = [0, 128], sizes = [8, 128], strides = [1, 1]} : vector<8x384xf32> to vector<8x128xf32>
    %21 = vector.extract_strided_slice %18 {offsets = [0, 256], sizes = [8, 128], strides = [1, 1]} : vector<8x384xf32> to vector<8x128xf32>
    %22 = vector.extract_strided_slice %12 {offsets = [0, 384], sizes = [8, 128], strides = [1, 1]} : vector<8x512xf32> to vector<8x128xf32>
    %23 = math.tanh %22 : vector<8x128xf32>
    %24 = arith.mulf %20, %8 : vector<8x128xf32>
    %25 = arith.mulf %19, %23 : vector<8x128xf32>
    %26 = arith.addf %24, %25 : vector<8x128xf32>
    %27 = math.tanh %26 : vector<8x128xf32>
    %28 = arith.mulf %21, %27 : vector<8x128xf32>
    %c0_15 = arith.constant 0 : index
    %c0_16 = arith.constant 0 : index
    %29 = vector.load %arg15[%c0_15, %c0_16] : memref<64x128xf32, #tpu.memory_space<vmem>>, vector<8x128xf32>
    tpu.vector_store %arg15[%c0_15, %c0_16], %28 {strides = array<i32>} : memref<64x128xf32, #tpu.memory_space<vmem>>, vector<8x128xf32>,
    %c8 = arith.constant 8 : index
    %c0_17 = arith.constant 0 : index
    %30 = vector.load %arg14[%c8, %c0_17] : memref<64x512xf32, #tpu.memory_space<vmem>>, vector<8x512xf32>
    %c0_18 = arith.constant 0 : index
    %c0_19 = arith.constant 0 : index
    %31 = vector.load %arg2[%c0_18, %c0_19] : memref<128x512xf32, #tpu.memory_space<vmem>>, vector<128x512xf32>
    %cst_20 = arith.constant dense<0.000000e+00> : vector<8x512xf32>
    %32 = tpu.matmul %28, %31, %cst_20 {dimension_numbers = #tpu.dot_dimension_numbers<[1], [0], [0], [1], [0, 0, 1, 1], [], []>} : vector<8x128xf32>, vector<128x512xf32>, vector<8x512xf32> -> vector<8x512xf32>
    %33 = arith.addf %30, %32 : vector<8x512xf32>
    %34 = vector.extract_strided_slice %33 {offsets = [0, 0], sizes = [8, 384], strides = [1, 1]} : vector<8x512xf32> to vector<8x384xf32>
    %35 = arith.negf %34 : vector<8x384xf32>
    %36 = math.exp %35 : vector<8x384xf32>
    %cst_21 = arith.constant 1.000000e+00 : f32
    %37 = vector.broadcast %cst_21 : f32 to vector<8x384xf32>
    %38 = arith.addf %37, %36 : vector<8x384xf32>
    %39 = arith.divf %37, %38 : vector<8x384xf32>
    %40 = vector.extract_strided_slice %39 {offsets = [0, 0], sizes = [8, 128], strides = [1, 1]} : vector<8x384xf32> to vector<8x128xf32>
    %41 = vector.extract_strided_slice %39 {offsets = [0, 128], sizes = [8, 128], strides = [1, 1]} : vector<8x384xf32> to vector<8x128xf32>
    %42 = vector.extract_strided_slice %39 {offsets = [0, 256], sizes = [8, 128], strides = [1, 1]} : vector<8x384xf32> to vector<8x128xf32>
    %43 = vector.extract_strided_slice %33 {offsets = [0, 384], sizes = [8, 128], strides = [1, 1]} : vector<8x512xf32> to vector<8x128xf32>
    %44 = math.tanh %43 : vector<8x128xf32>
    %45 = arith.mulf %41, %26 : vector<8x128xf32>
    %46 = arith.mulf %40, %44 : vector<8x128xf32>
    %47 = arith.addf %45, %46 : vector<8x128xf32>
    %48 = math.tanh %47 : vector<8x128xf32>
    %49 = arith.mulf %42, %48 : vector<8x128xf32>
    %c8_22 = arith.constant 8 : index
    %c0_23 = arith.constant 0 : index
    %50 = vector.load %arg15[%c8_22, %c0_23] : memref<64x128xf32, #tpu.memory_space<vmem>>, vector<8x128xf32>
    tpu.vector_store %arg15[%c8_22, %c0_23], %49 {strides = array<i32>} : memref<64x128xf32, #tpu.memory_space<vmem>>, vector<8x128xf32>,
    %c16 = arith.constant 16 : index
    %c0_24 = arith.constant 0 : index
    %51 = vector.load %arg14[%c16, %c0_24] : memref<64x512xf32, #tpu.memory_space<vmem>>, vector<8x512xf32>
    %c0_25 = arith.constant 0 : index
    %c0_26 = arith.constant 0 : index
    %52 = vector.load %arg2[%c0_25, %c0_26] : memref<128x512xf32, #tpu.memory_space<vmem>>, vector<128x512xf32>
    %cst_27 = arith.constant dense<0.000000e+00> : vector<8x512xf32>
    %53 = tpu.matmul %49, %52, %cst_27 {dimension_numbers = #tpu.dot_dimension_numbers<[1], [0], [0], [1], [0, 0, 1, 1], [], []>} : vector<8x128xf32>, vector<128x512xf32>, vector<8x512xf32> -> vector<8x512xf32>
    %54 = arith.addf %51, %53 : vector<8x512xf32>
    %55 = vector.extract_strided_slice %54 {offsets = [0, 0], sizes = [8, 384], strides = [1, 1]} : vector<8x512xf32> to vector<8x384xf32>
    %56 = arith.negf %55 : vector<8x384xf32>
    %57 = math.exp %56 : vector<8x384xf32>
    %cst_28 = arith.constant 1.000000e+00 : f32
    %58 = vector.broadcast %cst_28 : f32 to vector<8x384xf32>
    %59 = arith.addf %58, %57 : vector<8x384xf32>
    %60 = arith.divf %58, %59 : vector<8x384xf32>
    %61 = vector.extract_strided_slice %60 {offsets = [0, 0], sizes = [8, 128], strides = [1, 1]} : vector<8x384xf32> to vector<8x128xf32>
    %62 = vector.extract_strided_slice %60 {offsets = [0, 128], sizes = [8, 128], strides = [1, 1]} : vector<8x384xf32> to vector<8x128xf32>
    %63 = vector.extract_strided_slice %60 {offsets = [0, 256], sizes = [8, 128], strides = [1, 1]} : vector<8x384xf32> to vector<8x128xf32>
    %64 = vector.extract_strided_slice %54 {offsets = [0, 384], sizes = [8, 128], strides = [1, 1]} : vector<8x512xf32> to vector<8x128xf32>
    %65 = math.tanh %64 : vector<8x128xf32>
    %66 = arith.mulf %62, %47 : vector<8x128xf32>
    %67 = arith.mulf %61, %65 : vector<8x128xf32>
    %68 = arith.addf %66, %67 : vector<8x128xf32>
    %69 = math.tanh %68 : vector<8x128xf32>
    %70 = arith.mulf %63, %69 : vector<8x128xf32>
    %c16_29 = arith.constant 16 : index
    %c0_30 = arith.constant 0 : index
    %71 = vector.load %arg15[%c16_29, %c0_30] : memref<64x128xf32, #tpu.memory_space<vmem>>, vector<8x128xf32>
    tpu.vector_store %arg15[%c16_29, %c0_30], %70 {strides = array<i32>} : memref<64x128xf32, #tpu.memory_space<vmem>>, vector<8x128xf32>,
    %c24 = arith.constant 24 : index
    %c0_31 = arith.constant 0 : index
    %72 = vector.load %arg14[%c24, %c0_31] : memref<64x512xf32, #tpu.memory_space<vmem>>, vector<8x512xf32>
    %c0_32 = arith.constant 0 : index
    %c0_33 = arith.constant 0 : index
    %73 = vector.load %arg2[%c0_32, %c0_33] : memref<128x512xf32, #tpu.memory_space<vmem>>, vector<128x512xf32>
    %cst_34 = arith.constant dense<0.000000e+00> : vector<8x512xf32>
    %74 = tpu.matmul %70, %73, %cst_34 {dimension_numbers = #tpu.dot_dimension_numbers<[1], [0], [0], [1], [0, 0, 1, 1], [], []>} : vector<8x128xf32>, vector<128x512xf32>, vector<8x512xf32> -> vector<8x512xf32>
    %75 = arith.addf %72, %74 : vector<8x512xf32>
    %76 = vector.extract_strided_slice %75 {offsets = [0, 0], sizes = [8, 384], strides = [1, 1]} : vector<8x512xf32> to vector<8x384xf32>
    %77 = arith.negf %76 : vector<8x384xf32>
    %78 = math.exp %77 : vector<8x384xf32>
    %cst_35 = arith.constant 1.000000e+00 : f32
    %79 = vector.broadcast %cst_35 : f32 to vector<8x384xf32>
    %80 = arith.addf %79, %78 : vector<8x384xf32>
    %81 = arith.divf %79, %80 : vector<8x384xf32>
    %82 = vector.extract_strided_slice %81 {offsets = [0, 0], sizes = [8, 128], strides = [1, 1]} : vector<8x384xf32> to vector<8x128xf32>
    %83 = vector.extract_strided_slice %81 {offsets = [0, 128], sizes = [8, 128], strides = [1, 1]} : vector<8x384xf32> to vector<8x128xf32>
    %84 = vector.extract_strided_slice %81 {offsets = [0, 256], sizes = [8, 128], strides = [1, 1]} : vector<8x384xf32> to vector<8x128xf32>
    %85 = vector.extract_strided_slice %75 {offsets = [0, 384], sizes = [8, 128], strides = [1, 1]} : vector<8x512xf32> to vector<8x128xf32>
    %86 = math.tanh %85 : vector<8x128xf32>
    %87 = arith.mulf %83, %68 : vector<8x128xf32>
    %88 = arith.mulf %82, %86 : vector<8x128xf32>
    %89 = arith.addf %87, %88 : vector<8x128xf32>
    %90 = math.tanh %89 : vector<8x128xf32>
    %91 = arith.mulf %84, %90 : vector<8x128xf32>
    %c24_36 = arith.constant 24 : index
    %c0_37 = arith.constant 0 : index
    %92 = vector.load %arg15[%c24_36, %c0_37] : memref<64x128xf32, #tpu.memory_space<vmem>>, vector<8x128xf32>
    tpu.vector_store %arg15[%c24_36, %c0_37], %91 {strides = array<i32>} : memref<64x128xf32, #tpu.memory_space<vmem>>, vector<8x128xf32>,
    %c32 = arith.constant 32 : index
    %c0_38 = arith.constant 0 : index
    %93 = vector.load %arg14[%c32, %c0_38] : memref<64x512xf32, #tpu.memory_space<vmem>>, vector<8x512xf32>
    %c0_39 = arith.constant 0 : index
    %c0_40 = arith.constant 0 : index
    %94 = vector.load %arg2[%c0_39, %c0_40] : memref<128x512xf32, #tpu.memory_space<vmem>>, vector<128x512xf32>
    %cst_41 = arith.constant dense<0.000000e+00> : vector<8x512xf32>
    %95 = tpu.matmul %91, %94, %cst_41 {dimension_numbers = #tpu.dot_dimension_numbers<[1], [0], [0], [1], [0, 0, 1, 1], [], []>} : vector<8x128xf32>, vector<128x512xf32>, vector<8x512xf32> -> vector<8x512xf32>
    %96 = arith.addf %93, %95 : vector<8x512xf32>
    %97 = vector.extract_strided_slice %96 {offsets = [0, 0], sizes = [8, 384], strides = [1, 1]} : vector<8x512xf32> to vector<8x384xf32>
    %98 = arith.negf %97 : vector<8x384xf32>
    %99 = math.exp %98 : vector<8x384xf32>
    %cst_42 = arith.constant 1.000000e+00 : f32
    %100 = vector.broadcast %cst_42 : f32 to vector<8x384xf32>
    %101 = arith.addf %100, %99 : vector<8x384xf32>
    %102 = arith.divf %100, %101 : vector<8x384xf32>
    %103 = vector.extract_strided_slice %102 {offsets = [0, 0], sizes = [8, 128], strides = [1, 1]} : vector<8x384xf32> to vector<8x128xf32>
    %104 = vector.extract_strided_slice %102 {offsets = [0, 128], sizes = [8, 128], strides = [1, 1]} : vector<8x384xf32> to vector<8x128xf32>
    %105 = vector.extract_strided_slice %102 {offsets = [0, 256], sizes = [8, 128], strides = [1, 1]} : vector<8x384xf32> to vector<8x128xf32>
    %106 = vector.extract_strided_slice %96 {offsets = [0, 384], sizes = [8, 128], strides = [1, 1]} : vector<8x512xf32> to vector<8x128xf32>
    %107 = math.tanh %106 : vector<8x128xf32>
    %108 = arith.mulf %104, %89 : vector<8x128xf32>
    %109 = arith.mulf %103, %107 : vector<8x128xf32>
    %110 = arith.addf %108, %109 : vector<8x128xf32>
    %111 = math.tanh %110 : vector<8x128xf32>
    %112 = arith.mulf %105, %111 : vector<8x128xf32>
    %c32_43 = arith.constant 32 : index
    %c0_44 = arith.constant 0 : index
    %113 = vector.load %arg15[%c32_43, %c0_44] : memref<64x128xf32, #tpu.memory_space<vmem>>, vector<8x128xf32>
    tpu.vector_store %arg15[%c32_43, %c0_44], %112 {strides = array<i32>} : memref<64x128xf32, #tpu.memory_space<vmem>>, vector<8x128xf32>,
    %c40 = arith.constant 40 : index
    %c0_45 = arith.constant 0 : index
    %114 = vector.load %arg14[%c40, %c0_45] : memref<64x512xf32, #tpu.memory_space<vmem>>, vector<8x512xf32>
    %c0_46 = arith.constant 0 : index
    %c0_47 = arith.constant 0 : index
    %115 = vector.load %arg2[%c0_46, %c0_47] : memref<128x512xf32, #tpu.memory_space<vmem>>, vector<128x512xf32>
    %cst_48 = arith.constant dense<0.000000e+00> : vector<8x512xf32>
    %116 = tpu.matmul %112, %115, %cst_48 {dimension_numbers = #tpu.dot_dimension_numbers<[1], [0], [0], [1], [0, 0, 1, 1], [], []>} : vector<8x128xf32>, vector<128x512xf32>, vector<8x512xf32> -> vector<8x512xf32>
    %117 = arith.addf %114, %116 : vector<8x512xf32>
    %118 = vector.extract_strided_slice %117 {offsets = [0, 0], sizes = [8, 384], strides = [1, 1]} : vector<8x512xf32> to vector<8x384xf32>
    %119 = arith.negf %118 : vector<8x384xf32>
    %120 = math.exp %119 : vector<8x384xf32>
    %cst_49 = arith.constant 1.000000e+00 : f32
    %121 = vector.broadcast %cst_49 : f32 to vector<8x384xf32>
    %122 = arith.addf %121, %120 : vector<8x384xf32>
    %123 = arith.divf %121, %122 : vector<8x384xf32>
    %124 = vector.extract_strided_slice %123 {offsets = [0, 0], sizes = [8, 128], strides = [1, 1]} : vector<8x384xf32> to vector<8x128xf32>
    %125 = vector.extract_strided_slice %123 {offsets = [0, 128], sizes = [8, 128], strides = [1, 1]} : vector<8x384xf32> to vector<8x128xf32>
    %126 = vector.extract_strided_slice %123 {offsets = [0, 256], sizes = [8, 128], strides = [1, 1]} : vector<8x384xf32> to vector<8x128xf32>
    %127 = vector.extract_strided_slice %117 {offsets = [0, 384], sizes = [8, 128], strides = [1, 1]} : vector<8x512xf32> to vector<8x128xf32>
    %128 = math.tanh %127 : vector<8x128xf32>
    %129 = arith.mulf %125, %110 : vector<8x128xf32>
    %130 = arith.mulf %124, %128 : vector<8x128xf32>
    %131 = arith.addf %129, %130 : vector<8x128xf32>
    %132 = math.tanh %131 : vector<8x128xf32>
    %133 = arith.mulf %126, %132 : vector<8x128xf32>
    %c40_50 = arith.constant 40 : index
    %c0_51 = arith.constant 0 : index
    %134 = vector.load %arg15[%c40_50, %c0_51] : memref<64x128xf32, #tpu.memory_space<vmem>>, vector<8x128xf32>
    tpu.vector_store %arg15[%c40_50, %c0_51], %133 {strides = array<i32>} : memref<64x128xf32, #tpu.memory_space<vmem>>, vector<8x128xf32>,
    %c48 = arith.constant 48 : index
    %c0_52 = arith.constant 0 : index
    %135 = vector.load %arg14[%c48, %c0_52] : memref<64x512xf32, #tpu.memory_space<vmem>>, vector<8x512xf32>
    %c0_53 = arith.constant 0 : index
    %c0_54 = arith.constant 0 : index
    %136 = vector.load %arg2[%c0_53, %c0_54] : memref<128x512xf32, #tpu.memory_space<vmem>>, vector<128x512xf32>
    %cst_55 = arith.constant dense<0.000000e+00> : vector<8x512xf32>
    %137 = tpu.matmul %133, %136, %cst_55 {dimension_numbers = #tpu.dot_dimension_numbers<[1], [0], [0], [1], [0, 0, 1, 1], [], []>} : vector<8x128xf32>, vector<128x512xf32>, vector<8x512xf32> -> vector<8x512xf32>
    %138 = arith.addf %135, %137 : vector<8x512xf32>
    %139 = vector.extract_strided_slice %138 {offsets = [0, 0], sizes = [8, 384], strides = [1, 1]} : vector<8x512xf32> to vector<8x384xf32>
    %140 = arith.negf %139 : vector<8x384xf32>
    %141 = math.exp %140 : vector<8x384xf32>
    %cst_56 = arith.constant 1.000000e+00 : f32
    %142 = vector.broadcast %cst_56 : f32 to vector<8x384xf32>
    %143 = arith.addf %142, %141 : vector<8x384xf32>
    %144 = arith.divf %142, %143 : vector<8x384xf32>
    %145 = vector.extract_strided_slice %144 {offsets = [0, 0], sizes = [8, 128], strides = [1, 1]} : vector<8x384xf32> to vector<8x128xf32>
    %146 = vector.extract_strided_slice %144 {offsets = [0, 128], sizes = [8, 128], strides = [1, 1]} : vector<8x384xf32> to vector<8x128xf32>
    %147 = vector.extract_strided_slice %144 {offsets = [0, 256], sizes = [8, 128], strides = [1, 1]} : vector<8x384xf32> to vector<8x128xf32>
    %148 = vector.extract_strided_slice %138 {offsets = [0, 384], sizes = [8, 128], strides = [1, 1]} : vector<8x512xf32> to vector<8x128xf32>
    %149 = math.tanh %148 : vector<8x128xf32>
    %150 = arith.mulf %146, %131 : vector<8x128xf32>
    %151 = arith.mulf %145, %149 : vector<8x128xf32>
    %152 = arith.addf %150, %151 : vector<8x128xf32>
    %153 = math.tanh %152 : vector<8x128xf32>
    %154 = arith.mulf %147, %153 : vector<8x128xf32>
    %c48_57 = arith.constant 48 : index
    %c0_58 = arith.constant 0 : index
    %155 = vector.load %arg15[%c48_57, %c0_58] : memref<64x128xf32, #tpu.memory_space<vmem>>, vector<8x128xf32>
    tpu.vector_store %arg15[%c48_57, %c0_58], %154 {strides = array<i32>} : memref<64x128xf32, #tpu.memory_space<vmem>>, vector<8x128xf32>,
    %c56 = arith.constant 56 : index
    %c0_59 = arith.constant 0 : index
    %156 = vector.load %arg14[%c56, %c0_59] : memref<64x512xf32, #tpu.memory_space<vmem>>, vector<8x512xf32>
    %c0_60 = arith.constant 0 : index
    %c0_61 = arith.constant 0 : index
    %157 = vector.load %arg2[%c0_60, %c0_61] : memref<128x512xf32, #tpu.memory_space<vmem>>, vector<128x512xf32>
    %cst_62 = arith.constant dense<0.000000e+00> : vector<8x512xf32>
    %158 = tpu.matmul %154, %157, %cst_62 {dimension_numbers = #tpu.dot_dimension_numbers<[1], [0], [0], [1], [0, 0, 1, 1], [], []>} : vector<8x128xf32>, vector<128x512xf32>, vector<8x512xf32> -> vector<8x512xf32>
    %159 = arith.addf %156, %158 : vector<8x512xf32>
    %160 = vector.extract_strided_slice %159 {offsets = [0, 0], sizes = [8, 384], strides = [1, 1]} : vector<8x512xf32> to vector<8x384xf32>
    %161 = arith.negf %160 : vector<8x384xf32>
    %162 = math.exp %161 : vector<8x384xf32>
    %cst_63 = arith.constant 1.000000e+00 : f32
    %163 = vector.broadcast %cst_63 : f32 to vector<8x384xf32>
    %164 = arith.addf %163, %162 : vector<8x384xf32>
    %165 = arith.divf %163, %164 : vector<8x384xf32>
    %166 = vector.extract_strided_slice %165 {offsets = [0, 0], sizes = [8, 128], strides = [1, 1]} : vector<8x384xf32> to vector<8x128xf32>
    %167 = vector.extract_strided_slice %165 {offsets = [0, 128], sizes = [8, 128], strides = [1, 1]} : vector<8x384xf32> to vector<8x128xf32>
    %168 = vector.extract_strided_slice %165 {offsets = [0, 256], sizes = [8, 128], strides = [1, 1]} : vector<8x384xf32> to vector<8x128xf32>
    %169 = vector.extract_strided_slice %159 {offsets = [0, 384], sizes = [8, 128], strides = [1, 1]} : vector<8x512xf32> to vector<8x128xf32>
    %170 = math.tanh %169 : vector<8x128xf32>
    %171 = arith.mulf %167, %152 : vector<8x128xf32>
    %172 = arith.mulf %166, %170 : vector<8x128xf32>
    %173 = arith.addf %171, %172 : vector<8x128xf32>
    %174 = math.tanh %173 : vector<8x128xf32>
    %175 = arith.mulf %168, %174 : vector<8x128xf32>
    %c56_64 = arith.constant 56 : index
    %c0_65 = arith.constant 0 : index
    %176 = vector.load %arg15[%c56_64, %c0_65] : memref<64x128xf32, #tpu.memory_space<vmem>>, vector<8x128xf32>
    tpu.vector_store %arg15[%c56_64, %c0_65], %175 {strides = array<i32>} : memref<64x128xf32, #tpu.memory_space<vmem>>, vector<8x128xf32>,
    %c0_66 = arith.constant 0 : index
    %c0_67 = arith.constant 0 : index
    %177 = vector.load %arg15[%c0_66, %c0_67] : memref<64x128xf32, #tpu.memory_space<vmem>>, vector<64x128xf32>
    %c0_68 = arith.constant 0 : index
    %c0_69 = arith.constant 0 : index
    %178 = vector.load %arg4[%c0_68, %c0_69] : memref<128x512xf32, #tpu.memory_space<vmem>>, vector<128x512xf32>
    %cst_70 = arith.constant dense<0.000000e+00> : vector<64x512xf32>
    %179 = tpu.matmul %177, %178, %cst_70 {dimension_numbers = #tpu.dot_dimension_numbers<[1], [0], [0], [1], [0, 0, 1, 1], [], []>} : vector<64x128xf32>, vector<128x512xf32>, vector<64x512xf32> -> vector<64x512xf32>
    %c0_71 = arith.constant 0 : index
    %c0_72 = arith.constant 0 : index
    %180 = vector.load %arg6[%c0_71, %c0_72] : memref<1x512xf32, #tpu.memory_space<vmem>>, vector<1x512xf32>
    %181 = vector.broadcast %180 : vector<1x512xf32> to vector<64x512xf32>
    %182 = arith.addf %179, %181 : vector<64x512xf32>
    %c0_73 = arith.constant 0 : index
    %c0_74 = arith.constant 0 : index
    %183 = vector.load %arg14[%c0_73, %c0_74] : memref<64x512xf32, #tpu.memory_space<vmem>>, vector<64x512xf32>
    tpu.vector_store %arg14[%c0_73, %c0_74], %182 {strides = array<i32>} : memref<64x512xf32, #tpu.memory_space<vmem>>, vector<64x512xf32>,
    %cst_75 = arith.constant 0.000000e+00 : f32
    %184 = vector.broadcast %cst_75 : f32 to vector<8x128xf32>
    %cst_76 = arith.constant 0.000000e+00 : f32
    %185 = vector.broadcast %cst_76 : f32 to vector<8x128xf32>
    %c0_77 = arith.constant 0 : index
    %c0_78 = arith.constant 0 : index
    %186 = vector.load %arg14[%c0_77, %c0_78] : memref<64x512xf32, #tpu.memory_space<vmem>>, vector<8x512xf32>
    %c0_79 = arith.constant 0 : index
    %c0_80 = arith.constant 0 : index
    %187 = vector.load %arg5[%c0_79, %c0_80] : memref<128x512xf32, #tpu.memory_space<vmem>>, vector<128x512xf32>
    %cst_81 = arith.constant dense<0.000000e+00> : vector<8x512xf32>
    %188 = tpu.matmul %184, %187, %cst_81 {dimension_numbers = #tpu.dot_dimension_numbers<[1], [0], [0], [1], [0, 0, 1, 1], [], []>} : vector<8x128xf32>, vector<128x512xf32>, vector<8x512xf32> -> vector<8x512xf32>
    %189 = arith.addf %186, %188 : vector<8x512xf32>
    %190 = vector.extract_strided_slice %189 {offsets = [0, 0], sizes = [8, 384], strides = [1, 1]} : vector<8x512xf32> to vector<8x384xf32>
    %191 = arith.negf %190 : vector<8x384xf32>
    %192 = math.exp %191 : vector<8x384xf32>
    %cst_82 = arith.constant 1.000000e+00 : f32
    %193 = vector.broadcast %cst_82 : f32 to vector<8x384xf32>
    %194 = arith.addf %193, %192 : vector<8x384xf32>
    %195 = arith.divf %193, %194 : vector<8x384xf32>
    %196 = vector.extract_strided_slice %195 {offsets = [0, 0], sizes = [8, 128], strides = [1, 1]} : vector<8x384xf32> to vector<8x128xf32>
    %197 = vector.extract_strided_slice %195 {offsets = [0, 128], sizes = [8, 128], strides = [1, 1]} : vector<8x384xf32> to vector<8x128xf32>
    %198 = vector.extract_strided_slice %195 {offsets = [0, 256], sizes = [8, 128], strides = [1, 1]} : vector<8x384xf32> to vector<8x128xf32>
    %199 = vector.extract_strided_slice %189 {offsets = [0, 384], sizes = [8, 128], strides = [1, 1]} : vector<8x512xf32> to vector<8x128xf32>
    %200 = math.tanh %199 : vector<8x128xf32>
    %201 = arith.mulf %197, %185 : vector<8x128xf32>
    %202 = arith.mulf %196, %200 : vector<8x128xf32>
    %203 = arith.addf %201, %202 : vector<8x128xf32>
    %204 = math.tanh %203 : vector<8x128xf32>
    %205 = arith.mulf %198, %204 : vector<8x128xf32>
    %c8_83 = arith.constant 8 : index
    %c0_84 = arith.constant 0 : index
    %206 = vector.load %arg14[%c8_83, %c0_84] : memref<64x512xf32, #tpu.memory_space<vmem>>, vector<8x512xf32>
    %c0_85 = arith.constant 0 : index
    %c0_86 = arith.constant 0 : index
    %207 = vector.load %arg5[%c0_85, %c0_86] : memref<128x512xf32, #tpu.memory_space<vmem>>, vector<128x512xf32>
    %cst_87 = arith.constant dense<0.000000e+00> : vector<8x512xf32>
    %208 = tpu.matmul %205, %207, %cst_87 {dimension_numbers = #tpu.dot_dimension_numbers<[1], [0], [0], [1], [0, 0, 1, 1], [], []>} : vector<8x128xf32>, vector<128x512xf32>, vector<8x512xf32> -> vector<8x512xf32>
    %209 = arith.addf %206, %208 : vector<8x512xf32>
    %210 = vector.extract_strided_slice %209 {offsets = [0, 0], sizes = [8, 384], strides = [1, 1]} : vector<8x512xf32> to vector<8x384xf32>
    %211 = arith.negf %210 : vector<8x384xf32>
    %212 = math.exp %211 : vector<8x384xf32>
    %cst_88 = arith.constant 1.000000e+00 : f32
    %213 = vector.broadcast %cst_88 : f32 to vector<8x384xf32>
    %214 = arith.addf %213, %212 : vector<8x384xf32>
    %215 = arith.divf %213, %214 : vector<8x384xf32>
    %216 = vector.extract_strided_slice %215 {offsets = [0, 0], sizes = [8, 128], strides = [1, 1]} : vector<8x384xf32> to vector<8x128xf32>
    %217 = vector.extract_strided_slice %215 {offsets = [0, 128], sizes = [8, 128], strides = [1, 1]} : vector<8x384xf32> to vector<8x128xf32>
    %218 = vector.extract_strided_slice %215 {offsets = [0, 256], sizes = [8, 128], strides = [1, 1]} : vector<8x384xf32> to vector<8x128xf32>
    %219 = vector.extract_strided_slice %209 {offsets = [0, 384], sizes = [8, 128], strides = [1, 1]} : vector<8x512xf32> to vector<8x128xf32>
    %220 = math.tanh %219 : vector<8x128xf32>
    %221 = arith.mulf %217, %203 : vector<8x128xf32>
    %222 = arith.mulf %216, %220 : vector<8x128xf32>
    %223 = arith.addf %221, %222 : vector<8x128xf32>
    %224 = math.tanh %223 : vector<8x128xf32>
    %225 = arith.mulf %218, %224 : vector<8x128xf32>
    %c16_89 = arith.constant 16 : index
    %c0_90 = arith.constant 0 : index
    %226 = vector.load %arg14[%c16_89, %c0_90] : memref<64x512xf32, #tpu.memory_space<vmem>>, vector<8x512xf32>
    %c0_91 = arith.constant 0 : index
    %c0_92 = arith.constant 0 : index
    %227 = vector.load %arg5[%c0_91, %c0_92] : memref<128x512xf32, #tpu.memory_space<vmem>>, vector<128x512xf32>
    %cst_93 = arith.constant dense<0.000000e+00> : vector<8x512xf32>
    %228 = tpu.matmul %225, %227, %cst_93 {dimension_numbers = #tpu.dot_dimension_numbers<[1], [0], [0], [1], [0, 0, 1, 1], [], []>} : vector<8x128xf32>, vector<128x512xf32>, vector<8x512xf32> -> vector<8x512xf32>
    %229 = arith.addf %226, %228 : vector<8x512xf32>
    %230 = vector.extract_strided_slice %229 {offsets = [0, 0], sizes = [8, 384], strides = [1, 1]} : vector<8x512xf32> to vector<8x384xf32>
    %231 = arith.negf %230 : vector<8x384xf32>
    %232 = math.exp %231 : vector<8x384xf32>
    %cst_94 = arith.constant 1.000000e+00 : f32
    %233 = vector.broadcast %cst_94 : f32 to vector<8x384xf32>
    %234 = arith.addf %233, %232 : vector<8x384xf32>
    %235 = arith.divf %233, %234 : vector<8x384xf32>
    %236 = vector.extract_strided_slice %235 {offsets = [0, 0], sizes = [8, 128], strides = [1, 1]} : vector<8x384xf32> to vector<8x128xf32>
    %237 = vector.extract_strided_slice %235 {offsets = [0, 128], sizes = [8, 128], strides = [1, 1]} : vector<8x384xf32> to vector<8x128xf32>
    %238 = vector.extract_strided_slice %235 {offsets = [0, 256], sizes = [8, 128], strides = [1, 1]} : vector<8x384xf32> to vector<8x128xf32>
    %239 = vector.extract_strided_slice %229 {offsets = [0, 384], sizes = [8, 128], strides = [1, 1]} : vector<8x512xf32> to vector<8x128xf32>
    %240 = math.tanh %239 : vector<8x128xf32>
    %241 = arith.mulf %237, %223 : vector<8x128xf32>
    %242 = arith.mulf %236, %240 : vector<8x128xf32>
    %243 = arith.addf %241, %242 : vector<8x128xf32>
    %244 = math.tanh %243 : vector<8x128xf32>
    %245 = arith.mulf %238, %244 : vector<8x128xf32>
    %c24_95 = arith.constant 24 : index
    %c0_96 = arith.constant 0 : index
    %246 = vector.load %arg14[%c24_95, %c0_96] : memref<64x512xf32, #tpu.memory_space<vmem>>, vector<8x512xf32>
    %c0_97 = arith.constant 0 : index
    %c0_98 = arith.constant 0 : index
    %247 = vector.load %arg5[%c0_97, %c0_98] : memref<128x512xf32, #tpu.memory_space<vmem>>, vector<128x512xf32>
    %cst_99 = arith.constant dense<0.000000e+00> : vector<8x512xf32>
    %248 = tpu.matmul %245, %247, %cst_99 {dimension_numbers = #tpu.dot_dimension_numbers<[1], [0], [0], [1], [0, 0, 1, 1], [], []>} : vector<8x128xf32>, vector<128x512xf32>, vector<8x512xf32> -> vector<8x512xf32>
    %249 = arith.addf %246, %248 : vector<8x512xf32>
    %250 = vector.extract_strided_slice %249 {offsets = [0, 0], sizes = [8, 384], strides = [1, 1]} : vector<8x512xf32> to vector<8x384xf32>
    %251 = arith.negf %250 : vector<8x384xf32>
    %252 = math.exp %251 : vector<8x384xf32>
    %cst_100 = arith.constant 1.000000e+00 : f32
    %253 = vector.broadcast %cst_100 : f32 to vector<8x384xf32>
    %254 = arith.addf %253, %252 : vector<8x384xf32>
    %255 = arith.divf %253, %254 : vector<8x384xf32>
    %256 = vector.extract_strided_slice %255 {offsets = [0, 0], sizes = [8, 128], strides = [1, 1]} : vector<8x384xf32> to vector<8x128xf32>
    %257 = vector.extract_strided_slice %255 {offsets = [0, 128], sizes = [8, 128], strides = [1, 1]} : vector<8x384xf32> to vector<8x128xf32>
    %258 = vector.extract_strided_slice %255 {offsets = [0, 256], sizes = [8, 128], strides = [1, 1]} : vector<8x384xf32> to vector<8x128xf32>
    %259 = vector.extract_strided_slice %249 {offsets = [0, 384], sizes = [8, 128], strides = [1, 1]} : vector<8x512xf32> to vector<8x128xf32>
    %260 = math.tanh %259 : vector<8x128xf32>
    %261 = arith.mulf %257, %243 : vector<8x128xf32>
    %262 = arith.mulf %256, %260 : vector<8x128xf32>
    %263 = arith.addf %261, %262 : vector<8x128xf32>
    %264 = math.tanh %263 : vector<8x128xf32>
    %265 = arith.mulf %258, %264 : vector<8x128xf32>
    %c32_101 = arith.constant 32 : index
    %c0_102 = arith.constant 0 : index
    %266 = vector.load %arg14[%c32_101, %c0_102] : memref<64x512xf32, #tpu.memory_space<vmem>>, vector<8x512xf32>
    %c0_103 = arith.constant 0 : index
    %c0_104 = arith.constant 0 : index
    %267 = vector.load %arg5[%c0_103, %c0_104] : memref<128x512xf32, #tpu.memory_space<vmem>>, vector<128x512xf32>
    %cst_105 = arith.constant dense<0.000000e+00> : vector<8x512xf32>
    %268 = tpu.matmul %265, %267, %cst_105 {dimension_numbers = #tpu.dot_dimension_numbers<[1], [0], [0], [1], [0, 0, 1, 1], [], []>} : vector<8x128xf32>, vector<128x512xf32>, vector<8x512xf32> -> vector<8x512xf32>
    %269 = arith.addf %266, %268 : vector<8x512xf32>
    %270 = vector.extract_strided_slice %269 {offsets = [0, 0], sizes = [8, 384], strides = [1, 1]} : vector<8x512xf32> to vector<8x384xf32>
    %271 = arith.negf %270 : vector<8x384xf32>
    %272 = math.exp %271 : vector<8x384xf32>
    %cst_106 = arith.constant 1.000000e+00 : f32
    %273 = vector.broadcast %cst_106 : f32 to vector<8x384xf32>
    %274 = arith.addf %273, %272 : vector<8x384xf32>
    %275 = arith.divf %273, %274 : vector<8x384xf32>
    %276 = vector.extract_strided_slice %275 {offsets = [0, 0], sizes = [8, 128], strides = [1, 1]} : vector<8x384xf32> to vector<8x128xf32>
    %277 = vector.extract_strided_slice %275 {offsets = [0, 128], sizes = [8, 128], strides = [1, 1]} : vector<8x384xf32> to vector<8x128xf32>
    %278 = vector.extract_strided_slice %275 {offsets = [0, 256], sizes = [8, 128], strides = [1, 1]} : vector<8x384xf32> to vector<8x128xf32>
    %279 = vector.extract_strided_slice %269 {offsets = [0, 384], sizes = [8, 128], strides = [1, 1]} : vector<8x512xf32> to vector<8x128xf32>
    %280 = math.tanh %279 : vector<8x128xf32>
    %281 = arith.mulf %277, %263 : vector<8x128xf32>
    %282 = arith.mulf %276, %280 : vector<8x128xf32>
    %283 = arith.addf %281, %282 : vector<8x128xf32>
    %284 = math.tanh %283 : vector<8x128xf32>
    %285 = arith.mulf %278, %284 : vector<8x128xf32>
    %c40_107 = arith.constant 40 : index
    %c0_108 = arith.constant 0 : index
    %286 = vector.load %arg14[%c40_107, %c0_108] : memref<64x512xf32, #tpu.memory_space<vmem>>, vector<8x512xf32>
    %c0_109 = arith.constant 0 : index
    %c0_110 = arith.constant 0 : index
    %287 = vector.load %arg5[%c0_109, %c0_110] : memref<128x512xf32, #tpu.memory_space<vmem>>, vector<128x512xf32>
    %cst_111 = arith.constant dense<0.000000e+00> : vector<8x512xf32>
    %288 = tpu.matmul %285, %287, %cst_111 {dimension_numbers = #tpu.dot_dimension_numbers<[1], [0], [0], [1], [0, 0, 1, 1], [], []>} : vector<8x128xf32>, vector<128x512xf32>, vector<8x512xf32> -> vector<8x512xf32>
    %289 = arith.addf %286, %288 : vector<8x512xf32>
    %290 = vector.extract_strided_slice %289 {offsets = [0, 0], sizes = [8, 384], strides = [1, 1]} : vector<8x512xf32> to vector<8x384xf32>
    %291 = arith.negf %290 : vector<8x384xf32>
    %292 = math.exp %291 : vector<8x384xf32>
    %cst_112 = arith.constant 1.000000e+00 : f32
    %293 = vector.broadcast %cst_112 : f32 to vector<8x384xf32>
    %294 = arith.addf %293, %292 : vector<8x384xf32>
    %295 = arith.divf %293, %294 : vector<8x384xf32>
    %296 = vector.extract_strided_slice %295 {offsets = [0, 0], sizes = [8, 128], strides = [1, 1]} : vector<8x384xf32> to vector<8x128xf32>
    %297 = vector.extract_strided_slice %295 {offsets = [0, 128], sizes = [8, 128], strides = [1, 1]} : vector<8x384xf32> to vector<8x128xf32>
    %298 = vector.extract_strided_slice %295 {offsets = [0, 256], sizes = [8, 128], strides = [1, 1]} : vector<8x384xf32> to vector<8x128xf32>
    %299 = vector.extract_strided_slice %289 {offsets = [0, 384], sizes = [8, 128], strides = [1, 1]} : vector<8x512xf32> to vector<8x128xf32>
    %300 = math.tanh %299 : vector<8x128xf32>
    %301 = arith.mulf %297, %283 : vector<8x128xf32>
    %302 = arith.mulf %296, %300 : vector<8x128xf32>
    %303 = arith.addf %301, %302 : vector<8x128xf32>
    %304 = math.tanh %303 : vector<8x128xf32>
    %305 = arith.mulf %298, %304 : vector<8x128xf32>
    %c48_113 = arith.constant 48 : index
    %c0_114 = arith.constant 0 : index
    %306 = vector.load %arg14[%c48_113, %c0_114] : memref<64x512xf32, #tpu.memory_space<vmem>>, vector<8x512xf32>
    %c0_115 = arith.constant 0 : index
    %c0_116 = arith.constant 0 : index
    %307 = vector.load %arg5[%c0_115, %c0_116] : memref<128x512xf32, #tpu.memory_space<vmem>>, vector<128x512xf32>
    %cst_117 = arith.constant dense<0.000000e+00> : vector<8x512xf32>
    %308 = tpu.matmul %305, %307, %cst_117 {dimension_numbers = #tpu.dot_dimension_numbers<[1], [0], [0], [1], [0, 0, 1, 1], [], []>} : vector<8x128xf32>, vector<128x512xf32>, vector<8x512xf32> -> vector<8x512xf32>
    %309 = arith.addf %306, %308 : vector<8x512xf32>
    %310 = vector.extract_strided_slice %309 {offsets = [0, 0], sizes = [8, 384], strides = [1, 1]} : vector<8x512xf32> to vector<8x384xf32>
    %311 = arith.negf %310 : vector<8x384xf32>
    %312 = math.exp %311 : vector<8x384xf32>
    %cst_118 = arith.constant 1.000000e+00 : f32
    %313 = vector.broadcast %cst_118 : f32 to vector<8x384xf32>
    %314 = arith.addf %313, %312 : vector<8x384xf32>
    %315 = arith.divf %313, %314 : vector<8x384xf32>
    %316 = vector.extract_strided_slice %315 {offsets = [0, 0], sizes = [8, 128], strides = [1, 1]} : vector<8x384xf32> to vector<8x128xf32>
    %317 = vector.extract_strided_slice %315 {offsets = [0, 128], sizes = [8, 128], strides = [1, 1]} : vector<8x384xf32> to vector<8x128xf32>
    %318 = vector.extract_strided_slice %315 {offsets = [0, 256], sizes = [8, 128], strides = [1, 1]} : vector<8x384xf32> to vector<8x128xf32>
    %319 = vector.extract_strided_slice %309 {offsets = [0, 384], sizes = [8, 128], strides = [1, 1]} : vector<8x512xf32> to vector<8x128xf32>
    %320 = math.tanh %319 : vector<8x128xf32>
    %321 = arith.mulf %317, %303 : vector<8x128xf32>
    %322 = arith.mulf %316, %320 : vector<8x128xf32>
    %323 = arith.addf %321, %322 : vector<8x128xf32>
    %324 = math.tanh %323 : vector<8x128xf32>
    %325 = arith.mulf %318, %324 : vector<8x128xf32>
    %c56_119 = arith.constant 56 : index
    %c0_120 = arith.constant 0 : index
    %326 = vector.load %arg14[%c56_119, %c0_120] : memref<64x512xf32, #tpu.memory_space<vmem>>, vector<8x512xf32>
    %c0_121 = arith.constant 0 : index
    %c0_122 = arith.constant 0 : index
    %327 = vector.load %arg5[%c0_121, %c0_122] : memref<128x512xf32, #tpu.memory_space<vmem>>, vector<128x512xf32>
    %cst_123 = arith.constant dense<0.000000e+00> : vector<8x512xf32>
    %328 = tpu.matmul %325, %327, %cst_123 {dimension_numbers = #tpu.dot_dimension_numbers<[1], [0], [0], [1], [0, 0, 1, 1], [], []>} : vector<8x128xf32>, vector<128x512xf32>, vector<8x512xf32> -> vector<8x512xf32>
    %329 = arith.addf %326, %328 : vector<8x512xf32>
    %330 = vector.extract_strided_slice %329 {offsets = [0, 0], sizes = [8, 384], strides = [1, 1]} : vector<8x512xf32> to vector<8x384xf32>
    %331 = arith.negf %330 : vector<8x384xf32>
    %332 = math.exp %331 : vector<8x384xf32>
    %cst_124 = arith.constant 1.000000e+00 : f32
    %333 = vector.broadcast %cst_124 : f32 to vector<8x384xf32>
    %334 = arith.addf %333, %332 : vector<8x384xf32>
    %335 = arith.divf %333, %334 : vector<8x384xf32>
    %336 = vector.extract_strided_slice %335 {offsets = [0, 0], sizes = [8, 128], strides = [1, 1]} : vector<8x384xf32> to vector<8x128xf32>
    %337 = vector.extract_strided_slice %335 {offsets = [0, 128], sizes = [8, 128], strides = [1, 1]} : vector<8x384xf32> to vector<8x128xf32>
    %338 = vector.extract_strided_slice %335 {offsets = [0, 256], sizes = [8, 128], strides = [1, 1]} : vector<8x384xf32> to vector<8x128xf32>
    %339 = vector.extract_strided_slice %329 {offsets = [0, 384], sizes = [8, 128], strides = [1, 1]} : vector<8x512xf32> to vector<8x128xf32>
    %340 = math.tanh %339 : vector<8x128xf32>
    %341 = arith.mulf %337, %323 : vector<8x128xf32>
    %342 = arith.mulf %336, %340 : vector<8x128xf32>
    %343 = arith.addf %341, %342 : vector<8x128xf32>
    %344 = math.tanh %343 : vector<8x128xf32>
    %345 = arith.mulf %338, %344 : vector<8x128xf32>
    %346 = tpu.concatenate %175, %345 in 0 : vector<8x128xf32>, vector<8x128xf32> -> vector<16x128xf32>
    %c0_125 = arith.constant 0 : index
    %c0_126 = arith.constant 0 : index
    %347 = vector.load %arg12[%c0_125, %c0_126] : memref<16x128xf32, #tpu.memory_space<vmem>>, vector<16x128xf32>
    tpu.vector_store %arg12[%c0_125, %c0_126], %346 {strides = array<i32>} : memref<16x128xf32, #tpu.memory_space<vmem>>, vector<16x128xf32>,
    %348 = tpu.concatenate %173, %343 in 0 : vector<8x128xf32>, vector<8x128xf32> -> vector<16x128xf32>
    %c0_127 = arith.constant 0 : index
    %c0_128 = arith.constant 0 : index
    %349 = vector.load %arg13[%c0_127, %c0_128] : memref<16x128xf32, #tpu.memory_space<vmem>>, vector<16x128xf32>
    tpu.vector_store %arg13[%c0_127, %c0_128], %348 {strides = array<i32>} : memref<16x128xf32, #tpu.memory_space<vmem>>, vector<16x128xf32>,
    %c0_129 = arith.constant 0 : index
    %c0_130 = arith.constant 0 : index
    %350 = vector.load %arg7[%c0_129, %c0_130] : memref<128x128xf32, #tpu.memory_space<vmem>>, vector<128x128xf32>
    %cst_131 = arith.constant dense<0.000000e+00> : vector<8x128xf32>
    %351 = tpu.matmul %345, %350, %cst_131 {dimension_numbers = #tpu.dot_dimension_numbers<[1], [0], [0], [1], [0, 0, 1, 1], [], []>} : vector<8x128xf32>, vector<128x128xf32>, vector<8x128xf32> -> vector<8x128xf32>
    %c0_132 = arith.constant 0 : index
    %c0_133 = arith.constant 0 : index
    %352 = vector.load %arg8[%c0_132, %c0_133] : memref<1x128xf32, #tpu.memory_space<vmem>>, vector<1x128xf32>
    %353 = vector.broadcast %352 : vector<1x128xf32> to vector<8x128xf32>
    %354 = arith.addf %351, %353 : vector<8x128xf32>
    %cst_134 = arith.constant 0.000000e+00 : f32
    %355 = vector.broadcast %cst_134 : f32 to vector<8x128xf32>
    %356 = arith.maximumf %354, %355 : vector<8x128xf32>
    %c0_135 = arith.constant 0 : index
    %c0_136 = arith.constant 0 : index
    %357 = vector.load %arg9[%c0_135, %c0_136] : memref<128x128xf32, #tpu.memory_space<vmem>>, vector<128x128xf32>
    %cst_137 = arith.constant dense<0.000000e+00> : vector<8x128xf32>
    %358 = tpu.matmul %356, %357, %cst_137 {dimension_numbers = #tpu.dot_dimension_numbers<[1], [0], [0], [1], [0, 0, 1, 1], [], []>} : vector<8x128xf32>, vector<128x128xf32>, vector<8x128xf32> -> vector<8x128xf32>
    %c0_138 = arith.constant 0 : index
    %c0_139 = arith.constant 0 : index
    %359 = vector.load %arg10[%c0_138, %c0_139] : memref<1x128xf32, #tpu.memory_space<vmem>>, vector<1x128xf32>
    %360 = vector.broadcast %359 : vector<1x128xf32> to vector<8x128xf32>
    %361 = arith.addf %358, %360 : vector<8x128xf32>
    %c0_140 = arith.constant 0 : index
    %c0_141 = arith.constant 0 : index
    %362 = vector.load %arg11[%c0_140, %c0_141] : memref<8x128xf32, #tpu.memory_space<vmem>>, vector<8x128xf32>
    tpu.vector_store %arg11[%c0_140, %c0_141], %361 {strides = array<i32>} : memref<8x128xf32, #tpu.memory_space<vmem>>, vector<8x128xf32>,
    return
  }
}

</mosaic_0001>

<llo_original>
// kernel: lstm_motion_predictor_forward.1
$region0: #{lstm_motion_predictor_forward.1}
  #allocation0 [shape = 'u32[]', space=smem, size = 0x4, offset = 0x4, fixed_abs, tag = 'smem constant byte address 0x4 - core index']
  #allocation1 [shape = 'u32[72,128]{1,0:T(1,128)}', space=vmem, size = 0x9000, scoped, tag = 'internal scratch']
  #allocation2 [shape = 'f32[64,512]{1,0:T(8,128)}', space=vmem, size = 0x20000, scoped, tag = 'scratch operand']
  #allocation3 [shape = 'f32[64,128]{1,0:T(8,128)}', space=vmem, size = 0x8000, scoped, tag = 'scratch operand']
  %s0 = inlined_call_operand.vmem [shape: f32[64,128], index: 0, kind: input, shape index: {}]
  %s1 = inlined_call_operand.hbm [shape: f32[128,512], index: 1, kind: input, shape index: {}]
  %s2 = inlined_call_operand.hbm [shape: f32[128,512], index: 2, kind: input, shape index: {}]
  %s3 = inlined_call_operand.vmem [shape: f32[1,512], index: 3, kind: input, shape index: {}]
  %s4 = inlined_call_operand.hbm [shape: f32[128,512], index: 4, kind: input, shape index: {}]
  %s5 = inlined_call_operand.hbm [shape: f32[128,512], index: 5, kind: input, shape index: {}]
  %s6 = inlined_call_operand.vmem [shape: f32[1,512], index: 6, kind: input, shape index: {}]
  %s7 = inlined_call_operand.hbm [shape: f32[128,128], index: 7, kind: input, shape index: {}]
  %s8 = inlined_call_operand.vmem [shape: f32[1,128], index: 8, kind: input, shape index: {}]
  %s9 = inlined_call_operand.hbm [shape: f32[128,128], index: 9, kind: input, shape index: {}]
  %s10 = inlined_call_operand.vmem [shape: f32[1,128], index: 10, kind: input, shape index: {}]
  %s11 = inlined_call_operand.vmem [shape: f32[8,128], index: 11, kind: output, shape index: {0}]
  %s12 = inlined_call_operand.vmem [shape: f32[16,128], index: 12, kind: output, shape index: {1}]
  %s13 = inlined_call_operand.vmem [shape: f32[16,128], index: 13, kind: output, shape index: {2}]
  %14 = xla_tuple %s11, %s12, %s13
  %s15 = sld [smem:[#allocation0]]
  $region94: #{lstm_motion_predictor_forward.1} parent=0
    _
  %s17 = ssub.s32 1, %s15
  %s18 = scalar_select 0, %s17, %s15
  $region1: #{lstm_motion_predictor_forward.1} parent=0
    #allocation4 [shape = 'u8[262144]{0}', space=vmem, size = 0x40000, scoped, tag = 'input window, operand 1, single buffered']
    #allocation5 [shape = 's32[1]{0}', space=sflag, size = 0x4, scoped, tag = 'scoped memory for lstm_motion_predictor_forward.1']
    #allocation6 [shape = 'u8[262144]{0}', space=vmem, size = 0x40000, scoped, tag = 'input window, operand 2, single buffered']
    #allocation7 [shape = 's32[1]{0}', space=sflag, size = 0x4, scoped, tag = 'scoped memory for lstm_motion_predictor_forward.1']
    #allocation8 [shape = 'u8[262144]{0}', space=vmem, size = 0x40000, scoped, tag = 'input window, operand 4, single buffered']
    #allocation9 [shape = 'u8[262144]{0}', space=vmem, size = 0x40000, scoped, tag = 'input window, operand 5, single buffered']
    #allocation10 [shape = 's32[1]{0}', space=sflag, size = 0x4, scoped, tag = 'scoped memory for lstm_motion_predictor_forward.1']
    #allocation11 [shape = 'u8[65536]{0}', space=vmem, size = 0x10000, scoped, tag = 'input window, operand 7, single buffered']
    #allocation12 [shape = 'u8[65536]{0}', space=vmem, size = 0x10000, scoped, tag = 'input window, operand 9, single buffered']
    #allocation13 [shape = 's32[1]{0}', space=sflag, size = 0x4, scoped, tag = 'scoped memory for lstm_motion_predictor_forward.1']
    %19 = vsyncpa [#allocation5], 0
    %20 = vsyncpa [#allocation7], 0
    %21 = vsyncpa [#allocation10], 0
    %22 = vsyncpa [#allocation13], 0
    // Predicated region
    $region2: #{lstm_motion_predictor_forward.1} parent=1 // pred_check
      _
    $region3: #{lstm_motion_predictor_forward.1} parent=1 // pred_check_branch
      %24 = sbr.rel (0) target = $region5
    $region4: #{lstm_motion_predictor_forward.1} parent=1 // pred_region
      _
    $region5: #{lstm_motion_predictor_forward.1} parent=1 // pred_fallthru
      _
    // Predicated region
    $region6: #{lstm_motion_predictor_forward.1} parent=1 // pred_check
      _
    $region7: #{lstm_motion_predictor_forward.1} parent=1 // pred_check_branch
      %26 = sbr.rel (0) target = $region9
    $region8: #{lstm_motion_predictor_forward.1} parent=1 // pred_region
      %28 = vsyncadd [#allocation5], 0
      %s29 = sshll.u32 %s1, 4
      %s30 = int_to_ptr.hbm [resolvable:$true] %s29
      %s31 = sshll.u32 [#allocation4], 4
      %s32 = int_to_ptr.vmem [resolvable:$true] %s31
      %37 = dma.hbm_to_vmem [thread:$0]  %s30, 8192, %s32, [#allocation5], 512, 512, 32
    $region9: #{lstm_motion_predictor_forward.1} parent=1 // pred_fallthru
      _
    // Predicated region
    $region10: #{lstm_motion_predictor_forward.1} parent=1 // pred_check
      _
    $region11: #{lstm_motion_predictor_forward.1} parent=1 // pred_check_branch
      %39 = sbr.rel (0) target = $region13
    $region12: #{lstm_motion_predictor_forward.1} parent=1 // pred_region
      %41 = vsyncadd [#allocation7], 0
      %s42 = sshll.u32 %s2, 4
      %s43 = int_to_ptr.hbm [resolvable:$true] %s42
      %s44 = sshll.u32 [#allocation6], 4
      %s45 = int_to_ptr.vmem [resolvable:$true] %s44
      %50 = dma.hbm_to_vmem [thread:$0]  %s43, 8192, %s45, [#allocation7], 512, 512, 32
    $region13: #{lstm_motion_predictor_forward.1} parent=1 // pred_fallthru
      _
    // Predicated region
    $region14: #{lstm_motion_predictor_forward.1} parent=1 // pred_check
      _
    $region15: #{lstm_motion_predictor_forward.1} parent=1 // pred_check_branch
      %52 = sbr.rel (0) target = $region17
    $region16: #{lstm_motion_predictor_forward.1} parent=1 // pred_region
      _
    $region17: #{lstm_motion_predictor_forward.1} parent=1 // pred_fallthru
      _
    // Predicated region
    $region18: #{lstm_motion_predictor_forward.1} parent=1 // pred_check
      _
    $region19: #{lstm_motion_predictor_forward.1} parent=1 // pred_check_branch
      %54 = sbr.rel (0) target = $region21
    $region20: #{lstm_motion_predictor_forward.1} parent=1 // pred_region
      %56 = vsyncadd [#allocation7], 0
      %s57 = sshll.u32 %s4, 4
      %s58 = int_to_ptr.hbm [resolvable:$true] %s57
      %s59 = sshll.u32 [#allocation8], 4
      %s60 = int_to_ptr.vmem [resolvable:$true] %s59
      %65 = dma.hbm_to_vmem [thread:$0]  %s58, 8192, %s60, [#allocation7], 512, 512, 32
    $region21: #{lstm_motion_predictor_forward.1} parent=1 // pred_fallthru
      _
    // Predicated region
    $region22: #{lstm_motion_predictor_forward.1} parent=1 // pred_check
      _
    $region23: #{lstm_motion_predictor_forward.1} parent=1 // pred_check_branch
      %67 = sbr.rel (0) target = $region25
    $region24: #{lstm_motion_predictor_forward.1} parent=1 // pred_region
      %69 = vsyncadd [#allocation10], 0
      %s70 = sshll.u32 %s5, 4
      %s71 = int_to_ptr.hbm [resolvable:$true] %s70
      %s72 = sshll.u32 [#allocation9], 4
      %s73 = int_to_ptr.vmem [resolvable:$true] %s72
      %78 = dma.hbm_to_vmem [thread:$0]  %s71, 8192, %s73, [#allocation10], 512, 512, 32
    $region25: #{lstm_motion_predictor_forward.1} parent=1 // pred_fallthru
      _
    // Predicated region
    $region26: #{lstm_motion_predictor_forward.1} parent=1 // pred_check
      _
    $region27: #{lstm_motion_predictor_forward.1} parent=1 // pred_check_branch
      %80 = sbr.rel (0) target = $region29
    $region28: #{lstm_motion_predictor_forward.1} parent=1 // pred_region
      _
    $region29: #{lstm_motion_predictor_forward.1} parent=1 // pred_fallthru
      _
    // Predicated region
    $region30: #{lstm_motion_predictor_forward.1} parent=1 // pred_check
      _
    $region31: #{lstm_motion_predictor_forward.1} parent=1 // pred_check_branch
      %82 = sbr.rel (0) target = $region33
    $region32: #{lstm_motion_predictor_forward.1} parent=1 // pred_region
      %84 = vsyncadd [#allocation10], 0
      %s85 = sshll.u32 %s7, 4
      %s86 = int_to_ptr.hbm [resolvable:$true] %s85
      %s87 = sshll.u32 [#allocation11], 4
      %s88 = int_to_ptr.vmem [resolvable:$true] %s87
      %93 = dma.hbm_to_vmem [thread:$0]  %s86, 2048, %s88, [#allocation10], 128, 128, 8
    $region33: #{lstm_motion_predictor_forward.1} parent=1 // pred_fallthru
      _
    // Predicated region
    $region34: #{lstm_motion_predictor_forward.1} parent=1 // pred_check
      _
    $region35: #{lstm_motion_predictor_forward.1} parent=1 // pred_check_branch
      %95 = sbr.rel (0) target = $region37
    $region36: #{lstm_motion_predictor_forward.1} parent=1 // pred_region
      _
    $region37: #{lstm_motion_predictor_forward.1} parent=1 // pred_fallthru
      _
    // Predicated region
    $region38: #{lstm_motion_predictor_forward.1} parent=1 // pred_check
      _
    $region39: #{lstm_motion_predictor_forward.1} parent=1 // pred_check_branch
      %97 = sbr.rel (0) target = $region41
    $region40: #{lstm_motion_predictor_forward.1} parent=1 // pred_region
      %99 = vsyncadd [#allocation13], 0
      %s100 = sshll.u32 %s9, 4
      %s101 = int_to_ptr.hbm [resolvable:$true] %s100
      %s102 = sshll.u32 [#allocation12], 4
      %s103 = int_to_ptr.vmem [resolvable:$true] %s102
      %108 = dma.hbm_to_vmem [thread:$0]  %s101, 2048, %s103, [#allocation13], 128, 128, 8
    $region41: #{lstm_motion_predictor_forward.1} parent=1 // pred_fallthru
      _
    // Predicated region
    $region42: #{lstm_motion_predictor_forward.1} parent=1 // pred_check
      _
    $region43: #{lstm_motion_predictor_forward.1} parent=1 // pred_check_branch
      %110 = sbr.rel (0) target = $region45
    $region44: #{lstm_motion_predictor_forward.1} parent=1 // pred_region
      _
    $region45: #{lstm_motion_predictor_forward.1} parent=1 // pred_fallthru
      _
    // Predicated region
    $region46: #{lstm_motion_predictor_forward.1} parent=1 // pred_check
      _
    $region47: #{lstm_motion_predictor_forward.1} parent=1 // pred_check_branch
      %112 = sbr.rel (0) target = $region49
    $region48: #{lstm_motion_predictor_forward.1} parent=1 // pred_region
      %114 = dma.done [#allocation5], 8192
    $region49: #{lstm_motion_predictor_forward.1} parent=1 // pred_fallthru
      _
    // Predicated region
    $region50: #{lstm_motion_predictor_forward.1} parent=1 // pred_check
      _
    $region51: #{lstm_motion_predictor_forward.1} parent=1 // pred_check_branch
      %116 = sbr.rel (0) target = $region53
    $region52: #{lstm_motion_predictor_forward.1} parent=1 // pred_region
      %118 = dma.done [#allocation7], 8192
    $region53: #{lstm_motion_predictor_forward.1} parent=1 // pred_fallthru
      _
    // Predicated region
    $region54: #{lstm_motion_predictor_forward.1} parent=1 // pred_check
      _
    $region55: #{lstm_motion_predictor_forward.1} parent=1 // pred_check_branch
      %120 = sbr.rel (0) target = $region57
    $region56: #{lstm_motion_predictor_forward.1} parent=1 // pred_region
      %122 = dma.done [#allocation7], 8192
    $region57: #{lstm_motion_predictor_forward.1} parent=1 // pred_fallthru
      _
    // Predicated region
    $region58: #{lstm_motion_predictor_forward.1} parent=1 // pred_check
      _
    $region59: #{lstm_motion_predictor_forward.1} parent=1 // pred_check_branch
      %124 = sbr.rel (0) target = $region61
    $region60: #{lstm_motion_predictor_forward.1} parent=1 // pred_region
      %126 = dma.done [#allocation10], 8192
    $region61: #{lstm_motion_predictor_forward.1} parent=1 // pred_fallthru
      _
    // Predicated region
    $region62: #{lstm_motion_predictor_forward.1} parent=1 // pred_check
      _
    $region63: #{lstm_motion_predictor_forward.1} parent=1 // pred_check_branch
      %128 = sbr.rel (0) target = $region65
    $region64: #{lstm_motion_predictor_forward.1} parent=1 // pred_region
      %130 = dma.done [#allocation10], 2048
    $region65: #{lstm_motion_predictor_forward.1} parent=1 // pred_fallthru
      _
    // Predicated region
    $region66: #{lstm_motion_predictor_forward.1} parent=1 // pred_check
      _
    $region67: #{lstm_motion_predictor_forward.1} parent=1 // pred_check_branch
      %132 = sbr.rel (0) target = $region69
    $region68: #{lstm_motion_predictor_forward.1} parent=1 // pred_region
      %134 = dma.done [#allocation13], 2048
    $region69: #{lstm_motion_predictor_forward.1} parent=1 // pred_fallthru
      _
    %v135 = vld [vmem:[%s0] sm:$0xff]
    %v136 = vld [vmem:[%s0 + $0x8] sm:$0xff]
    %v137 = vld [vmem:[%s0 + $0x10] sm:$0xff]
    %v138 = vld [vmem:[%s0 + $0x18] sm:$0xff]
    %v139 = vld [vmem:[%s0 + $0x20] sm:$0xff]
    %v140 = vld [vmem:[%s0 + $0x28] sm:$0xff]
    %v141 = vld [vmem:[%s0 + $0x30] sm:$0xff]
    %v142 = vld [vmem:[%s0 + $0x38] sm:$0xff]
    %v143 = vld [vmem:[#allocation4] sm:$0xff]
    %v144 = vld [vmem:[#allocation4 + $0x8] sm:$0xff]
    %v145 = vld [vmem:[#allocation4 + $0x10] sm:$0xff]
    %v146 = vld [vmem:[#allocation4 + $0x18] sm:$0xff]
    %v147 = vld [vmem:[#allocation4 + $0x20] sm:$0xff]
    %v148 = vld [vmem:[#allocation4 + $0x28] sm:$0xff]
    %v149 = vld [vmem:[#allocation4 + $0x30] sm:$0xff]
    %v150 = vld [vmem:[#allocation4 + $0x38] sm:$0xff]
    %v151 = vld [vmem:[#allocation4 + $0x40] sm:$0xff]
    %v152 = vld [vmem:[#allocation4 + $0x48] sm:$0xff]
    %v153 = vld [vmem:[#allocation4 + $0x50] sm:$0xff]
    %v154 = vld [vmem:[#allocation4 + $0x58] sm:$0xff]
    %v155 = vld [vmem:[#allocation4 + $0x60] sm:$0xff]
    %v156 = vld [vmem:[#allocation4 + $0x68] sm:$0xff]
    %v157 = vld [vmem:[#allocation4 + $0x70] sm:$0xff]
    %v158 = vld [vmem:[#allocation4 + $0x78] sm:$0xff]
    %v159 = vld [vmem:[#allocation4 + $0x80] sm:$0xff]
    %v160 = vld [vmem:[#allocation4 + $0x88] sm:$0xff]
    %v161 = vld [vmem:[#allocation4 + $0x90] sm:$0xff]
    %v162 = vld [vmem:[#allocation4 + $0x98] sm:$0xff]
    %v163 = vld [vmem:[#allocation4 + $0xa0] sm:$0xff]
    %v164 = vld [vmem:[#allocation4 + $0xa8] sm:$0xff]
    %v165 = vld [vmem:[#allocation4 + $0xb0] sm:$0xff]
    %v166 = vld [vmem:[#allocation4 + $0xb8] sm:$0xff]
    %v167 = vld [vmem:[#allocation4 + $0xc0] sm:$0xff]
    %v168 = vld [vmem:[#allocation4 + $0xc8] sm:$0xff]
    %v169 = vld [vmem:[#allocation4 + $0xd0] sm:$0xff]
    %v170 = vld [vmem:[#allocation4 + $0xd8] sm:$0xff]
    %v171 = vld [vmem:[#allocation4 + $0xe0] sm:$0xff]
    %v172 = vld [vmem:[#allocation4 + $0xe8] sm:$0xff]
    %v173 = vld [vmem:[#allocation4 + $0xf0] sm:$0xff]
    %v174 = vld [vmem:[#allocation4 + $0xf8] sm:$0xff]
    %v175 = vld [vmem:[#allocation4 + $0x100] sm:$0xff]
    %v176 = vld [vmem:[#allocation4 + $0x108] sm:$0xff]
    %v177 = vld [vmem:[#allocation4 + $0x110] sm:$0xff]
    %v178 = vld [vmem:[#allocation4 + $0x118] sm:$0xff]
    %v179 = vld [vmem:[#allocation4 + $0x120] sm:$0xff]
    %v180 = vld [vmem:[#allocation4 + $0x128] sm:$0xff]
    %v181 = vld [vmem:[#allocation4 + $0x130] sm:$0xff]
    %v182 = vld [vmem:[#allocation4 + $0x138] sm:$0xff]
    %v183 = vld [vmem:[#allocation4 + $0x140] sm:$0xff]
    %v184 = vld [vmem:[#allocation4 + $0x148] sm:$0xff]
    %v185 = vld [vmem:[#allocation4 + $0x150] sm:$0xff]
    %v186 = vld [vmem:[#allocation4 + $0x158] sm:$0xff]
    %v187 = vld [vmem:[#allocation4 + $0x160] sm:$0xff]
    %v188 = vld [vmem:[#allocation4 + $0x168] sm:$0xff]
    %v189 = vld [vmem:[#allocation4 + $0x170] sm:$0xff]
    %v190 = vld [vmem:[#allocation4 + $0x178] sm:$0xff]
    %v191 = vld [vmem:[#allocation4 + $0x180] sm:$0xff]
    %v192 = vld [vmem:[#allocation4 + $0x188] sm:$0xff]
    %v193 = vld [vmem:[#allocation4 + $0x190] sm:$0xff]
    %v194 = vld [vmem:[#allocation4 + $0x198] sm:$0xff]
    %v195 = vld [vmem:[#allocation4 + $0x1a0] sm:$0xff]
    %v196 = vld [vmem:[#allocation4 + $0x1a8] sm:$0xff]
    %v197 = vld [vmem:[#allocation4 + $0x1b0] sm:$0xff]
    %v198 = vld [vmem:[#allocation4 + $0x1b8] sm:$0xff]
    %v199 = vld [vmem:[#allocation4 + $0x1c0] sm:$0xff]
    %v200 = vld [vmem:[#allocation4 + $0x1c8] sm:$0xff]
    %v201 = vld [vmem:[#allocation4 + $0x1d0] sm:$0xff]
    %v202 = vld [vmem:[#allocation4 + $0x1d8] sm:$0xff]
    %v203 = vld [vmem:[#allocation4 + $0x1e0] sm:$0xff]
    %v204 = vld [vmem:[#allocation4 + $0x1e8] sm:$0xff]
    %v205 = vld [vmem:[#allocation4 + $0x1f0] sm:$0xff]
    %v206 = vld [vmem:[#allocation4 + $0x1f8] sm:$0xff]
    %v207 = vld [vmem:[%s3] sm:$0xf]
    %v209 = vperm.slane %v207, 0
    %v210 = vperm.slane %v207, 1
    %v211 = vperm.slane %v207, 2
    %v212 = vperm.slane %v207, 3
    %217 = vmatpush.msra.mxu0 %v203
    %218 = vmatpush.msra.mxu0 %v199
    %219 = vmatpush.msra.mxu0 %v195
    %220 = vmatpush.msra.mxu0 %v191
    %221 = vmatpush.msra.mxu0 %v187
    %222 = vmatpush.msra.mxu0 %v183
    %223 = vmatpush.msra.mxu0 %v179
    %224 = vmatpush.msra.mxu0 %v175
    %225 = vmatpush.msra.mxu0 %v171
    %226 = vmatpush.msra.mxu0 %v167
    %227 = vmatpush.msra.mxu0 %v163
    %228 = vmatpush.msra.mxu0 %v159
    %229 = vmatpush.msra.mxu0 %v155
    %230 = vmatpush.msra.mxu0 %v151
    %231 = vmatpush.msra.mxu0 %v147
    %232 = vmatpush.msra.mxu0 %v143
    %233 = vmatmul.f32.gmra.mxu0 %v135
    %v234 = vpop.f32.mrf.mxu0
    %v235 = vadd.f32 %v209, %v234
    %236 = vmatmul.f32.gmra.mxu0 %v136
    %v237 = vpop.f32.mrf.mxu0
    %v238 = vadd.f32 %v209, %v237
    %239 = vmatmul.f32.gmra.mxu0 %v137
    %v240 = vpop.f32.mrf.mxu0
    %v241 = vadd.f32 %v209, %v240
    %242 = vmatmul.f32.gmra.mxu0 %v138
    %v243 = vpop.f32.mrf.mxu0
    %v244 = vadd.f32 %v209, %v243
    %245 = vmatmul.f32.gmra.mxu0 %v139
    %v246 = vpop.f32.mrf.mxu0
    %v247 = vadd.f32 %v209, %v246
    %248 = vmatmul.f32.gmra.mxu0 %v140
    %v249 = vpop.f32.mrf.mxu0
    %v250 = vadd.f32 %v209, %v249
    %251 = vmatmul.f32.gmra.mxu0 %v141
    %v252 = vpop.f32.mrf.mxu0
    %v253 = vadd.f32 %v209, %v252
    %254 = vmatmul.f32.gmra.mxu0 %v142
    %v255 = vpop.f32.mrf.mxu0
    %v256 = vadd.f32 %v209, %v255
    %257 = vdwg.mxu0
    %258 = vmatpush.msra.mxu0 %v204
    %259 = vmatpush.msra.mxu0 %v200
    %260 = vmatpush.msra.mxu0 %v196
    %261 = vmatpush.msra.mxu0 %v192
    %262 = vmatpush.msra.mxu0 %v188
    %263 = vmatpush.msra.mxu0 %v184
    %264 = vmatpush.msra.mxu0 %v180
    %265 = vmatpush.msra.mxu0 %v176
    %266 = vmatpush.msra.mxu0 %v172
    %267 = vmatpush.msra.mxu0 %v168
    %268 = vmatpush.msra.mxu0 %v164
    %269 = vmatpush.msra.mxu0 %v160
    %270 = vmatpush.msra.mxu0 %v156
    %271 = vmatpush.msra.mxu0 %v152
    %272 = vmatpush.msra.mxu0 %v148
    %273 = vmatpush.msra.mxu0 %v144
    %274 = vmatmul.f32.gmra.mxu0 %v135
    %v275 = vpop.f32.mrf.mxu0
    %v276 = vadd.f32 %v210, %v275
    %277 = vmatmul.f32.gmra.mxu0 %v136
    %v278 = vpop.f32.mrf.mxu0
    %v279 = vadd.f32 %v210, %v278
    %280 = vmatmul.f32.gmra.mxu0 %v137
    %v281 = vpop.f32.mrf.mxu0
    %v282 = vadd.f32 %v210, %v281
    %283 = vmatmul.f32.gmra.mxu0 %v138
    %v284 = vpop.f32.mrf.mxu0
    %v285 = vadd.f32 %v210, %v284
    %286 = vmatmul.f32.gmra.mxu0 %v139
    %v287 = vpop.f32.mrf.mxu0
    %v288 = vadd.f32 %v210, %v287
    %289 = vmatmul.f32.gmra.mxu0 %v140
    %v290 = vpop.f32.mrf.mxu0
    %v291 = vadd.f32 %v210, %v290
    %292 = vmatmul.f32.gmra.mxu0 %v141
    %v293 = vpop.f32.mrf.mxu0
    %v294 = vadd.f32 %v210, %v293
    %295 = vmatmul.f32.gmra.mxu0 %v142
    %v296 = vpop.f32.mrf.mxu0
    %v297 = vadd.f32 %v210, %v296
    %298 = vdwg.mxu0
    %299 = vmatpush.msra.mxu0 %v205
    %300 = vmatpush.msra.mxu0 %v201
    %301 = vmatpush.msra.mxu0 %v197
    %302 = vmatpush.msra.mxu0 %v193
    %303 = vmatpush.msra.mxu0 %v189
    %304 = vmatpush.msra.mxu0 %v185
    %305 = vmatpush.msra.mxu0 %v181
    %306 = vmatpush.msra.mxu0 %v177
    %307 = vmatpush.msra.mxu0 %v173
    %308 = vmatpush.msra.mxu0 %v169
    %309 = vmatpush.msra.mxu0 %v165
    %310 = vmatpush.msra.mxu0 %v161
    %311 = vmatpush.msra.mxu0 %v157
    %312 = vmatpush.msra.mxu0 %v153
    %313 = vmatpush.msra.mxu0 %v149
    %314 = vmatpush.msra.mxu0 %v145
    %315 = vmatmul.f32.gmra.mxu0 %v135
    %v316 = vpop.f32.mrf.mxu0
    %v317 = vadd.f32 %v211, %v316
    %318 = vmatmul.f32.gmra.mxu0 %v136
    %v319 = vpop.f32.mrf.mxu0
    %v320 = vadd.f32 %v211, %v319
    %321 = vmatmul.f32.gmra.mxu0 %v137
    %v322 = vpop.f32.mrf.mxu0
    %v323 = vadd.f32 %v211, %v322
    %324 = vmatmul.f32.gmra.mxu0 %v138
    %v325 = vpop.f32.mrf.mxu0
    %v326 = vadd.f32 %v211, %v325
    %327 = vmatmul.f32.gmra.mxu0 %v139
    %v328 = vpop.f32.mrf.mxu0
    %v329 = vadd.f32 %v211, %v328
    %330 = vmatmul.f32.gmra.mxu0 %v140
    %v331 = vpop.f32.mrf.mxu0
    %v332 = vadd.f32 %v211, %v331
    %333 = vmatmul.f32.gmra.mxu0 %v141
    %v334 = vpop.f32.mrf.mxu0
    %v335 = vadd.f32 %v211, %v334
    %336 = vmatmul.f32.gmra.mxu0 %v142
    %v337 = vpop.f32.mrf.mxu0
    %v338 = vadd.f32 %v211, %v337
    %339 = vdwg.mxu0
    %340 = vmatpush.msra.mxu0 %v206
    %341 = vmatpush.msra.mxu0 %v202
    %342 = vmatpush.msra.mxu0 %v198
    %343 = vmatpush.msra.mxu0 %v194
    %344 = vmatpush.msra.mxu0 %v190
    %345 = vmatpush.msra.mxu0 %v186
    %346 = vmatpush.msra.mxu0 %v182
    %347 = vmatpush.msra.mxu0 %v178
    %348 = vmatpush.msra.mxu0 %v174
    %349 = vmatpush.msra.mxu0 %v170
    %350 = vmatpush.msra.mxu0 %v166
    %351 = vmatpush.msra.mxu0 %v162
    %352 = vmatpush.msra.mxu0 %v158
    %353 = vmatpush.msra.mxu0 %v154
    %354 = vmatpush.msra.mxu0 %v150
    %355 = vmatpush.msra.mxu0 %v146
    %356 = vmatmul.f32.gmra.mxu0 %v135
    %v357 = vpop.f32.mrf.mxu0
    %v358 = vadd.f32 %v212, %v357
    %359 = vmatmul.f32.gmra.mxu0 %v136
    %v360 = vpop.f32.mrf.mxu0
    %v361 = vadd.f32 %v212, %v360
    %362 = vmatmul.f32.gmra.mxu0 %v137
    %v363 = vpop.f32.mrf.mxu0
    %v364 = vadd.f32 %v212, %v363
    %365 = vmatmul.f32.gmra.mxu0 %v138
    %v366 = vpop.f32.mrf.mxu0
    %v367 = vadd.f32 %v212, %v366
    %368 = vmatmul.f32.gmra.mxu0 %v139
    %v369 = vpop.f32.mrf.mxu0
    %v370 = vadd.f32 %v212, %v369
    %371 = vmatmul.f32.gmra.mxu0 %v140
    %v372 = vpop.f32.mrf.mxu0
    %v373 = vadd.f32 %v212, %v372
    %374 = vmatmul.f32.gmra.mxu0 %v141
    %v375 = vpop.f32.mrf.mxu0
    %v376 = vadd.f32 %v212, %v375
    %377 = vmatmul.f32.gmra.mxu0 %v142
    %v378 = vpop.f32.mrf.mxu0
    %v379 = vadd.f32 %v212, %v378
    %380 = vdwg.mxu0
    %381 = vst [vmem:[#allocation2] sm:$0xff] %v235
    %382 = vst [vmem:[#allocation2 + $0x8] sm:$0xff] %v276
    %383 = vst [vmem:[#allocation2 + $0x10] sm:$0xff] %v317
    %384 = vst [vmem:[#allocation2 + $0x18] sm:$0xff] %v358
    %385 = vst [vmem:[#allocation2 + $0x20] sm:$0xff] %v238
    %386 = vst [vmem:[#allocation2 + $0x28] sm:$0xff] %v279
    %387 = vst [vmem:[#allocation2 + $0x30] sm:$0xff] %v320
    %388 = vst [vmem:[#allocation2 + $0x38] sm:$0xff] %v361
    %389 = vst [vmem:[#allocation2 + $0x40] sm:$0xff] %v241
    %390 = vst [vmem:[#allocation2 + $0x48] sm:$0xff] %v282
    %391 = vst [vmem:[#allocation2 + $0x50] sm:$0xff] %v323
    %392 = vst [vmem:[#allocation2 + $0x58] sm:$0xff] %v364
    %393 = vst [vmem:[#allocation2 + $0x60] sm:$0xff] %v244
    %394 = vst [vmem:[#allocation2 + $0x68] sm:$0xff] %v285
    %395 = vst [vmem:[#allocation2 + $0x70] sm:$0xff] %v326
    %396 = vst [vmem:[#allocation2 + $0x78] sm:$0xff] %v367
    %397 = vst [vmem:[#allocation2 + $0x80] sm:$0xff] %v247
    %398 = vst [vmem:[#allocation2 + $0x88] sm:$0xff] %v288
    %399 = vst [vmem:[#allocation2 + $0x90] sm:$0xff] %v329
    %400 = vst [vmem:[#allocation2 + $0x98] sm:$0xff] %v370
    %401 = vst [vmem:[#allocation2 + $0xa0] sm:$0xff] %v250
    %402 = vst [vmem:[#allocation2 + $0xa8] sm:$0xff] %v291
    %403 = vst [vmem:[#allocation2 + $0xb0] sm:$0xff] %v332
    %404 = vst [vmem:[#allocation2 + $0xb8] sm:$0xff] %v373
    %405 = vst [vmem:[#allocation2 + $0xc0] sm:$0xff] %v253
    %406 = vst [vmem:[#allocation2 + $0xc8] sm:$0xff] %v294
    %407 = vst [vmem:[#allocation2 + $0xd0] sm:$0xff] %v335
    %408 = vst [vmem:[#allocation2 + $0xd8] sm:$0xff] %v376
    %409 = vst [vmem:[#allocation2 + $0xe0] sm:$0xff] %v256
    %410 = vst [vmem:[#allocation2 + $0xe8] sm:$0xff] %v297
    %411 = vst [vmem:[#allocation2 + $0xf0] sm:$0xff] %v338
    %412 = vst [vmem:[#allocation2 + $0xf8] sm:$0xff] %v379
    %v413 = vld [vmem:[#allocation2] sm:$0xff]
    %v414 = vld [vmem:[#allocation2 + $0x8] sm:$0xff]
    %v415 = vld [vmem:[#allocation2 + $0x10] sm:$0xff]
    %v416 = vld [vmem:[#allocation2 + $0x18] sm:$0xff]
    %v417 = vld [vmem:[#allocation6] sm:$0xff]
    %v418 = vld [vmem:[#allocation6 + $0x8] sm:$0xff]
    %v419 = vld [vmem:[#allocation6 + $0x10] sm:$0xff]
    %v420 = vld [vmem:[#allocation6 + $0x18] sm:$0xff]
    %v421 = vld [vmem:[#allocation6 + $0x20] sm:$0xff]
    %v422 = vld [vmem:[#allocation6 + $0x28] sm:$0xff]
    %v423 = vld [vmem:[#allocation6 + $0x30] sm:$0xff]
    %v424 = vld [vmem:[#allocation6 + $0x38] sm:$0xff]
    %v425 = vld [vmem:[#allocation6 + $0x40] sm:$0xff]
    %v426 = vld [vmem:[#allocation6 + $0x48] sm:$0xff]
    %v427 = vld [vmem:[#allocation6 + $0x50] sm:$0xff]
    %v428 = vld [vmem:[#allocation6 + $0x58] sm:$0xff]
    %v429 = vld [vmem:[#allocation6 + $0x60] sm:$0xff]
    %v430 = vld [vmem:[#allocation6 + $0x68] sm:$0xff]
    %v431 = vld [vmem:[#allocation6 + $0x70] sm:$0xff]
    %v432 = vld [vmem:[#allocation6 + $0x78] sm:$0xff]
    %v433 = vld [vmem:[#allocation6 + $0x80] sm:$0xff]
    %v434 = vld [vmem:[#allocation6 + $0x88] sm:$0xff]
    %v435 = vld [vmem:[#allocation6 + $0x90] sm:$0xff]
    %v436 = vld [vmem:[#allocation6 + $0x98] sm:$0xff]
    %v437 = vld [vmem:[#allocation6 + $0xa0] sm:$0xff]
    %v438 = vld [vmem:[#allocation6 + $0xa8] sm:$0xff]
    %v439 = vld [vmem:[#allocation6 + $0xb0] sm:$0xff]
    %v440 = vld [vmem:[#allocation6 + $0xb8] sm:$0xff]
    %v441 = vld [vmem:[#allocation6 + $0xc0] sm:$0xff]
    %v442 = vld [vmem:[#allocation6 + $0xc8] sm:$0xff]
    %v443 = vld [vmem:[#allocation6 + $0xd0] sm:$0xff]
    %v444 = vld [vmem:[#allocation6 + $0xd8] sm:$0xff]
    %v445 = vld [vmem:[#allocation6 + $0xe0] sm:$0xff]
    %v446 = vld [vmem:[#allocation6 + $0xe8] sm:$0xff]
    %v447 = vld [vmem:[#allocation6 + $0xf0] sm:$0xff]
    %v448 = vld [vmem:[#allocation6 + $0xf8] sm:$0xff]
    %v449 = vld [vmem:[#allocation6 + $0x100] sm:$0xff]
    %v450 = vld [vmem:[#allocation6 + $0x108] sm:$0xff]
    %v451 = vld [vmem:[#allocation6 + $0x110] sm:$0xff]
    %v452 = vld [vmem:[#allocation6 + $0x118] sm:$0xff]
    %v453 = vld [vmem:[#allocation6 + $0x120] sm:$0xff]
    %v454 = vld [vmem:[#allocation6 + $0x128] sm:$0xff]
    %v455 = vld [vmem:[#allocation6 + $0x130] sm:$0xff]
    %v456 = vld [vmem:[#allocation6 + $0x138] sm:$0xff]
    %v457 = vld [vmem:[#allocation6 + $0x140] sm:$0xff]
    %v458 = vld [vmem:[#allocation6 + $0x148] sm:$0xff]
    %v459 = vld [vmem:[#allocation6 + $0x150] sm:$0xff]
    %v460 = vld [vmem:[#allocation6 + $0x158] sm:$0xff]
    %v461 = vld [vmem:[#allocation6 + $0x160] sm:$0xff]
    %v462 = vld [vmem:[#allocation6 + $0x168] sm:$0xff]
    %v463 = vld [vmem:[#allocation6 + $0x170] sm:$0xff]
    %v464 = vld [vmem:[#allocation6 + $0x178] sm:$0xff]
    %v465 = vld [vmem:[#allocation6 + $0x180] sm:$0xff]
    %v466 = vld [vmem:[#allocation6 + $0x188] sm:$0xff]
    %v467 = vld [vmem:[#allocation6 + $0x190] sm:$0xff]
    %v468 = vld [vmem:[#allocation6 + $0x198] sm:$0xff]
    %v469 = vld [vmem:[#allocation6 + $0x1a0] sm:$0xff]
    %v470 = vld [vmem:[#allocation6 + $0x1a8] sm:$0xff]
    %v471 = vld [vmem:[#allocation6 + $0x1b0] sm:$0xff]
    %v472 = vld [vmem:[#allocation6 + $0x1b8] sm:$0xff]
    %v473 = vld [vmem:[#allocation6 + $0x1c0] sm:$0xff]
    %v474 = vld [vmem:[#allocation6 + $0x1c8] sm:$0xff]
    %v475 = vld [vmem:[#allocation6 + $0x1d0] sm:$0xff]
    %v476 = vld [vmem:[#allocation6 + $0x1d8] sm:$0xff]
    %v477 = vld [vmem:[#allocation6 + $0x1e0] sm:$0xff]
    %v478 = vld [vmem:[#allocation6 + $0x1e8] sm:$0xff]
    %v479 = vld [vmem:[#allocation6 + $0x1f0] sm:$0xff]
    %v480 = vld [vmem:[#allocation6 + $0x1f8] sm:$0xff]
    %481 = vmatpush.msra.mxu0 %v477
    %482 = vmatpush.msra.mxu0 %v473
    %483 = vmatpush.msra.mxu0 %v469
    %484 = vmatpush.msra.mxu0 %v465
    %485 = vmatpush.msra.mxu0 %v461
    %486 = vmatpush.msra.mxu0 %v457
    %487 = vmatpush.msra.mxu0 %v453
    %488 = vmatpush.msra.mxu0 %v449
    %489 = vmatpush.msra.mxu0 %v445
    %490 = vmatpush.msra.mxu0 %v441
    %491 = vmatpush.msra.mxu0 %v437
    %492 = vmatpush.msra.mxu0 %v433
    %493 = vmatpush.msra.mxu0 %v429
    %494 = vmatpush.msra.mxu0 %v425
    %495 = vmatpush.msra.mxu0 %v421
    %496 = vmatpush.msra.mxu0 %v417
    %497 = vmatmul.f32.gmra.mxu0 0.0
    %v498 = vpop.f32.mrf.mxu0
    %v499 = vadd.f32 0.0, %v498
    %500 = vdwg.mxu0
    %501 = vmatpush.msra.mxu0 %v478
    %502 = vmatpush.msra.mxu0 %v474
    %503 = vmatpush.msra.mxu0 %v470
    %504 = vmatpush.msra.mxu0 %v466
    %505 = vmatpush.msra.mxu0 %v462
    %506 = vmatpush.msra.mxu0 %v458
    %507 = vmatpush.msra.mxu0 %v454
    %508 = vmatpush.msra.mxu0 %v450
    %509 = vmatpush.msra.mxu0 %v446
    %510 = vmatpush.msra.mxu0 %v442
    %511 = vmatpush.msra.mxu0 %v438
    %512 = vmatpush.msra.mxu0 %v434
    %513 = vmatpush.msra.mxu0 %v430
    %514 = vmatpush.msra.mxu0 %v426
    %515 = vmatpush.msra.mxu0 %v422
    %516 = vmatpush.msra.mxu0 %v418
    %517 = vmatmul.f32.gmra.mxu0 0.0
    %v518 = vpop.f32.mrf.mxu0
    %v519 = vadd.f32 0.0, %v518
    %520 = vdwg.mxu0
    %521 = vmatpush.msra.mxu0 %v479
    %522 = vmatpush.msra.mxu0 %v475
    %523 = vmatpush.msra.mxu0 %v471
    %524 = vmatpush.msra.mxu0 %v467
    %525 = vmatpush.msra.mxu0 %v463
    %526 = vmatpush.msra.mxu0 %v459
    %527 = vmatpush.msra.mxu0 %v455
    %528 = vmatpush.msra.mxu0 %v451
    %529 = vmatpush.msra.mxu0 %v447
    %530 = vmatpush.msra.mxu0 %v443
    %531 = vmatpush.msra.mxu0 %v439
    %532 = vmatpush.msra.mxu0 %v435
    %533 = vmatpush.msra.mxu0 %v431
    %534 = vmatpush.msra.mxu0 %v427
    %535 = vmatpush.msra.mxu0 %v423
    %536 = vmatpush.msra.mxu0 %v419
    %537 = vmatmul.f32.gmra.mxu0 0.0
    %v538 = vpop.f32.mrf.mxu0
    %v539 = vadd.f32 0.0, %v538
    %540 = vdwg.mxu0
    %541 = vmatpush.msra.mxu0 %v480
    %542 = vmatpush.msra.mxu0 %v476
    %543 = vmatpush.msra.mxu0 %v472
    %544 = vmatpush.msra.mxu0 %v468
    %545 = vmatpush.msra.mxu0 %v464
    %546 = vmatpush.msra.mxu0 %v460
    %547 = vmatpush.msra.mxu0 %v456
    %548 = vmatpush.msra.mxu0 %v452
    %549 = vmatpush.msra.mxu0 %v448
    %550 = vmatpush.msra.mxu0 %v444
    %551 = vmatpush.msra.mxu0 %v440
    %552 = vmatpush.msra.mxu0 %v436
    %553 = vmatpush.msra.mxu0 %v432
    %554 = vmatpush.msra.mxu0 %v428
    %555 = vmatpush.msra.mxu0 %v424
    %556 = vmatpush.msra.mxu0 %v420
    %557 = vmatmul.f32.gmra.mxu0 0.0
    %v558 = vpop.f32.mrf.mxu0
    %v559 = vadd.f32 0.0, %v558
    %560 = vdwg.mxu0
    %v561 = vadd.f32 %v413, %v499
    %v562 = vadd.f32 %v414, %v519
    %v563 = vadd.f32 %v415, %v539
    %v564 = vadd.f32 %v416, %v559
    %v565 = vxor.u32 %v561, 2147483648
    %v566 = vxor.u32 %v562, 2147483648
    %v567 = vxor.u32 %v563, 2147483648
    %v568 = vmul.f32 %v565, 1.442695
    %v569 = vpow.pop %v568
    %v570 = vmul.f32 %v566, 1.442695
    %v571 = vpow.pop %v570
    %v572 = vmul.f32 %v567, 1.442695
    %v573 = vpow.pop %v572
    %v574 = vadd.f32 %v569, 1.0
    %v575 = vadd.f32 %v571, 1.0
    %v576 = vadd.f32 %v573, 1.0
    %v577 = vrcp.pop %v574
    %v578 = vmul.f32 %v574, %v577
    %v579 = vsub.f32 1.0, %v578
    %v580 = vmul.f32 %v577, %v579
    %v581 = vadd.f32 %v577, %v580
    %vm582 = vweird.f32 %v574
    %vm583 = vweird.f32 %v577
    %vm584 = vmor %vm582, %vm583
    %v585 = vsel %vm584, %v577, %v581
    %v586 = vand.u32 2147483647, %v574
    %vm587 = vcmp.eq.f32.partialorder %v586, 8.507059e+37
    %v588 = vand.u32 %v574, 2147483648
    %v589 = vor.u32 1.1754944e-38, %v588
    %v590 = vsel %vm587, %v589, %v585
    %v591 = vmul.f32 1.0, %v590
    %v592 = vrcp.pop %v575
    %v593 = vmul.f32 %v575, %v592
    %v594 = vsub.f32 1.0, %v593
    %v595 = vmul.f32 %v592, %v594
    %v596 = vadd.f32 %v592, %v595
    %vm597 = vweird.f32 %v575
    %vm598 = vweird.f32 %v592
    %vm599 = vmor %vm597, %vm598
    %v600 = vsel %vm599, %v592, %v596
    %v601 = vand.u32 2147483647, %v575
    %vm602 = vcmp.eq.f32.partialorder %v601, 8.507059e+37
    %v603 = vand.u32 %v575, 2147483648
    %v604 = vor.u32 1.1754944e-38, %v603
    %v605 = vsel %vm602, %v604, %v600
    %v606 = vmul.f32 1.0, %v605
    %v607 = vrcp.pop %v576
    %v608 = vmul.f32 %v576, %v607
    %v609 = vsub.f32 1.0, %v608
    %v610 = vmul.f32 %v607, %v609
    %v611 = vadd.f32 %v607, %v610
    %vm612 = vweird.f32 %v576
    %vm613 = vweird.f32 %v607
    %vm614 = vmor %vm612, %vm613
    %v615 = vsel %vm614, %v607, %v611
    %v616 = vand.u32 2147483647, %v576
    %vm617 = vcmp.eq.f32.partialorder %v616, 8.507059e+37
    %v618 = vand.u32 %v576, 2147483648
    %v619 = vor.u32 1.1754944e-38, %v618
    %v620 = vsel %vm617, %v619, %v615
    %v621 = vmul.f32 1.0, %v620
    %v622 = vtanh.pop %v564
    %v623 = vmul.f32 %v606, 0.0
    %v624 = vmul.f32 %v591, %v622
    %v625 = vadd.f32 %v623, %v624
    %v626 = vtanh.pop %v625
    %v627 = vmul.f32 %v621, %v626
    %628 = vst [vmem:[#allocation3] sm:$0xff] %v627
    %v629 = vld [vmem:[#allocation2 + $0x20] sm:$0xff]
    %v630 = vld [vmem:[#allocation2 + $0x28] sm:$0xff]
    %v631 = vld [vmem:[#allocation2 + $0x30] sm:$0xff]
    %v632 = vld [vmem:[#allocation2 + $0x38] sm:$0xff]
    %v633 = vld [vmem:[#allocation6] sm:$0xff]
    %v634 = vld [vmem:[#allocation6 + $0x8] sm:$0xff]
    %v635 = vld [vmem:[#allocation6 + $0x10] sm:$0xff]
    %v636 = vld [vmem:[#allocation6 + $0x18] sm:$0xff]
    %v637 = vld [vmem:[#allocation6 + $0x20] sm:$0xff]
    %v638 = vld [vmem:[#allocation6 + $0x28] sm:$0xff]
    %v639 = vld [vmem:[#allocation6 + $0x30] sm:$0xff]
    %v640 = vld [vmem:[#allocation6 + $0x38] sm:$0xff]
    %v641 = vld [vmem:[#allocation6 + $0x40] sm:$0xff]
    %v642 = vld [vmem:[#allocation6 + $0x48] sm:$0xff]
    %v643 = vld [vmem:[#allocation6 + $0x50] sm:$0xff]
    %v644 = vld [vmem:[#allocation6 + $0x58] sm:$0xff]
    %v645 = vld [vmem:[#allocation6 + $0x60] sm:$0xff]
    %v646 = vld [vmem:[#allocation6 + $0x68] sm:$0xff]
    %v647 = vld [vmem:[#allocation6 + $0x70] sm:$0xff]
    %v648 = vld [vmem:[#allocation6 + $0x78] sm:$0xff]
    %v649 = vld [vmem:[#allocation6 + $0x80] sm:$0xff]
    %v650 = vld [vmem:[#allocation6 + $0x88] sm:$0xff]
    %v651 = vld [vmem:[#allocation6 + $0x90] sm:$0xff]
    %v652 = vld [vmem:[#allocation6 + $0x98] sm:$0xff]
    %v653 = vld [vmem:[#allocation6 + $0xa0] sm:$0xff]
    %v654 = vld [vmem:[#allocation6 + $0xa8] sm:$0xff]
    %v655 = vld [vmem:[#allocation6 + $0xb0] sm:$0xff]
    %v656 = vld [vmem:[#allocation6 + $0xb8] sm:$0xff]
    %v657 = vld [vmem:[#allocation6 + $0xc0] sm:$0xff]
    %v658 = vld [vmem:[#allocation6 + $0xc8] sm:$0xff]
    %v659 = vld [vmem:[#allocation6 + $0xd0] sm:$0xff]
    %v660 = vld [vmem:[#allocation6 + $0xd8] sm:$0xff]
    %v661 = vld [vmem:[#allocation6 + $0xe0] sm:$0xff]
    %v662 = vld [vmem:[#allocation6 + $0xe8] sm:$0xff]
    %v663 = vld [vmem:[#allocation6 + $0xf0] sm:$0xff]
    %v664 = vld [vmem:[#allocation6 + $0xf8] sm:$0xff]
    %v665 = vld [vmem:[#allocation6 + $0x100] sm:$0xff]
    %v666 = vld [vmem:[#allocation6 + $0x108] sm:$0xff]
    %v667 = vld [vmem:[#allocation6 + $0x110] sm:$0xff]
    %v668 = vld [vmem:[#allocation6 + $0x118] sm:$0xff]
    %v669 = vld [vmem:[#allocation6 + $0x120] sm:$0xff]
    %v670 = vld [vmem:[#allocation6 + $0x128] sm:$0xff]
    %v671 = vld [vmem:[#allocation6 + $0x130] sm:$0xff]
    %v672 = vld [vmem:[#allocation6 + $0x138] sm:$0xff]
    %v673 = vld [vmem:[#allocation6 + $0x140] sm:$0xff]
    %v674 = vld [vmem:[#allocation6 + $0x148] sm:$0xff]
    %v675 = vld [vmem:[#allocation6 + $0x150] sm:$0xff]
    %v676 = vld [vmem:[#allocation6 + $0x158] sm:$0xff]
    %v677 = vld [vmem:[#allocation6 + $0x160] sm:$0xff]
    %v678 = vld [vmem:[#allocation6 + $0x168] sm:$0xff]
    %v679 = vld [vmem:[#allocation6 + $0x170] sm:$0xff]
    %v680 = vld [vmem:[#allocation6 + $0x178] sm:$0xff]
    %v681 = vld [vmem:[#allocation6 + $0x180] sm:$0xff]
    %v682 = vld [vmem:[#allocation6 + $0x188] sm:$0xff]
    %v683 = vld [vmem:[#allocation6 + $0x190] sm:$0xff]
    %v684 = vld [vmem:[#allocation6 + $0x198] sm:$0xff]
    %v685 = vld [vmem:[#allocation6 + $0x1a0] sm:$0xff]
    %v686 = vld [vmem:[#allocation6 + $0x1a8] sm:$0xff]
    %v687 = vld [vmem:[#allocation6 + $0x1b0] sm:$0xff]
    %v688 = vld [vmem:[#allocation6 + $0x1b8] sm:$0xff]
    %v689 = vld [vmem:[#allocation6 + $0x1c0] sm:$0xff]
    %v690 = vld [vmem:[#allocation6 + $0x1c8] sm:$0xff]
    %v691 = vld [vmem:[#allocation6 + $0x1d0] sm:$0xff]
    %v692 = vld [vmem:[#allocation6 + $0x1d8] sm:$0xff]
    %v693 = vld [vmem:[#allocation6 + $0x1e0] sm:$0xff]
    %v694 = vld [vmem:[#allocation6 + $0x1e8] sm:$0xff]
    %v695 = vld [vmem:[#allocation6 + $0x1f0] sm:$0xff]
    %v696 = vld [vmem:[#allocation6 + $0x1f8] sm:$0xff]
    %697 = vmatpush.msra.mxu0 %v693
    %698 = vmatpush.msra.mxu0 %v689
    %699 = vmatpush.msra.mxu0 %v685
    %700 = vmatpush.msra.mxu0 %v681
    %701 = vmatpush.msra.mxu0 %v677
    %702 = vmatpush.msra.mxu0 %v673
    %703 = vmatpush.msra.mxu0 %v669
    %704 = vmatpush.msra.mxu0 %v665
    %705 = vmatpush.msra.mxu0 %v661
    %706 = vmatpush.msra.mxu0 %v657
    %707 = vmatpush.msra.mxu0 %v653
    %708 = vmatpush.msra.mxu0 %v649
    %709 = vmatpush.msra.mxu0 %v645
    %710 = vmatpush.msra.mxu0 %v641
    %711 = vmatpush.msra.mxu0 %v637
    %712 = vmatpush.msra.mxu0 %v633
    %713 = vmatmul.f32.gmra.mxu0 %v627
    %v714 = vpop.f32.mrf.mxu0
    %v715 = vadd.f32 0.0, %v714
    %716 = vdwg.mxu0
    %717 = vmatpush.msra.mxu0 %v694
    %718 = vmatpush.msra.mxu0 %v690
    %719 = vmatpush.msra.mxu0 %v686
    %720 = vmatpush.msra.mxu0 %v682
    %721 = vmatpush.msra.mxu0 %v678
    %722 = vmatpush.msra.mxu0 %v674
    %723 = vmatpush.msra.mxu0 %v670
    %724 = vmatpush.msra.mxu0 %v666
    %725 = vmatpush.msra.mxu0 %v662
    %726 = vmatpush.msra.mxu0 %v658
    %727 = vmatpush.msra.mxu0 %v654
    %728 = vmatpush.msra.mxu0 %v650
    %729 = vmatpush.msra.mxu0 %v646
    %730 = vmatpush.msra.mxu0 %v642
    %731 = vmatpush.msra.mxu0 %v638
    %732 = vmatpush.msra.mxu0 %v634
    %733 = vmatmul.f32.gmra.mxu0 %v627
    %v734 = vpop.f32.mrf.mxu0
    %v735 = vadd.f32 0.0, %v734
    %736 = vdwg.mxu0
    %737 = vmatpush.msra.mxu0 %v695
    %738 = vmatpush.msra.mxu0 %v691
    %739 = vmatpush.msra.mxu0 %v687
    %740 = vmatpush.msra.mxu0 %v683
    %741 = vmatpush.msra.mxu0 %v679
    %742 = vmatpush.msra.mxu0 %v675
    %743 = vmatpush.msra.mxu0 %v671
    %744 = vmatpush.msra.mxu0 %v667
    %745 = vmatpush.msra.mxu0 %v663
    %746 = vmatpush.msra.mxu0 %v659
    %747 = vmatpush.msra.mxu0 %v655
    %748 = vmatpush.msra.mxu0 %v651
    %749 = vmatpush.msra.mxu0 %v647
    %750 = vmatpush.msra.mxu0 %v643
    %751 = vmatpush.msra.mxu0 %v639
    %752 = vmatpush.msra.mxu0 %v635
    %753 = vmatmul.f32.gmra.mxu0 %v627
    %v754 = vpop.f32.mrf.mxu0
    %v755 = vadd.f32 0.0, %v754
    %756 = vdwg.mxu0
    %757 = vmatpush.msra.mxu0 %v696
    %758 = vmatpush.msra.mxu0 %v692
    %759 = vmatpush.msra.mxu0 %v688
    %760 = vmatpush.msra.mxu0 %v684
    %761 = vmatpush.msra.mxu0 %v680
    %762 = vmatpush.msra.mxu0 %v676
    %763 = vmatpush.msra.mxu0 %v672
    %764 = vmatpush.msra.mxu0 %v668
    %765 = vmatpush.msra.mxu0 %v664
    %766 = vmatpush.msra.mxu0 %v660
    %767 = vmatpush.msra.mxu0 %v656
    %768 = vmatpush.msra.mxu0 %v652
    %769 = vmatpush.msra.mxu0 %v648
    %770 = vmatpush.msra.mxu0 %v644
    %771 = vmatpush.msra.mxu0 %v640
    %772 = vmatpush.msra.mxu0 %v636
    %773 = vmatmul.f32.gmra.mxu0 %v627
    %v774 = vpop.f32.mrf.mxu0
    %v775 = vadd.f32 0.0, %v774
    %776 = vdwg.mxu0
    %v777 = vadd.f32 %v629, %v715
    %v778 = vadd.f32 %v630, %v735
    %v779 = vadd.f32 %v631, %v755
    %v780 = vadd.f32 %v632, %v775
    %v781 = vxor.u32 %v777, 2147483648
    %v782 = vxor.u32 %v778, 2147483648
    %v783 = vxor.u32 %v779, 2147483648
    %v784 = vmul.f32 %v781, 1.442695
    %v785 = vpow.pop %v784
    %v786 = vmul.f32 %v782, 1.442695
    %v787 = vpow.pop %v786
    %v788 = vmul.f32 %v783, 1.442695
    %v789 = vpow.pop %v788
    %v790 = vadd.f32 %v785, 1.0
    %v791 = vadd.f32 %v787, 1.0
    %v792 = vadd.f32 %v789, 1.0
    %v793 = vrcp.pop %v790
    %v794 = vmul.f32 %v790, %v793
    %v795 = vsub.f32 1.0, %v794
    %v796 = vmul.f32 %v793, %v795
    %v797 = vadd.f32 %v793, %v796
    %vm798 = vweird.f32 %v790
    %vm799 = vweird.f32 %v793
    %vm800 = vmor %vm798, %vm799
    %v801 = vsel %vm800, %v793, %v797
    %v802 = vand.u32 2147483647, %v790
    %vm803 = vcmp.eq.f32.partialorder %v802, 8.507059e+37
    %v804 = vand.u32 %v790, 2147483648
    %v805 = vor.u32 1.1754944e-38, %v804
    %v806 = vsel %vm803, %v805, %v801
    %v807 = vmul.f32 1.0, %v806
    %v808 = vrcp.pop %v791
    %v809 = vmul.f32 %v791, %v808
    %v810 = vsub.f32 1.0, %v809
    %v811 = vmul.f32 %v808, %v810
    %v812 = vadd.f32 %v808, %v811
    %vm813 = vweird.f32 %v791
    %vm814 = vweird.f32 %v808
    %vm815 = vmor %vm813, %vm814
    %v816 = vsel %vm815, %v808, %v812
    %v817 = vand.u32 2147483647, %v791
    %vm818 = vcmp.eq.f32.partialorder %v817, 8.507059e+37
    %v819 = vand.u32 %v791, 2147483648
    %v820 = vor.u32 1.1754944e-38, %v819
    %v821 = vsel %vm818, %v820, %v816
    %v822 = vmul.f32 1.0, %v821
    %v823 = vrcp.pop %v792
    %v824 = vmul.f32 %v792, %v823
    %v825 = vsub.f32 1.0, %v824
    %v826 = vmul.f32 %v823, %v825
    %v827 = vadd.f32 %v823, %v826
    %vm828 = vweird.f32 %v792
    %vm829 = vweird.f32 %v823
    %vm830 = vmor %vm828, %vm829
    %v831 = vsel %vm830, %v823, %v827
    %v832 = vand.u32 2147483647, %v792
    %vm833 = vcmp.eq.f32.partialorder %v832, 8.507059e+37
    %v834 = vand.u32 %v792, 2147483648
    %v835 = vor.u32 1.1754944e-38, %v834
    %v836 = vsel %vm833, %v835, %v831
    %v837 = vmul.f32 1.0, %v836
    %v838 = vtanh.pop %v780
    %v839 = vmul.f32 %v822, %v625
    %v840 = vmul.f32 %v807, %v838
    %v841 = vadd.f32 %v839, %v840
    %v842 = vtanh.pop %v841
    %v843 = vmul.f32 %v837, %v842
    %844 = vst [vmem:[#allocation3 + $0x8] sm:$0xff] %v843
    %v845 = vld [vmem:[#allocation2 + $0x40] sm:$0xff]
    %v846 = vld [vmem:[#allocation2 + $0x48] sm:$0xff]
    %v847 = vld [vmem:[#allocation2 + $0x50] sm:$0xff]
    %v848 = vld [vmem:[#allocation2 + $0x58] sm:$0xff]
    %v849 = vld [vmem:[#allocation6] sm:$0xff]
    %v850 = vld [vmem:[#allocation6 + $0x8] sm:$0xff]
    %v851 = vld [vmem:[#allocation6 + $0x10] sm:$0xff]
    %v852 = vld [vmem:[#allocation6 + $0x18] sm:$0xff]
    %v853 = vld [vmem:[#allocation6 + $0x20] sm:$0xff]
    %v854 = vld [vmem:[#allocation6 + $0x28] sm:$0xff]
    %v855 = vld [vmem:[#allocation6 + $0x30] sm:$0xff]
    %v856 = vld [vmem:[#allocation6 + $0x38] sm:$0xff]
    %v857 = vld [vmem:[#allocation6 + $0x40] sm:$0xff]
    %v858 = vld [vmem:[#allocation6 + $0x48] sm:$0xff]
    %v859 = vld [vmem:[#allocation6 + $0x50] sm:$0xff]
    %v860 = vld [vmem:[#allocation6 + $0x58] sm:$0xff]
    %v861 = vld [vmem:[#allocation6 + $0x60] sm:$0xff]
    %v862 = vld [vmem:[#allocation6 + $0x68] sm:$0xff]
    %v863 = vld [vmem:[#allocation6 + $0x70] sm:$0xff]
    %v864 = vld [vmem:[#allocation6 + $0x78] sm:$0xff]
    %v865 = vld [vmem:[#allocation6 + $0x80] sm:$0xff]
    %v866 = vld [vmem:[#allocation6 + $0x88] sm:$0xff]
    %v867 = vld [vmem:[#allocation6 + $0x90] sm:$0xff]
    %v868 = vld [vmem:[#allocation6 + $0x98] sm:$0xff]
    %v869 = vld [vmem:[#allocation6 + $0xa0] sm:$0xff]
    %v870 = vld [vmem:[#allocation6 + $0xa8] sm:$0xff]
    %v871 = vld [vmem:[#allocation6 + $0xb0] sm:$0xff]
    %v872 = vld [vmem:[#allocation6 + $0xb8] sm:$0xff]
    %v873 = vld [vmem:[#allocation6 + $0xc0] sm:$0xff]
    %v874 = vld [vmem:[#allocation6 + $0xc8] sm:$0xff]
    %v875 = vld [vmem:[#allocation6 + $0xd0] sm:$0xff]
    %v876 = vld [vmem:[#allocation6 + $0xd8] sm:$0xff]
    %v877 = vld [vmem:[#allocation6 + $0xe0] sm:$0xff]
    %v878 = vld [vmem:[#allocation6 + $0xe8] sm:$0xff]
    %v879 = vld [vmem:[#allocation6 + $0xf0] sm:$0xff]
    %v880 = vld [vmem:[#allocation6 + $0xf8] sm:$0xff]
    %v881 = vld [vmem:[#allocation6 + $0x100] sm:$0xff]
    %v882 = vld [vmem:[#allocation6 + $0x108] sm:$0xff]
    %v883 = vld [vmem:[#allocation6 + $0x110] sm:$0xff]
    %v884 = vld [vmem:[#allocation6 + $0x118] sm:$0xff]
    %v885 = vld [vmem:[#allocation6 + $0x120] sm:$0xff]
    %v886 = vld [vmem:[#allocation6 + $0x128] sm:$0xff]
    %v887 = vld [vmem:[#allocation6 + $0x130] sm:$0xff]
    %v888 = vld [vmem:[#allocation6 + $0x138] sm:$0xff]
    %v889 = vld [vmem:[#allocation6 + $0x140] sm:$0xff]
    %v890 = vld [vmem:[#allocation6 + $0x148] sm:$0xff]
    %v891 = vld [vmem:[#allocation6 + $0x150] sm:$0xff]
    %v892 = vld [vmem:[#allocation6 + $0x158] sm:$0xff]
    %v893 = vld [vmem:[#allocation6 + $0x160] sm:$0xff]
    %v894 = vld [vmem:[#allocation6 + $0x168] sm:$0xff]
    %v895 = vld [vmem:[#allocation6 + $0x170] sm:$0xff]
    %v896 = vld [vmem:[#allocation6 + $0x178] sm:$0xff]
    %v897 = vld [vmem:[#allocation6 + $0x180] sm:$0xff]
    %v898 = vld [vmem:[#allocation6 + $0x188] sm:$0xff]
    %v899 = vld [vmem:[#allocation6 + $0x190] sm:$0xff]
    %v900 = vld [vmem:[#allocation6 + $0x198] sm:$0xff]
    %v901 = vld [vmem:[#allocation6 + $0x1a0] sm:$0xff]
    %v902 = vld [vmem:[#allocation6 + $0x1a8] sm:$0xff]
    %v903 = vld [vmem:[#allocation6 + $0x1b0] sm:$0xff]
    %v904 = vld [vmem:[#allocation6 + $0x1b8] sm:$0xff]
    %v905 = vld [vmem:[#allocation6 + $0x1c0] sm:$0xff]
    %v906 = vld [vmem:[#allocation6 + $0x1c8] sm:$0xff]
    %v907 = vld [vmem:[#allocation6 + $0x1d0] sm:$0xff]
    %v908 = vld [vmem:[#allocation6 + $0x1d8] sm:$0xff]
    %v909 = vld [vmem:[#allocation6 + $0x1e0] sm:$0xff]
    %v910 = vld [vmem:[#allocation6 + $0x1e8] sm:$0xff]
    %v911 = vld [vmem:[#allocation6 + $0x1f0] sm:$0xff]
    %v912 = vld [vmem:[#allocation6 + $0x1f8] sm:$0xff]
    %913 = vmatpush.msra.mxu0 %v909
    %914 = vmatpush.msra.mxu0 %v905
    %915 = vmatpush.msra.mxu0 %v901
    %916 = vmatpush.msra.mxu0 %v897
    %917 = vmatpush.msra.mxu0 %v893
    %918 = vmatpush.msra.mxu0 %v889
    %919 = vmatpush.msra.mxu0 %v885
    %920 = vmatpush.msra.mxu0 %v881
    %921 = vmatpush.msra.mxu0 %v877
    %922 = vmatpush.msra.mxu0 %v873
    %923 = vmatpush.msra.mxu0 %v869
    %924 = vmatpush.msra.mxu0 %v865
    %925 = vmatpush.msra.mxu0 %v861
    %926 = vmatpush.msra.mxu0 %v857
    %927 = vmatpush.msra.mxu0 %v853
    %928 = vmatpush.msra.mxu0 %v849
    %929 = vmatmul.f32.gmra.mxu0 %v843
    %v930 = vpop.f32.mrf.mxu0
    %v931 = vadd.f32 0.0, %v930
    %932 = vdwg.mxu0
    %933 = vmatpush.msra.mxu0 %v910
    %934 = vmatpush.msra.mxu0 %v906
    %935 = vmatpush.msra.mxu0 %v902
    %936 = vmatpush.msra.mxu0 %v898
    %937 = vmatpush.msra.mxu0 %v894
    %938 = vmatpush.msra.mxu0 %v890
    %939 = vmatpush.msra.mxu0 %v886
    %940 = vmatpush.msra.mxu0 %v882
    %941 = vmatpush.msra.mxu0 %v878
    %942 = vmatpush.msra.mxu0 %v874
    %943 = vmatpush.msra.mxu0 %v870
    %944 = vmatpush.msra.mxu0 %v866
    %945 = vmatpush.msra.mxu0 %v862
    %946 = vmatpush.msra.mxu0 %v858
    %947 = vmatpush.msra.mxu0 %v854
    %948 = vmatpush.msra.mxu0 %v850
    %949 = vmatmul.f32.gmra.mxu0 %v843
    %v950 = vpop.f32.mrf.mxu0
    %v951 = vadd.f32 0.0, %v950
    %952 = vdwg.mxu0
    %953 = vmatpush.msra.mxu0 %v911
    %954 = vmatpush.msra.mxu0 %v907
    %955 = vmatpush.msra.mxu0 %v903
    %956 = vmatpush.msra.mxu0 %v899
    %957 = vmatpush.msra.mxu0 %v895
    %958 = vmatpush.msra.mxu0 %v891
    %959 = vmatpush.msra.mxu0 %v887
    %960 = vmatpush.msra.mxu0 %v883
    %961 = vmatpush.msra.mxu0 %v879
    %962 = vmatpush.msra.mxu0 %v875
    %963 = vmatpush.msra.mxu0 %v871
    %964 = vmatpush.msra.mxu0 %v867
    %965 = vmatpush.msra.mxu0 %v863
    %966 = vmatpush.msra.mxu0 %v859
    %967 = vmatpush.msra.mxu0 %v855
    %968 = vmatpush.msra.mxu0 %v851
    %969 = vmatmul.f32.gmra.mxu0 %v843
    %v970 = vpop.f32.mrf.mxu0
    %v971 = vadd.f32 0.0, %v970
    %972 = vdwg.mxu0
    %973 = vmatpush.msra.mxu0 %v912
    %974 = vmatpush.msra.mxu0 %v908
    %975 = vmatpush.msra.mxu0 %v904
    %976 = vmatpush.msra.mxu0 %v900
    %977 = vmatpush.msra.mxu0 %v896
    %978 = vmatpush.msra.mxu0 %v892
    %979 = vmatpush.msra.mxu0 %v888
    %980 = vmatpush.msra.mxu0 %v884
    %981 = vmatpush.msra.mxu0 %v880
    %982 = vmatpush.msra.mxu0 %v876
    %983 = vmatpush.msra.mxu0 %v872
    %984 = vmatpush.msra.mxu0 %v868
    %985 = vmatpush.msra.mxu0 %v864
    %986 = vmatpush.msra.mxu0 %v860
    %987 = vmatpush.msra.mxu0 %v856
    %988 = vmatpush.msra.mxu0 %v852
    %989 = vmatmul.f32.gmra.mxu0 %v843
    %v990 = vpop.f32.mrf.mxu0
    %v991 = vadd.f32 0.0, %v990
    %992 = vdwg.mxu0
    %v993 = vadd.f32 %v845, %v931
    %v994 = vadd.f32 %v846, %v951
    %v995 = vadd.f32 %v847, %v971
    %v996 = vadd.f32 %v848, %v991
    %v997 = vxor.u32 %v993, 2147483648
    %v998 = vxor.u32 %v994, 2147483648
    %v999 = vxor.u32 %v995, 2147483648
    %v1000 = vmul.f32 %v997, 1.442695
    %v1001 = vpow.pop %v1000
    %v1002 = vmul.f32 %v998, 1.442695
    %v1003 = vpow.pop %v1002
    %v1004 = vmul.f32 %v999, 1.442695
    %v1005 = vpow.pop %v1004
    %v1006 = vadd.f32 %v1001, 1.0
    %v1007 = vadd.f32 %v1003, 1.0
    %v1008 = vadd.f32 %v1005, 1.0
    %v1009 = vrcp.pop %v1006
    %v1010 = vmul.f32 %v1006, %v1009
    %v1011 = vsub.f32 1.0, %v1010
    %v1012 = vmul.f32 %v1009, %v1011
    %v1013 = vadd.f32 %v1009, %v1012
    %vm1014 = vweird.f32 %v1006
    %vm1015 = vweird.f32 %v1009
    %vm1016 = vmor %vm1014, %vm1015
    %v1017 = vsel %vm1016, %v1009, %v1013
    %v1018 = vand.u32 2147483647, %v1006
    %vm1019 = vcmp.eq.f32.partialorder %v1018, 8.507059e+37
    %v1020 = vand.u32 %v1006, 2147483648
    %v1021 = vor.u32 1.1754944e-38, %v1020
    %v1022 = vsel %vm1019, %v1021, %v1017
    %v1023 = vmul.f32 1.0, %v1022
    %v1024 = vrcp.pop %v1007
    %v1025 = vmul.f32 %v1007, %v1024
    %v1026 = vsub.f32 1.0, %v1025
    %v1027 = vmul.f32 %v1024, %v1026
    %v1028 = vadd.f32 %v1024, %v1027
    %vm1029 = vweird.f32 %v1007
    %vm1030 = vweird.f32 %v1024
    %vm1031 = vmor %vm1029, %vm1030
    %v1032 = vsel %vm1031, %v1024, %v1028
    %v1033 = vand.u32 2147483647, %v1007
    %vm1034 = vcmp.eq.f32.partialorder %v1033, 8.507059e+37
    %v1035 = vand.u32 %v1007, 2147483648
    %v1036 = vor.u32 1.1754944e-38, %v1035
    %v1037 = vsel %vm1034, %v1036, %v1032
    %v1038 = vmul.f32 1.0, %v1037
    %v1039 = vrcp.pop %v1008
    %v1040 = vmul.f32 %v1008, %v1039
    %v1041 = vsub.f32 1.0, %v1040
    %v1042 = vmul.f32 %v1039, %v1041
    %v1043 = vadd.f32 %v1039, %v1042
    %vm1044 = vweird.f32 %v1008
    %vm1045 = vweird.f32 %v1039
    %vm1046 = vmor %vm1044, %vm1045
    %v1047 = vsel %vm1046, %v1039, %v1043
    %v1048 = vand.u32 2147483647, %v1008
    %vm1049 = vcmp.eq.f32.partialorder %v1048, 8.507059e+37
    %v1050 = vand.u32 %v1008, 2147483648
    %v1051 = vor.u32 1.1754944e-38, %v1050
    %v1052 = vsel %vm1049, %v1051, %v1047
    %v1053 = vmul.f32 1.0, %v1052
    %v1054 = vtanh.pop %v996
    %v1055 = vmul.f32 %v1038, %v841
    %v1056 = vmul.f32 %v1023, %v1054
    %v1057 = vadd.f32 %v1055, %v1056
    %v1058 = vtanh.pop %v1057
    %v1059 = vmul.f32 %v1053, %v1058
    %1060 = vst [vmem:[#allocation3 + $0x10] sm:$0xff] %v1059
    %v1061 = vld [vmem:[#allocation2 + $0x60] sm:$0xff]
    %v1062 = vld [vmem:[#allocation2 + $0x68] sm:$0xff]
    %v1063 = vld [vmem:[#allocation2 + $0x70] sm:$0xff]
    %v1064 = vld [vmem:[#allocation2 + $0x78] sm:$0xff]
    %v1065 = vld [vmem:[#allocation6] sm:$0xff]
    %v1066 = vld [vmem:[#allocation6 + $0x8] sm:$0xff]
    %v1067 = vld [vmem:[#allocation6 + $0x10] sm:$0xff]
    %v1068 = vld [vmem:[#allocation6 + $0x18] sm:$0xff]
    %v1069 = vld [vmem:[#allocation6 + $0x20] sm:$0xff]
    %v1070 = vld [vmem:[#allocation6 + $0x28] sm:$0xff]
    %v1071 = vld [vmem:[#allocation6 + $0x30] sm:$0xff]
    %v1072 = vld [vmem:[#allocation6 + $0x38] sm:$0xff]
    %v1073 = vld [vmem:[#allocation6 + $0x40] sm:$0xff]
    %v1074 = vld [vmem:[#allocation6 + $0x48] sm:$0xff]
    %v1075 = vld [vmem:[#allocation6 + $0x50] sm:$0xff]
    %v1076 = vld [vmem:[#allocation6 + $0x58] sm:$0xff]
    %v1077 = vld [vmem:[#allocation6 + $0x60] sm:$0xff]
    %v1078 = vld [vmem:[#allocation6 + $0x68] sm:$0xff]
    %v1079 = vld [vmem:[#allocation6 + $0x70] sm:$0xff]
    %v1080 = vld [vmem:[#allocation6 + $0x78] sm:$0xff]
    %v1081 = vld [vmem:[#allocation6 + $0x80] sm:$0xff]
    %v1082 = vld [vmem:[#allocation6 + $0x88] sm:$0xff]
    %v1083 = vld [vmem:[#allocation6 + $0x90] sm:$0xff]
    %v1084 = vld [vmem:[#allocation6 + $0x98] sm:$0xff]
    %v1085 = vld [vmem:[#allocation6 + $0xa0] sm:$0xff]
    %v1086 = vld [vmem:[#allocation6 + $0xa8] sm:$0xff]
    %v1087 = vld [vmem:[#allocation6 + $0xb0] sm:$0xff]
    %v1088 = vld [vmem:[#allocation6 + $0xb8] sm:$0xff]
    %v1089 = vld [vmem:[#allocation6 + $0xc0] sm:$0xff]
    %v1090 = vld [vmem:[#allocation6 + $0xc8] sm:$0xff]
    %v1091 = vld [vmem:[#allocation6 + $0xd0] sm:$0xff]
    %v1092 = vld [vmem:[#allocation6 + $0xd8] sm:$0xff]
    %v1093 = vld [vmem:[#allocation6 + $0xe0] sm:$0xff]
    %v1094 = vld [vmem:[#allocation6 + $0xe8] sm:$0xff]
    %v1095 = vld [vmem:[#allocation6 + $0xf0] sm:$0xff]
    %v1096 = vld [vmem:[#allocation6 + $0xf8] sm:$0xff]
    %v1097 = vld [vmem:[#allocation6 + $0x100] sm:$0xff]
    %v1098 = vld [vmem:[#allocation6 + $0x108] sm:$0xff]
    %v1099 = vld [vmem:[#allocation6 + $0x110] sm:$0xff]
    %v1100 = vld [vmem:[#allocation6 + $0x118] sm:$0xff]
    %v1101 = vld [vmem:[#allocation6 + $0x120] sm:$0xff]
    %v1102 = vld [vmem:[#allocation6 + $0x128] sm:$0xff]
    %v1103 = vld [vmem:[#allocation6 + $0x130] sm:$0xff]
    %v1104 = vld [vmem:[#allocation6 + $0x138] sm:$0xff]
    %v1105 = vld [vmem:[#allocation6 + $0x140] sm:$0xff]
    %v1106 = vld [vmem:[#allocation6 + $0x148] sm:$0xff]
    %v1107 = vld [vmem:[#allocation6 + $0x150] sm:$0xff]
    %v1108 = vld [vmem:[#allocation6 + $0x158] sm:$0xff]
    %v1109 = vld [vmem:[#allocation6 + $0x160] sm:$0xff]
    %v1110 = vld [vmem:[#allocation6 + $0x168] sm:$0xff]
    %v1111 = vld [vmem:[#allocation6 + $0x170] sm:$0xff]
    %v1112 = vld [vmem:[#allocation6 + $0x178] sm:$0xff]
    %v1113 = vld [vmem:[#allocation6 + $0x180] sm:$0xff]
    %v1114 = vld [vmem:[#allocation6 + $0x188] sm:$0xff]
    %v1115 = vld [vmem:[#allocation6 + $0x190] sm:$0xff]
    %v1116 = vld [vmem:[#allocation6 + $0x198] sm:$0xff]
    %v1117 = vld [vmem:[#allocation6 + $0x1a0] sm:$0xff]
    %v1118 = vld [vmem:[#allocation6 + $0x1a8] sm:$0xff]
    %v1119 = vld [vmem:[#allocation6 + $0x1b0] sm:$0xff]
    %v1120 = vld [vmem:[#allocation6 + $0x1b8] sm:$0xff]
    %v1121 = vld [vmem:[#allocation6 + $0x1c0] sm:$0xff]
    %v1122 = vld [vmem:[#allocation6 + $0x1c8] sm:$0xff]
    %v1123 = vld [vmem:[#allocation6 + $0x1d0] sm:$0xff]
    %v1124 = vld [vmem:[#allocation6 + $0x1d8] sm:$0xff]
    %v1125 = vld [vmem:[#allocation6 + $0x1e0] sm:$0xff]
    %v1126 = vld [vmem:[#allocation6 + $0x1e8] sm:$0xff]
    %v1127 = vld [vmem:[#allocation6 + $0x1f0] sm:$0xff]
    %v1128 = vld [vmem:[#allocation6 + $0x1f8] sm:$0xff]
    %1129 = vmatpush.msra.mxu0 %v1125
    %1130 = vmatpush.msra.mxu0 %v1121
    %1131 = vmatpush.msra.mxu0 %v1117
    %1132 = vmatpush.msra.mxu0 %v1113
    %1133 = vmatpush.msra.mxu0 %v1109
    %1134 = vmatpush.msra.mxu0 %v1105
    %1135 = vmatpush.msra.mxu0 %v1101
    %1136 = vmatpush.msra.mxu0 %v1097
    %1137 = vmatpush.msra.mxu0 %v1093
    %1138 = vmatpush.msra.mxu0 %v1089
    %1139 = vmatpush.msra.mxu0 %v1085
    %1140 = vmatpush.msra.mxu0 %v1081
    %1141 = vmatpush.msra.mxu0 %v1077
    %1142 = vmatpush.msra.mxu0 %v1073
    %1143 = vmatpush.msra.mxu0 %v1069
    %1144 = vmatpush.msra.mxu0 %v1065
    %1145 = vmatmul.f32.gmra.mxu0 %v1059
    %v1146 = vpop.f32.mrf.mxu0
    %v1147 = vadd.f32 0.0, %v1146
    %1148 = vdwg.mxu0
    %1149 = vmatpush.msra.mxu0 %v1126
    %1150 = vmatpush.msra.mxu0 %v1122
    %1151 = vmatpush.msra.mxu0 %v1118
    %1152 = vmatpush.msra.mxu0 %v1114
    %1153 = vmatpush.msra.mxu0 %v1110
    %1154 = vmatpush.msra.mxu0 %v1106
    %1155 = vmatpush.msra.mxu0 %v1102
    %1156 = vmatpush.msra.mxu0 %v1098
    %1157 = vmatpush.msra.mxu0 %v1094
    %1158 = vmatpush.msra.mxu0 %v1090
    %1159 = vmatpush.msra.mxu0 %v1086
    %1160 = vmatpush.msra.mxu0 %v1082
    %1161 = vmatpush.msra.mxu0 %v1078
    %1162 = vmatpush.msra.mxu0 %v1074
    %1163 = vmatpush.msra.mxu0 %v1070
    %1164 = vmatpush.msra.mxu0 %v1066
    %1165 = vmatmul.f32.gmra.mxu0 %v1059
    %v1166 = vpop.f32.mrf.mxu0
    %v1167 = vadd.f32 0.0, %v1166
    %1168 = vdwg.mxu0
    %1169 = vmatpush.msra.mxu0 %v1127
    %1170 = vmatpush.msra.mxu0 %v1123
    %1171 = vmatpush.msra.mxu0 %v1119
    %1172 = vmatpush.msra.mxu0 %v1115
    %1173 = vmatpush.msra.mxu0 %v1111
    %1174 = vmatpush.msra.mxu0 %v1107
    %1175 = vmatpush.msra.mxu0 %v1103
    %1176 = vmatpush.msra.mxu0 %v1099
    %1177 = vmatpush.msra.mxu0 %v1095
    %1178 = vmatpush.msra.mxu0 %v1091
    %1179 = vmatpush.msra.mxu0 %v1087
    %1180 = vmatpush.msra.mxu0 %v1083
    %1181 = vmatpush.msra.mxu0 %v1079
    %1182 = vmatpush.msra.mxu0 %v1075
    %1183 = vmatpush.msra.mxu0 %v1071
    %1184 = vmatpush.msra.mxu0 %v1067
    %1185 = vmatmul.f32.gmra.mxu0 %v1059
    %v1186 = vpop.f32.mrf.mxu0
    %v1187 = vadd.f32 0.0, %v1186
    %1188 = vdwg.mxu0
    %1189 = vmatpush.msra.mxu0 %v1128
    %1190 = vmatpush.msra.mxu0 %v1124
    %1191 = vmatpush.msra.mxu0 %v1120
    %1192 = vmatpush.msra.mxu0 %v1116
    %1193 = vmatpush.msra.mxu0 %v1112
    %1194 = vmatpush.msra.mxu0 %v1108
    %1195 = vmatpush.msra.mxu0 %v1104
    %1196 = vmatpush.msra.mxu0 %v1100
    %1197 = vmatpush.msra.mxu0 %v1096
    %1198 = vmatpush.msra.mxu0 %v1092
    %1199 = vmatpush.msra.mxu0 %v1088
    %1200 = vmatpush.msra.mxu0 %v1084
    %1201 = vmatpush.msra.mxu0 %v1080
    %1202 = vmatpush.msra.mxu0 %v1076
    %1203 = vmatpush.msra.mxu0 %v1072
    %1204 = vmatpush.msra.mxu0 %v1068
    %1205 = vmatmul.f32.gmra.mxu0 %v1059
    %v1206 = vpop.f32.mrf.mxu0
    %v1207 = vadd.f32 0.0, %v1206
    %1208 = vdwg.mxu0
    %v1209 = vadd.f32 %v1061, %v1147
    %v1210 = vadd.f32 %v1062, %v1167
    %v1211 = vadd.f32 %v1063, %v1187
    %v1212 = vadd.f32 %v1064, %v1207
    %v1213 = vxor.u32 %v1209, 2147483648
    %v1214 = vxor.u32 %v1210, 2147483648
    %v1215 = vxor.u32 %v1211, 2147483648
    %v1216 = vmul.f32 %v1213, 1.442695
    %v1217 = vpow.pop %v1216
    %v1218 = vmul.f32 %v1214, 1.442695
    %v1219 = vpow.pop %v1218
    %v1220 = vmul.f32 %v1215, 1.442695
    %v1221 = vpow.pop %v1220
    %v1222 = vadd.f32 %v1217, 1.0
    %v1223 = vadd.f32 %v1219, 1.0
    %v1224 = vadd.f32 %v1221, 1.0
    %v1225 = vrcp.pop %v1222
    %v1226 = vmul.f32 %v1222, %v1225
    %v1227 = vsub.f32 1.0, %v1226
    %v1228 = vmul.f32 %v1225, %v1227
    %v1229 = vadd.f32 %v1225, %v1228
    %vm1230 = vweird.f32 %v1222
    %vm1231 = vweird.f32 %v1225
    %vm1232 = vmor %vm1230, %vm1231
    %v1233 = vsel %vm1232, %v1225, %v1229
    %v1234 = vand.u32 2147483647, %v1222
    %vm1235 = vcmp.eq.f32.partialorder %v1234, 8.507059e+37
    %v1236 = vand.u32 %v1222, 2147483648
    %v1237 = vor.u32 1.1754944e-38, %v1236
    %v1238 = vsel %vm1235, %v1237, %v1233
    %v1239 = vmul.f32 1.0, %v1238
    %v1240 = vrcp.pop %v1223
    %v1241 = vmul.f32 %v1223, %v1240
    %v1242 = vsub.f32 1.0, %v1241
    %v1243 = vmul.f32 %v1240, %v1242
    %v1244 = vadd.f32 %v1240, %v1243
    %vm1245 = vweird.f32 %v1223
    %vm1246 = vweird.f32 %v1240
    %vm1247 = vmor %vm1245, %vm1246
    %v1248 = vsel %vm1247, %v1240, %v1244
    %v1249 = vand.u32 2147483647, %v1223
    %vm1250 = vcmp.eq.f32.partialorder %v1249, 8.507059e+37
    %v1251 = vand.u32 %v1223, 2147483648
    %v1252 = vor.u32 1.1754944e-38, %v1251
    %v1253 = vsel %vm1250, %v1252, %v1248
    %v1254 = vmul.f32 1.0, %v1253
    %v1255 = vrcp.pop %v1224
    %v1256 = vmul.f32 %v1224, %v1255
    %v1257 = vsub.f32 1.0, %v1256
    %v1258 = vmul.f32 %v1255, %v1257
    %v1259 = vadd.f32 %v1255, %v1258
    %vm1260 = vweird.f32 %v1224
    %vm1261 = vweird.f32 %v1255
    %vm1262 = vmor %vm1260, %vm1261
    %v1263 = vsel %vm1262, %v1255, %v1259
    %v1264 = vand.u32 2147483647, %v1224
    %vm1265 = vcmp.eq.f32.partialorder %v1264, 8.507059e+37
    %v1266 = vand.u32 %v1224, 2147483648
    %v1267 = vor.u32 1.1754944e-38, %v1266
    %v1268 = vsel %vm1265, %v1267, %v1263
    %v1269 = vmul.f32 1.0, %v1268
    %v1270 = vtanh.pop %v1212
    %v1271 = vmul.f32 %v1254, %v1057
    %v1272 = vmul.f32 %v1239, %v1270
    %v1273 = vadd.f32 %v1271, %v1272
    %v1274 = vtanh.pop %v1273
    %v1275 = vmul.f32 %v1269, %v1274
    %1276 = vst [vmem:[#allocation3 + $0x18] sm:$0xff] %v1275
    %v1277 = vld [vmem:[#allocation2 + $0x80] sm:$0xff]
    %v1278 = vld [vmem:[#allocation2 + $0x88] sm:$0xff]
    %v1279 = vld [vmem:[#allocation2 + $0x90] sm:$0xff]
    %v1280 = vld [vmem:[#allocation2 + $0x98] sm:$0xff]
    %v1281 = vld [vmem:[#allocation6] sm:$0xff]
    %v1282 = vld [vmem:[#allocation6 + $0x8] sm:$0xff]
    %v1283 = vld [vmem:[#allocation6 + $0x10] sm:$0xff]
    %v1284 = vld [vmem:[#allocation6 + $0x18] sm:$0xff]
    %v1285 = vld [vmem:[#allocation6 + $0x20] sm:$0xff]
    %v1286 = vld [vmem:[#allocation6 + $0x28] sm:$0xff]
    %v1287 = vld [vmem:[#allocation6 + $0x30] sm:$0xff]
    %v1288 = vld [vmem:[#allocation6 + $0x38] sm:$0xff]
    %v1289 = vld [vmem:[#allocation6 + $0x40] sm:$0xff]
    %v1290 = vld [vmem:[#allocation6 + $0x48] sm:$0xff]
    %v1291 = vld [vmem:[#allocation6 + $0x50] sm:$0xff]
    %v1292 = vld [vmem:[#allocation6 + $0x58] sm:$0xff]
    %v1293 = vld [vmem:[#allocation6 + $0x60] sm:$0xff]
    %v1294 = vld [vmem:[#allocation6 + $0x68] sm:$0xff]
    %v1295 = vld [vmem:[#allocation6 + $0x70] sm:$0xff]
    %v1296 = vld [vmem:[#allocation6 + $0x78] sm:$0xff]
    %v1297 = vld [vmem:[#allocation6 + $0x80] sm:$0xff]
    %v1298 = vld [vmem:[#allocation6 + $0x88] sm:$0xff]
    %v1299 = vld [vmem:[#allocation6 + $0x90] sm:$0xff]
    %v1300 = vld [vmem:[#allocation6 + $0x98] sm:$0xff]
    %v1301 = vld [vmem:[#allocation6 + $0xa0] sm:$0xff]
    %v1302 = vld [vmem:[#allocation6 + $0xa8] sm:$0xff]
    %v1303 = vld [vmem:[#allocation6 + $0xb0] sm:$0xff]
    %v1304 = vld [vmem:[#allocation6 + $0xb8] sm:$0xff]
    %v1305 = vld [vmem:[#allocation6 + $0xc0] sm:$0xff]
    %v1306 = vld [vmem:[#allocation6 + $0xc8] sm:$0xff]
    %v1307 = vld [vmem:[#allocation6 + $0xd0] sm:$0xff]
    %v1308 = vld [vmem:[#allocation6 + $0xd8] sm:$0xff]
    %v1309 = vld [vmem:[#allocation6 + $0xe0] sm:$0xff]
    %v1310 = vld [vmem:[#allocation6 + $0xe8] sm:$0xff]
    %v1311 = vld [vmem:[#allocation6 + $0xf0] sm:$0xff]
    %v1312 = vld [vmem:[#allocation6 + $0xf8] sm:$0xff]
    %v1313 = vld [vmem:[#allocation6 + $0x100] sm:$0xff]
    %v1314 = vld [vmem:[#allocation6 + $0x108] sm:$0xff]
    %v1315 = vld [vmem:[#allocation6 + $0x110] sm:$0xff]
    %v1316 = vld [vmem:[#allocation6 + $0x118] sm:$0xff]
    %v1317 = vld [vmem:[#allocation6 + $0x120] sm:$0xff]
    %v1318 = vld [vmem:[#allocation6 + $0x128] sm:$0xff]
    %v1319 = vld [vmem:[#allocation6 + $0x130] sm:$0xff]
    %v1320 = vld [vmem:[#allocation6 + $0x138] sm:$0xff]
    %v1321 = vld [vmem:[#allocation6 + $0x140] sm:$0xff]
    %v1322 = vld [vmem:[#allocation6 + $0x148] sm:$0xff]
    %v1323 = vld [vmem:[#allocation6 + $0x150] sm:$0xff]
    %v1324 = vld [vmem:[#allocation6 + $0x158] sm:$0xff]
    %v1325 = vld [vmem:[#allocation6 + $0x160] sm:$0xff]
    %v1326 = vld [vmem:[#allocation6 + $0x168] sm:$0xff]
    %v1327 = vld [vmem:[#allocation6 + $0x170] sm:$0xff]
    %v1328 = vld [vmem:[#allocation6 + $0x178] sm:$0xff]
    %v1329 = vld [vmem:[#allocation6 + $0x180] sm:$0xff]
    %v1330 = vld [vmem:[#allocation6 + $0x188] sm:$0xff]
    %v1331 = vld [vmem:[#allocation6 + $0x190] sm:$0xff]
    %v1332 = vld [vmem:[#allocation6 + $0x198] sm:$0xff]
    %v1333 = vld [vmem:[#allocation6 + $0x1a0] sm:$0xff]
    %v1334 = vld [vmem:[#allocation6 + $0x1a8] sm:$0xff]
    %v1335 = vld [vmem:[#allocation6 + $0x1b0] sm:$0xff]
    %v1336 = vld [vmem:[#allocation6 + $0x1b8] sm:$0xff]
    %v1337 = vld [vmem:[#allocation6 + $0x1c0] sm:$0xff]
    %v1338 = vld [vmem:[#allocation6 + $0x1c8] sm:$0xff]
    %v1339 = vld [vmem:[#allocation6 + $0x1d0] sm:$0xff]
    %v1340 = vld [vmem:[#allocation6 + $0x1d8] sm:$0xff]
    %v1341 = vld [vmem:[#allocation6 + $0x1e0] sm:$0xff]
    %v1342 = vld [vmem:[#allocation6 + $0x1e8] sm:$0xff]
    %v1343 = vld [vmem:[#allocation6 + $0x1f0] sm:$0xff]
    %v1344 = vld [vmem:[#allocation6 + $0x1f8] sm:$0xff]
    %1345 = vmatpush.msra.mxu0 %v1341
    %1346 = vmatpush.msra.mxu0 %v1337
    %1347 = vmatpush.msra.mxu0 %v1333
    %1348 = vmatpush.msra.mxu0 %v1329
    %1349 = vmatpush.msra.mxu0 %v1325
    %1350 = vmatpush.msra.mxu0 %v1321
    %1351 = vmatpush.msra.mxu0 %v1317
    %1352 = vmatpush.msra.mxu0 %v1313
    %1353 = vmatpush.msra.mxu0 %v1309
    %1354 = vmatpush.msra.mxu0 %v1305
    %1355 = vmatpush.msra.mxu0 %v1301
    %1356 = vmatpush.msra.mxu0 %v1297
    %1357 = vmatpush.msra.mxu0 %v1293
    %1358 = vmatpush.msra.mxu0 %v1289
    %1359 = vmatpush.msra.mxu0 %v1285
    %1360 = vmatpush.msra.mxu0 %v1281
    %1361 = vmatmul.f32.gmra.mxu0 %v1275
    %v1362 = vpop.f32.mrf.mxu0
    %v1363 = vadd.f32 0.0, %v1362
    %1364 = vdwg.mxu0
    %1365 = vmatpush.msra.mxu0 %v1342
    %1366 = vmatpush.msra.mxu0 %v1338
    %1367 = vmatpush.msra.mxu0 %v1334
    %1368 = vmatpush.msra.mxu0 %v1330
    %1369 = vmatpush.msra.mxu0 %v1326
    %1370 = vmatpush.msra.mxu0 %v1322
    %1371 = vmatpush.msra.mxu0 %v1318
    %1372 = vmatpush.msra.mxu0 %v1314
    %1373 = vmatpush.msra.mxu0 %v1310
    %1374 = vmatpush.msra.mxu0 %v1306
    %1375 = vmatpush.msra.mxu0 %v1302
    %1376 = vmatpush.msra.mxu0 %v1298
    %1377 = vmatpush.msra.mxu0 %v1294
    %1378 = vmatpush.msra.mxu0 %v1290
    %1379 = vmatpush.msra.mxu0 %v1286
    %1380 = vmatpush.msra.mxu0 %v1282
    %1381 = vmatmul.f32.gmra.mxu0 %v1275
    %v1382 = vpop.f32.mrf.mxu0
    %v1383 = vadd.f32 0.0, %v1382
    %1384 = vdwg.mxu0
    %1385 = vmatpush.msra.mxu0 %v1343
    %1386 = vmatpush.msra.mxu0 %v1339
    %1387 = vmatpush.msra.mxu0 %v1335
    %1388 = vmatpush.msra.mxu0 %v1331
    %1389 = vmatpush.msra.mxu0 %v1327
    %1390 = vmatpush.msra.mxu0 %v1323
    %1391 = vmatpush.msra.mxu0 %v1319
    %1392 = vmatpush.msra.mxu0 %v1315
    %1393 = vmatpush.msra.mxu0 %v1311
    %1394 = vmatpush.msra.mxu0 %v1307
    %1395 = vmatpush.msra.mxu0 %v1303
    %1396 = vmatpush.msra.mxu0 %v1299
    %1397 = vmatpush.msra.mxu0 %v1295
    %1398 = vmatpush.msra.mxu0 %v1291
    %1399 = vmatpush.msra.mxu0 %v1287
    %1400 = vmatpush.msra.mxu0 %v1283
    %1401 = vmatmul.f32.gmra.mxu0 %v1275
    %v1402 = vpop.f32.mrf.mxu0
    %v1403 = vadd.f32 0.0, %v1402
    %1404 = vdwg.mxu0
    %1405 = vmatpush.msra.mxu0 %v1344
    %1406 = vmatpush.msra.mxu0 %v1340
    %1407 = vmatpush.msra.mxu0 %v1336
    %1408 = vmatpush.msra.mxu0 %v1332
    %1409 = vmatpush.msra.mxu0 %v1328
    %1410 = vmatpush.msra.mxu0 %v1324
    %1411 = vmatpush.msra.mxu0 %v1320
    %1412 = vmatpush.msra.mxu0 %v1316
    %1413 = vmatpush.msra.mxu0 %v1312
    %1414 = vmatpush.msra.mxu0 %v1308
    %1415 = vmatpush.msra.mxu0 %v1304
    %1416 = vmatpush.msra.mxu0 %v1300
    %1417 = vmatpush.msra.mxu0 %v1296
    %1418 = vmatpush.msra.mxu0 %v1292
    %1419 = vmatpush.msra.mxu0 %v1288
    %1420 = vmatpush.msra.mxu0 %v1284
    %1421 = vmatmul.f32.gmra.mxu0 %v1275
    %v1422 = vpop.f32.mrf.mxu0
    %v1423 = vadd.f32 0.0, %v1422
    %1424 = vdwg.mxu0
    %v1425 = vadd.f32 %v1277, %v1363
    %v1426 = vadd.f32 %v1278, %v1383
    %v1427 = vadd.f32 %v1279, %v1403
    %v1428 = vadd.f32 %v1280, %v1423
    %v1429 = vxor.u32 %v1425, 2147483648
    %v1430 = vxor.u32 %v1426, 2147483648
    %v1431 = vxor.u32 %v1427, 2147483648
    %v1432 = vmul.f32 %v1429, 1.442695
    %v1433 = vpow.pop %v1432
    %v1434 = vmul.f32 %v1430, 1.442695
    %v1435 = vpow.pop %v1434
    %v1436 = vmul.f32 %v1431, 1.442695
    %v1437 = vpow.pop %v1436
    %v1438 = vadd.f32 %v1433, 1.0
    %v1439 = vadd.f32 %v1435, 1.0
    %v1440 = vadd.f32 %v1437, 1.0
    %v1441 = vrcp.pop %v1438
    %v1442 = vmul.f32 %v1438, %v1441
    %v1443 = vsub.f32 1.0, %v1442
    %v1444 = vmul.f32 %v1441, %v1443
    %v1445 = vadd.f32 %v1441, %v1444
    %vm1446 = vweird.f32 %v1438
    %vm1447 = vweird.f32 %v1441
    %vm1448 = vmor %vm1446, %vm1447
    %v1449 = vsel %vm1448, %v1441, %v1445
    %v1450 = vand.u32 2147483647, %v1438
    %vm1451 = vcmp.eq.f32.partialorder %v1450, 8.507059e+37
    %v1452 = vand.u32 %v1438, 2147483648
    %v1453 = vor.u32 1.1754944e-38, %v1452
    %v1454 = vsel %vm1451, %v1453, %v1449
    %v1455 = vmul.f32 1.0, %v1454
    %v1456 = vrcp.pop %v1439
    %v1457 = vmul.f32 %v1439, %v1456
    %v1458 = vsub.f32 1.0, %v1457
    %v1459 = vmul.f32 %v1456, %v1458
    %v1460 = vadd.f32 %v1456, %v1459
    %vm1461 = vweird.f32 %v1439
    %vm1462 = vweird.f32 %v1456
    %vm1463 = vmor %vm1461, %vm1462
    %v1464 = vsel %vm1463, %v1456, %v1460
    %v1465 = vand.u32 2147483647, %v1439
    %vm1466 = vcmp.eq.f32.partialorder %v1465, 8.507059e+37
    %v1467 = vand.u32 %v1439, 2147483648
    %v1468 = vor.u32 1.1754944e-38, %v1467
    %v1469 = vsel %vm1466, %v1468, %v1464
    %v1470 = vmul.f32 1.0, %v1469
    %v1471 = vrcp.pop %v1440
    %v1472 = vmul.f32 %v1440, %v1471
    %v1473 = vsub.f32 1.0, %v1472
    %v1474 = vmul.f32 %v1471, %v1473
    %v1475 = vadd.f32 %v1471, %v1474
    %vm1476 = vweird.f32 %v1440
    %vm1477 = vweird.f32 %v1471
    %vm1478 = vmor %vm1476, %vm1477
    %v1479 = vsel %vm1478, %v1471, %v1475
    %v1480 = vand.u32 2147483647, %v1440
    %vm1481 = vcmp.eq.f32.partialorder %v1480, 8.507059e+37
    %v1482 = vand.u32 %v1440, 2147483648
    %v1483 = vor.u32 1.1754944e-38, %v1482
    %v1484 = vsel %vm1481, %v1483, %v1479
    %v1485 = vmul.f32 1.0, %v1484
    %v1486 = vtanh.pop %v1428
    %v1487 = vmul.f32 %v1470, %v1273
    %v1488 = vmul.f32 %v1455, %v1486
    %v1489 = vadd.f32 %v1487, %v1488
    %v1490 = vtanh.pop %v1489
    %v1491 = vmul.f32 %v1485, %v1490
    %1492 = vst [vmem:[#allocation3 + $0x20] sm:$0xff] %v1491
    %v1493 = vld [vmem:[#allocation2 + $0xa0] sm:$0xff]
    %v1494 = vld [vmem:[#allocation2 + $0xa8] sm:$0xff]
    %v1495 = vld [vmem:[#allocation2 + $0xb0] sm:$0xff]
    %v1496 = vld [vmem:[#allocation2 + $0xb8] sm:$0xff]
    %v1497 = vld [vmem:[#allocation6] sm:$0xff]
    %v1498 = vld [vmem:[#allocation6 + $0x8] sm:$0xff]
    %v1499 = vld [vmem:[#allocation6 + $0x10] sm:$0xff]
    %v1500 = vld [vmem:[#allocation6 + $0x18] sm:$0xff]
    %v1501 = vld [vmem:[#allocation6 + $0x20] sm:$0xff]
    %v1502 = vld [vmem:[#allocation6 + $0x28] sm:$0xff]
    %v1503 = vld [vmem:[#allocation6 + $0x30] sm:$0xff]
    %v1504 = vld [vmem:[#allocation6 + $0x38] sm:$0xff]
    %v1505 = vld [vmem:[#allocation6 + $0x40] sm:$0xff]
    %v1506 = vld [vmem:[#allocation6 + $0x48] sm:$0xff]
    %v1507 = vld [vmem:[#allocation6 + $0x50] sm:$0xff]
    %v1508 = vld [vmem:[#allocation6 + $0x58] sm:$0xff]
    %v1509 = vld [vmem:[#allocation6 + $0x60] sm:$0xff]
    %v1510 = vld [vmem:[#allocation6 + $0x68] sm:$0xff]
    %v1511 = vld [vmem:[#allocation6 + $0x70] sm:$0xff]
    %v1512 = vld [vmem:[#allocation6 + $0x78] sm:$0xff]
    %v1513 = vld [vmem:[#allocation6 + $0x80] sm:$0xff]
    %v1514 = vld [vmem:[#allocation6 + $0x88] sm:$0xff]
    %v1515 = vld [vmem:[#allocation6 + $0x90] sm:$0xff]
    %v1516 = vld [vmem:[#allocation6 + $0x98] sm:$0xff]
    %v1517 = vld [vmem:[#allocation6 + $0xa0] sm:$0xff]
    %v1518 = vld [vmem:[#allocation6 + $0xa8] sm:$0xff]
    %v1519 = vld [vmem:[#allocation6 + $0xb0] sm:$0xff]
    %v1520 = vld [vmem:[#allocation6 + $0xb8] sm:$0xff]
    %v1521 = vld [vmem:[#allocation6 + $0xc0] sm:$0xff]
    %v1522 = vld [vmem:[#allocation6 + $0xc8] sm:$0xff]
    %v1523 = vld [vmem:[#allocation6 + $0xd0] sm:$0xff]
    %v1524 = vld [vmem:[#allocation6 + $0xd8] sm:$0xff]
    %v1525 = vld [vmem:[#allocation6 + $0xe0] sm:$0xff]
    %v1526 = vld [vmem:[#allocation6 + $0xe8] sm:$0xff]
    %v1527 = vld [vmem:[#allocation6 + $0xf0] sm:$0xff]
    %v1528 = vld [vmem:[#allocation6 + $0xf8] sm:$0xff]
    %v1529 = vld [vmem:[#allocation6 + $0x100] sm:$0xff]
    %v1530 = vld [vmem:[#allocation6 + $0x108] sm:$0xff]
    %v1531 = vld [vmem:[#allocation6 + $0x110] sm:$0xff]
    %v1532 = vld [vmem:[#allocation6 + $0x118] sm:$0xff]
    %v1533 = vld [vmem:[#allocation6 + $0x120] sm:$0xff]
    %v1534 = vld [vmem:[#allocation6 + $0x128] sm:$0xff]
    %v1535 = vld [vmem:[#allocation6 + $0x130] sm:$0xff]
    %v1536 = vld [vmem:[#allocation6 + $0x138] sm:$0xff]
    %v1537 = vld [vmem:[#allocation6 + $0x140] sm:$0xff]
    %v1538 = vld [vmem:[#allocation6 + $0x148] sm:$0xff]
    %v1539 = vld [vmem:[#allocation6 + $0x150] sm:$0xff]
    %v1540 = vld [vmem:[#allocation6 + $0x158] sm:$0xff]
    %v1541 = vld [vmem:[#allocation6 + $0x160] sm:$0xff]
    %v1542 = vld [vmem:[#allocation6 + $0x168] sm:$0xff]
    %v1543 = vld [vmem:[#allocation6 + $0x170] sm:$0xff]
    %v1544 = vld [vmem:[#allocation6 + $0x178] sm:$0xff]
    %v1545 = vld [vmem:[#allocation6 + $0x180] sm:$0xff]
    %v1546 = vld [vmem:[#allocation6 + $0x188] sm:$0xff]
    %v1547 = vld [vmem:[#allocation6 + $0x190] sm:$0xff]
    %v1548 = vld [vmem:[#allocation6 + $0x198] sm:$0xff]
    %v1549 = vld [vmem:[#allocation6 + $0x1a0] sm:$0xff]
    %v1550 = vld [vmem:[#allocation6 + $0x1a8] sm:$0xff]
    %v1551 = vld [vmem:[#allocation6 + $0x1b0] sm:$0xff]
    %v1552 = vld [vmem:[#allocation6 + $0x1b8] sm:$0xff]
    %v1553 = vld [vmem:[#allocation6 + $0x1c0] sm:$0xff]
    %v1554 = vld [vmem:[#allocation6 + $0x1c8] sm:$0xff]
    %v1555 = vld [vmem:[#allocation6 + $0x1d0] sm:$0xff]
    %v1556 = vld [vmem:[#allocation6 + $0x1d8] sm:$0xff]
    %v1557 = vld [vmem:[#allocation6 + $0x1e0] sm:$0xff]
    %v1558 = vld [vmem:[#allocation6 + $0x1e8] sm:$0xff]
    %v1559 = vld [vmem:[#allocation6 + $0x1f0] sm:$0xff]
    %v1560 = vld [vmem:[#allocation6 + $0x1f8] sm:$0xff]
    %1561 = vmatpush.msra.mxu0 %v1557
    %1562 = vmatpush.msra.mxu0 %v1553
    %1563 = vmatpush.msra.mxu0 %v1549
    %1564 = vmatpush.msra.mxu0 %v1545
    %1565 = vmatpush.msra.mxu0 %v1541
    %1566 = vmatpush.msra.mxu0 %v1537
    %1567 = vmatpush.msra.mxu0 %v1533
    %1568 = vmatpush.msra.mxu0 %v1529
    %1569 = vmatpush.msra.mxu0 %v1525
    %1570 = vmatpush.msra.mxu0 %v1521
    %1571 = vmatpush.msra.mxu0 %v1517
    %1572 = vmatpush.msra.mxu0 %v1513
    %1573 = vmatpush.msra.mxu0 %v1509
    %1574 = vmatpush.msra.mxu0 %v1505
    %1575 = vmatpush.msra.mxu0 %v1501
    %1576 = vmatpush.msra.mxu0 %v1497
    %1577 = vmatmul.f32.gmra.mxu0 %v1491
    %v1578 = vpop.f32.mrf.mxu0
    %v1579 = vadd.f32 0.0, %v1578
    %1580 = vdwg.mxu0
    %1581 = vmatpush.msra.mxu0 %v1558
    %1582 = vmatpush.msra.mxu0 %v1554
    %1583 = vmatpush.msra.mxu0 %v1550
    %1584 = vmatpush.msra.mxu0 %v1546
    %1585 = vmatpush.msra.mxu0 %v1542
    %1586 = vmatpush.msra.mxu0 %v1538
    %1587 = vmatpush.msra.mxu0 %v1534
    %1588 = vmatpush.msra.mxu0 %v1530
    %1589 = vmatpush.msra.mxu0 %v1526
    %1590 = vmatpush.msra.mxu0 %v1522
    %1591 = vmatpush.msra.mxu0 %v1518
    %1592 = vmatpush.msra.mxu0 %v1514
    %1593 = vmatpush.msra.mxu0 %v1510
    %1594 = vmatpush.msra.mxu0 %v1506
    %1595 = vmatpush.msra.mxu0 %v1502
    %1596 = vmatpush.msra.mxu0 %v1498
    %1597 = vmatmul.f32.gmra.mxu0 %v1491
    %v1598 = vpop.f32.mrf.mxu0
    %v1599 = vadd.f32 0.0, %v1598
    %1600 = vdwg.mxu0
    %1601 = vmatpush.msra.mxu0 %v1559
    %1602 = vmatpush.msra.mxu0 %v1555
    %1603 = vmatpush.msra.mxu0 %v1551
    %1604 = vmatpush.msra.mxu0 %v1547
    %1605 = vmatpush.msra.mxu0 %v1543
    %1606 = vmatpush.msra.mxu0 %v1539
    %1607 = vmatpush.msra.mxu0 %v1535
    %1608 = vmatpush.msra.mxu0 %v1531
    %1609 = vmatpush.msra.mxu0 %v1527
    %1610 = vmatpush.msra.mxu0 %v1523
    %1611 = vmatpush.msra.mxu0 %v1519
    %1612 = vmatpush.msra.mxu0 %v1515
    %1613 = vmatpush.msra.mxu0 %v1511
    %1614 = vmatpush.msra.mxu0 %v1507
    %1615 = vmatpush.msra.mxu0 %v1503
    %1616 = vmatpush.msra.mxu0 %v1499
    %1617 = vmatmul.f32.gmra.mxu0 %v1491
    %v1618 = vpop.f32.mrf.mxu0
    %v1619 = vadd.f32 0.0, %v1618
    %1620 = vdwg.mxu0
    %1621 = vmatpush.msra.mxu0 %v1560
    %1622 = vmatpush.msra.mxu0 %v1556
    %1623 = vmatpush.msra.mxu0 %v1552
    %1624 = vmatpush.msra.mxu0 %v1548
    %1625 = vmatpush.msra.mxu0 %v1544
    %1626 = vmatpush.msra.mxu0 %v1540
    %1627 = vmatpush.msra.mxu0 %v1536
    %1628 = vmatpush.msra.mxu0 %v1532
    %1629 = vmatpush.msra.mxu0 %v1528
    %1630 = vmatpush.msra.mxu0 %v1524
    %1631 = vmatpush.msra.mxu0 %v1520
    %1632 = vmatpush.msra.mxu0 %v1516
    %1633 = vmatpush.msra.mxu0 %v1512
    %1634 = vmatpush.msra.mxu0 %v1508
    %1635 = vmatpush.msra.mxu0 %v1504
    %1636 = vmatpush.msra.mxu0 %v1500
    %1637 = vmatmul.f32.gmra.mxu0 %v1491
    %v1638 = vpop.f32.mrf.mxu0
    %v1639 = vadd.f32 0.0, %v1638
    %1640 = vdwg.mxu0
    %v1641 = vadd.f32 %v1493, %v1579
    %v1642 = vadd.f32 %v1494, %v1599
    %v1643 = vadd.f32 %v1495, %v1619
    %v1644 = vadd.f32 %v1496, %v1639
    %v1645 = vxor.u32 %v1641, 2147483648
    %v1646 = vxor.u32 %v1642, 2147483648
    %v1647 = vxor.u32 %v1643, 2147483648
    %v1648 = vmul.f32 %v1645, 1.442695
    %v1649 = vpow.pop %v1648
    %v1650 = vmul.f32 %v1646, 1.442695
    %v1651 = vpow.pop %v1650
    %v1652 = vmul.f32 %v1647, 1.442695
    %v1653 = vpow.pop %v1652
    %v1654 = vadd.f32 %v1649, 1.0
    %v1655 = vadd.f32 %v1651, 1.0
    %v1656 = vadd.f32 %v1653, 1.0
    %v1657 = vrcp.pop %v1654
    %v1658 = vmul.f32 %v1654, %v1657
    %v1659 = vsub.f32 1.0, %v1658
    %v1660 = vmul.f32 %v1657, %v1659
    %v1661 = vadd.f32 %v1657, %v1660
    %vm1662 = vweird.f32 %v1654
    %vm1663 = vweird.f32 %v1657
    %vm1664 = vmor %vm1662, %vm1663
    %v1665 = vsel %vm1664, %v1657, %v1661
    %v1666 = vand.u32 2147483647, %v1654
    %vm1667 = vcmp.eq.f32.partialorder %v1666, 8.507059e+37
    %v1668 = vand.u32 %v1654, 2147483648
    %v1669 = vor.u32 1.1754944e-38, %v1668
    %v1670 = vsel %vm1667, %v1669, %v1665
    %v1671 = vmul.f32 1.0, %v1670
    %v1672 = vrcp.pop %v1655
    %v1673 = vmul.f32 %v1655, %v1672
    %v1674 = vsub.f32 1.0, %v1673
    %v1675 = vmul.f32 %v1672, %v1674
    %v1676 = vadd.f32 %v1672, %v1675
    %vm1677 = vweird.f32 %v1655
    %vm1678 = vweird.f32 %v1672
    %vm1679 = vmor %vm1677, %vm1678
    %v1680 = vsel %vm1679, %v1672, %v1676
    %v1681 = vand.u32 2147483647, %v1655
    %vm1682 = vcmp.eq.f32.partialorder %v1681, 8.507059e+37
    %v1683 = vand.u32 %v1655, 2147483648
    %v1684 = vor.u32 1.1754944e-38, %v1683
    %v1685 = vsel %vm1682, %v1684, %v1680
    %v1686 = vmul.f32 1.0, %v1685
    %v1687 = vrcp.pop %v1656
    %v1688 = vmul.f32 %v1656, %v1687
    %v1689 = vsub.f32 1.0, %v1688
    %v1690 = vmul.f32 %v1687, %v1689
    %v1691 = vadd.f32 %v1687, %v1690
    %vm1692 = vweird.f32 %v1656
    %vm1693 = vweird.f32 %v1687
    %vm1694 = vmor %vm1692, %vm1693
    %v1695 = vsel %vm1694, %v1687, %v1691
    %v1696 = vand.u32 2147483647, %v1656
    %vm1697 = vcmp.eq.f32.partialorder %v1696, 8.507059e+37
    %v1698 = vand.u32 %v1656, 2147483648
    %v1699 = vor.u32 1.1754944e-38, %v1698
    %v1700 = vsel %vm1697, %v1699, %v1695
    %v1701 = vmul.f32 1.0, %v1700
    %v1702 = vtanh.pop %v1644
    %v1703 = vmul.f32 %v1686, %v1489
    %v1704 = vmul.f32 %v1671, %v1702
    %v1705 = vadd.f32 %v1703, %v1704
    %v1706 = vtanh.pop %v1705
    %v1707 = vmul.f32 %v1701, %v1706
    %1708 = vst [vmem:[#allocation3 + $0x28] sm:$0xff] %v1707
    %v1709 = vld [vmem:[#allocation2 + $0xc0] sm:$0xff]
    %v1710 = vld [vmem:[#allocation2 + $0xc8] sm:$0xff]
    %v1711 = vld [vmem:[#allocation2 + $0xd0] sm:$0xff]
    %v1712 = vld [vmem:[#allocation2 + $0xd8] sm:$0xff]
    %v1713 = vld [vmem:[#allocation6] sm:$0xff]
    %v1714 = vld [vmem:[#allocation6 + $0x8] sm:$0xff]
    %v1715 = vld [vmem:[#allocation6 + $0x10] sm:$0xff]
    %v1716 = vld [vmem:[#allocation6 + $0x18] sm:$0xff]
    %v1717 = vld [vmem:[#allocation6 + $0x20] sm:$0xff]
    %v1718 = vld [vmem:[#allocation6 + $0x28] sm:$0xff]
    %v1719 = vld [vmem:[#allocation6 + $0x30] sm:$0xff]
    %v1720 = vld [vmem:[#allocation6 + $0x38] sm:$0xff]
    %v1721 = vld [vmem:[#allocation6 + $0x40] sm:$0xff]
    %v1722 = vld [vmem:[#allocation6 + $0x48] sm:$0xff]
    %v1723 = vld [vmem:[#allocation6 + $0x50] sm:$0xff]
    %v1724 = vld [vmem:[#allocation6 + $0x58] sm:$0xff]
    %v1725 = vld [vmem:[#allocation6 + $0x60] sm:$0xff]
    %v1726 = vld [vmem:[#allocation6 + $0x68] sm:$0xff]
    %v1727 = vld [vmem:[#allocation6 + $0x70] sm:$0xff]
    %v1728 = vld [vmem:[#allocation6 + $0x78] sm:$0xff]
    %v1729 = vld [vmem:[#allocation6 + $0x80] sm:$0xff]
    %v1730 = vld [vmem:[#allocation6 + $0x88] sm:$0xff]
    %v1731 = vld [vmem:[#allocation6 + $0x90] sm:$0xff]
    %v1732 = vld [vmem:[#allocation6 + $0x98] sm:$0xff]
    %v1733 = vld [vmem:[#allocation6 + $0xa0] sm:$0xff]
    %v1734 = vld [vmem:[#allocation6 + $0xa8] sm:$0xff]
    %v1735 = vld [vmem:[#allocation6 + $0xb0] sm:$0xff]
    %v1736 = vld [vmem:[#allocation6 + $0xb8] sm:$0xff]
    %v1737 = vld [vmem:[#allocation6 + $0xc0] sm:$0xff]
    %v1738 = vld [vmem:[#allocation6 + $0xc8] sm:$0xff]
    %v1739 = vld [vmem:[#allocation6 + $0xd0] sm:$0xff]
    %v1740 = vld [vmem:[#allocation6 + $0xd8] sm:$0xff]
    %v1741 = vld [vmem:[#allocation6 + $0xe0] sm:$0xff]
    %v1742 = vld [vmem:[#allocation6 + $0xe8] sm:$0xff]
    %v1743 = vld [vmem:[#allocation6 + $0xf0] sm:$0xff]
    %v1744 = vld [vmem:[#allocation6 + $0xf8] sm:$0xff]
    %v1745 = vld [vmem:[#allocation6 + $0x100] sm:$0xff]
    %v1746 = vld [vmem:[#allocation6 + $0x108] sm:$0xff]
    %v1747 = vld [vmem:[#allocation6 + $0x110] sm:$0xff]
    %v1748 = vld [vmem:[#allocation6 + $0x118] sm:$0xff]
    %v1749 = vld [vmem:[#allocation6 + $0x120] sm:$0xff]
    %v1750 = vld [vmem:[#allocation6 + $0x128] sm:$0xff]
    %v1751 = vld [vmem:[#allocation6 + $0x130] sm:$0xff]
    %v1752 = vld [vmem:[#allocation6 + $0x138] sm:$0xff]
    %v1753 = vld [vmem:[#allocation6 + $0x140] sm:$0xff]
    %v1754 = vld [vmem:[#allocation6 + $0x148] sm:$0xff]
    %v1755 = vld [vmem:[#allocation6 + $0x150] sm:$0xff]
    %v1756 = vld [vmem:[#allocation6 + $0x158] sm:$0xff]
    %v1757 = vld [vmem:[#allocation6 + $0x160] sm:$0xff]
    %v1758 = vld [vmem:[#allocation6 + $0x168] sm:$0xff]
    %v1759 = vld [vmem:[#allocation6 + $0x170] sm:$0xff]
    %v1760 = vld [vmem:[#allocation6 + $0x178] sm:$0xff]
    %v1761 = vld [vmem:[#allocation6 + $0x180] sm:$0xff]
    %v1762 = vld [vmem:[#allocation6 + $0x188] sm:$0xff]
    %v1763 = vld [vmem:[#allocation6 + $0x190] sm:$0xff]
    %v1764 = vld [vmem:[#allocation6 + $0x198] sm:$0xff]
    %v1765 = vld [vmem:[#allocation6 + $0x1a0] sm:$0xff]
    %v1766 = vld [vmem:[#allocation6 + $0x1a8] sm:$0xff]
    %v1767 = vld [vmem:[#allocation6 + $0x1b0] sm:$0xff]
    %v1768 = vld [vmem:[#allocation6 + $0x1b8] sm:$0xff]
    %v1769 = vld [vmem:[#allocation6 + $0x1c0] sm:$0xff]
    %v1770 = vld [vmem:[#allocation6 + $0x1c8] sm:$0xff]
    %v1771 = vld [vmem:[#allocation6 + $0x1d0] sm:$0xff]
    %v1772 = vld [vmem:[#allocation6 + $0x1d8] sm:$0xff]
    %v1773 = vld [vmem:[#allocation6 + $0x1e0] sm:$0xff]
    %v1774 = vld [vmem:[#allocation6 + $0x1e8] sm:$0xff]
    %v1775 = vld [vmem:[#allocation6 + $0x1f0] sm:$0xff]
    %v1776 = vld [vmem:[#allocation6 + $0x1f8] sm:$0xff]
    %1777 = vmatpush.msra.mxu0 %v1773
    %1778 = vmatpush.msra.mxu0 %v1769
    %1779 = vmatpush.msra.mxu0 %v1765
    %1780 = vmatpush.msra.mxu0 %v1761
    %1781 = vmatpush.msra.mxu0 %v1757
    %1782 = vmatpush.msra.mxu0 %v1753
    %1783 = vmatpush.msra.mxu0 %v1749
    %1784 = vmatpush.msra.mxu0 %v1745
    %1785 = vmatpush.msra.mxu0 %v1741
    %1786 = vmatpush.msra.mxu0 %v1737
    %1787 = vmatpush.msra.mxu0 %v1733
    %1788 = vmatpush.msra.mxu0 %v1729
    %1789 = vmatpush.msra.mxu0 %v1725
    %1790 = vmatpush.msra.mxu0 %v1721
    %1791 = vmatpush.msra.mxu0 %v1717
    %1792 = vmatpush.msra.mxu0 %v1713
    %1793 = vmatmul.f32.gmra.mxu0 %v1707
    %v1794 = vpop.f32.mrf.mxu0
    %v1795 = vadd.f32 0.0, %v1794
    %1796 = vdwg.mxu0
    %1797 = vmatpush.msra.mxu0 %v1774
    %1798 = vmatpush.msra.mxu0 %v1770
    %1799 = vmatpush.msra.mxu0 %v1766
    %1800 = vmatpush.msra.mxu0 %v1762
    %1801 = vmatpush.msra.mxu0 %v1758
    %1802 = vmatpush.msra.mxu0 %v1754
    %1803 = vmatpush.msra.mxu0 %v1750
    %1804 = vmatpush.msra.mxu0 %v1746
    %1805 = vmatpush.msra.mxu0 %v1742
    %1806 = vmatpush.msra.mxu0 %v1738
    %1807 = vmatpush.msra.mxu0 %v1734
    %1808 = vmatpush.msra.mxu0 %v1730
    %1809 = vmatpush.msra.mxu0 %v1726
    %1810 = vmatpush.msra.mxu0 %v1722
    %1811 = vmatpush.msra.mxu0 %v1718
    %1812 = vmatpush.msra.mxu0 %v1714
    %1813 = vmatmul.f32.gmra.mxu0 %v1707
    %v1814 = vpop.f32.mrf.mxu0
    %v1815 = vadd.f32 0.0, %v1814
    %1816 = vdwg.mxu0
    %1817 = vmatpush.msra.mxu0 %v1775
    %1818 = vmatpush.msra.mxu0 %v1771
    %1819 = vmatpush.msra.mxu0 %v1767
    %1820 = vmatpush.msra.mxu0 %v1763
    %1821 = vmatpush.msra.mxu0 %v1759
    %1822 = vmatpush.msra.mxu0 %v1755
    %1823 = vmatpush.msra.mxu0 %v1751
    %1824 = vmatpush.msra.mxu0 %v1747
    %1825 = vmatpush.msra.mxu0 %v1743
    %1826 = vmatpush.msra.mxu0 %v1739
    %1827 = vmatpush.msra.mxu0 %v1735
    %1828 = vmatpush.msra.mxu0 %v1731
    %1829 = vmatpush.msra.mxu0 %v1727
    %1830 = vmatpush.msra.mxu0 %v1723
    %1831 = vmatpush.msra.mxu0 %v1719
    %1832 = vmatpush.msra.mxu0 %v1715
    %1833 = vmatmul.f32.gmra.mxu0 %v1707
    %v1834 = vpop.f32.mrf.mxu0
    %v1835 = vadd.f32 0.0, %v1834
    %1836 = vdwg.mxu0
    %1837 = vmatpush.msra.mxu0 %v1776
    %1838 = vmatpush.msra.mxu0 %v1772
    %1839 = vmatpush.msra.mxu0 %v1768
    %1840 = vmatpush.msra.mxu0 %v1764
    %1841 = vmatpush.msra.mxu0 %v1760
    %1842 = vmatpush.msra.mxu0 %v1756
    %1843 = vmatpush.msra.mxu0 %v1752
    %1844 = vmatpush.msra.mxu0 %v1748
    %1845 = vmatpush.msra.mxu0 %v1744
    %1846 = vmatpush.msra.mxu0 %v1740
    %1847 = vmatpush.msra.mxu0 %v1736
    %1848 = vmatpush.msra.mxu0 %v1732
    %1849 = vmatpush.msra.mxu0 %v1728
    %1850 = vmatpush.msra.mxu0 %v1724
    %1851 = vmatpush.msra.mxu0 %v1720
    %1852 = vmatpush.msra.mxu0 %v1716
    %1853 = vmatmul.f32.gmra.mxu0 %v1707
    %v1854 = vpop.f32.mrf.mxu0
    %v1855 = vadd.f32 0.0, %v1854
    %1856 = vdwg.mxu0
    %v1857 = vadd.f32 %v1709, %v1795
    %v1858 = vadd.f32 %v1710, %v1815
    %v1859 = vadd.f32 %v1711, %v1835
    %v1860 = vadd.f32 %v1712, %v1855
    %v1861 = vxor.u32 %v1857, 2147483648
    %v1862 = vxor.u32 %v1858, 2147483648
    %v1863 = vxor.u32 %v1859, 2147483648
    %v1864 = vmul.f32 %v1861, 1.442695
    %v1865 = vpow.pop %v1864
    %v1866 = vmul.f32 %v1862, 1.442695
    %v1867 = vpow.pop %v1866
    %v1868 = vmul.f32 %v1863, 1.442695
    %v1869 = vpow.pop %v1868
    %v1870 = vadd.f32 %v1865, 1.0
    %v1871 = vadd.f32 %v1867, 1.0
    %v1872 = vadd.f32 %v1869, 1.0
    %v1873 = vrcp.pop %v1870
    %v1874 = vmul.f32 %v1870, %v1873
    %v1875 = vsub.f32 1.0, %v1874
    %v1876 = vmul.f32 %v1873, %v1875
    %v1877 = vadd.f32 %v1873, %v1876
    %vm1878 = vweird.f32 %v1870
    %vm1879 = vweird.f32 %v1873
    %vm1880 = vmor %vm1878, %vm1879
    %v1881 = vsel %vm1880, %v1873, %v1877
    %v1882 = vand.u32 2147483647, %v1870
    %vm1883 = vcmp.eq.f32.partialorder %v1882, 8.507059e+37
    %v1884 = vand.u32 %v1870, 2147483648
    %v1885 = vor.u32 1.1754944e-38, %v1884
    %v1886 = vsel %vm1883, %v1885, %v1881
    %v1887 = vmul.f32 1.0, %v1886
    %v1888 = vrcp.pop %v1871
    %v1889 = vmul.f32 %v1871, %v1888
    %v1890 = vsub.f32 1.0, %v1889
    %v1891 = vmul.f32 %v1888, %v1890
    %v1892 = vadd.f32 %v1888, %v1891
    %vm1893 = vweird.f32 %v1871
    %vm1894 = vweird.f32 %v1888
    %vm1895 = vmor %vm1893, %vm1894
    %v1896 = vsel %vm1895, %v1888, %v1892
    %v1897 = vand.u32 2147483647, %v1871
    %vm1898 = vcmp.eq.f32.partialorder %v1897, 8.507059e+37
    %v1899 = vand.u32 %v1871, 2147483648
    %v1900 = vor.u32 1.1754944e-38, %v1899
    %v1901 = vsel %vm1898, %v1900, %v1896
    %v1902 = vmul.f32 1.0, %v1901
    %v1903 = vrcp.pop %v1872
    %v1904 = vmul.f32 %v1872, %v1903
    %v1905 = vsub.f32 1.0, %v1904
    %v1906 = vmul.f32 %v1903, %v1905
    %v1907 = vadd.f32 %v1903, %v1906
    %vm1908 = vweird.f32 %v1872
    %vm1909 = vweird.f32 %v1903
    %vm1910 = vmor %vm1908, %vm1909
    %v1911 = vsel %vm1910, %v1903, %v1907
    %v1912 = vand.u32 2147483647, %v1872
    %vm1913 = vcmp.eq.f32.partialorder %v1912, 8.507059e+37
    %v1914 = vand.u32 %v1872, 2147483648
    %v1915 = vor.u32 1.1754944e-38, %v1914
    %v1916 = vsel %vm1913, %v1915, %v1911
    %v1917 = vmul.f32 1.0, %v1916
    %v1918 = vtanh.pop %v1860
    %v1919 = vmul.f32 %v1902, %v1705
    %v1920 = vmul.f32 %v1887, %v1918
    %v1921 = vadd.f32 %v1919, %v1920
    %v1922 = vtanh.pop %v1921
    %v1923 = vmul.f32 %v1917, %v1922
    %1924 = vst [vmem:[#allocation3 + $0x30] sm:$0xff] %v1923
    %v1925 = vld [vmem:[#allocation2 + $0xe0] sm:$0xff]
    %v1926 = vld [vmem:[#allocation2 + $0xe8] sm:$0xff]
    %v1927 = vld [vmem:[#allocation2 + $0xf0] sm:$0xff]
    %v1928 = vld [vmem:[#allocation2 + $0xf8] sm:$0xff]
    %v1929 = vld [vmem:[#allocation6] sm:$0xff]
    %v1930 = vld [vmem:[#allocation6 + $0x8] sm:$0xff]
    %v1931 = vld [vmem:[#allocation6 + $0x10] sm:$0xff]
    %v1932 = vld [vmem:[#allocation6 + $0x18] sm:$0xff]
    %v1933 = vld [vmem:[#allocation6 + $0x20] sm:$0xff]
    %v1934 = vld [vmem:[#allocation6 + $0x28] sm:$0xff]
    %v1935 = vld [vmem:[#allocation6 + $0x30] sm:$0xff]
    %v1936 = vld [vmem:[#allocation6 + $0x38] sm:$0xff]
    %v1937 = vld [vmem:[#allocation6 + $0x40] sm:$0xff]
    %v1938 = vld [vmem:[#allocation6 + $0x48] sm:$0xff]
    %v1939 = vld [vmem:[#allocation6 + $0x50] sm:$0xff]
    %v1940 = vld [vmem:[#allocation6 + $0x58] sm:$0xff]
    %v1941 = vld [vmem:[#allocation6 + $0x60] sm:$0xff]
    %v1942 = vld [vmem:[#allocation6 + $0x68] sm:$0xff]
    %v1943 = vld [vmem:[#allocation6 + $0x70] sm:$0xff]
    %v1944 = vld [vmem:[#allocation6 + $0x78] sm:$0xff]
    %v1945 = vld [vmem:[#allocation6 + $0x80] sm:$0xff]
    %v1946 = vld [vmem:[#allocation6 + $0x88] sm:$0xff]
    %v1947 = vld [vmem:[#allocation6 + $0x90] sm:$0xff]
    %v1948 = vld [vmem:[#allocation6 + $0x98] sm:$0xff]
    %v1949 = vld [vmem:[#allocation6 + $0xa0] sm:$0xff]
    %v1950 = vld [vmem:[#allocation6 + $0xa8] sm:$0xff]
    %v1951 = vld [vmem:[#allocation6 + $0xb0] sm:$0xff]
    %v1952 = vld [vmem:[#allocation6 + $0xb8] sm:$0xff]
    %v1953 = vld [vmem:[#allocation6 + $0xc0] sm:$0xff]
    %v1954 = vld [vmem:[#allocation6 + $0xc8] sm:$0xff]
    %v1955 = vld [vmem:[#allocation6 + $0xd0] sm:$0xff]
    %v1956 = vld [vmem:[#allocation6 + $0xd8] sm:$0xff]
    %v1957 = vld [vmem:[#allocation6 + $0xe0] sm:$0xff]
    %v1958 = vld [vmem:[#allocation6 + $0xe8] sm:$0xff]
    %v1959 = vld [vmem:[#allocation6 + $0xf0] sm:$0xff]
    %v1960 = vld [vmem:[#allocation6 + $0xf8] sm:$0xff]
    %v1961 = vld [vmem:[#allocation6 + $0x100] sm:$0xff]
    %v1962 = vld [vmem:[#allocation6 + $0x108] sm:$0xff]
    %v1963 = vld [vmem:[#allocation6 + $0x110] sm:$0xff]
    %v1964 = vld [vmem:[#allocation6 + $0x118] sm:$0xff]
    %v1965 = vld [vmem:[#allocation6 + $0x120] sm:$0xff]
    %v1966 = vld [vmem:[#allocation6 + $0x128] sm:$0xff]
    %v1967 = vld [vmem:[#allocation6 + $0x130] sm:$0xff]
    %v1968 = vld [vmem:[#allocation6 + $0x138] sm:$0xff]
    %v1969 = vld [vmem:[#allocation6 + $0x140] sm:$0xff]
    %v1970 = vld [vmem:[#allocation6 + $0x148] sm:$0xff]
    %v1971 = vld [vmem:[#allocation6 + $0x150] sm:$0xff]
    %v1972 = vld [vmem:[#allocation6 + $0x158] sm:$0xff]
    %v1973 = vld [vmem:[#allocation6 + $0x160] sm:$0xff]
    %v1974 = vld [vmem:[#allocation6 + $0x168] sm:$0xff]
    %v1975 = vld [vmem:[#allocation6 + $0x170] sm:$0xff]
    %v1976 = vld [vmem:[#allocation6 + $0x178] sm:$0xff]
    %v1977 = vld [vmem:[#allocation6 + $0x180] sm:$0xff]
    %v1978 = vld [vmem:[#allocation6 + $0x188] sm:$0xff]
    %v1979 = vld [vmem:[#allocation6 + $0x190] sm:$0xff]
    %v1980 = vld [vmem:[#allocation6 + $0x198] sm:$0xff]
    %v1981 = vld [vmem:[#allocation6 + $0x1a0] sm:$0xff]
    %v1982 = vld [vmem:[#allocation6 + $0x1a8] sm:$0xff]
    %v1983 = vld [vmem:[#allocation6 + $0x1b0] sm:$0xff]
    %v1984 = vld [vmem:[#allocation6 + $0x1b8] sm:$0xff]
    %v1985 = vld [vmem:[#allocation6 + $0x1c0] sm:$0xff]
    %v1986 = vld [vmem:[#allocation6 + $0x1c8] sm:$0xff]
    %v1987 = vld [vmem:[#allocation6 + $0x1d0] sm:$0xff]
    %v1988 = vld [vmem:[#allocation6 + $0x1d8] sm:$0xff]
    %v1989 = vld [vmem:[#allocation6 + $0x1e0] sm:$0xff]
    %v1990 = vld [vmem:[#allocation6 + $0x1e8] sm:$0xff]
    %v1991 = vld [vmem:[#allocation6 + $0x1f0] sm:$0xff]
    %v1992 = vld [vmem:[#allocation6 + $0x1f8] sm:$0xff]
    %1993 = vmatpush.msra.mxu0 %v1989
    %1994 = vmatpush.msra.mxu0 %v1985
    %1995 = vmatpush.msra.mxu0 %v1981
    %1996 = vmatpush.msra.mxu0 %v1977
    %1997 = vmatpush.msra.mxu0 %v1973
    %1998 = vmatpush.msra.mxu0 %v1969
    %1999 = vmatpush.msra.mxu0 %v1965
    %2000 = vmatpush.msra.mxu0 %v1961
    %2001 = vmatpush.msra.mxu0 %v1957
    %2002 = vmatpush.msra.mxu0 %v1953
    %2003 = vmatpush.msra.mxu0 %v1949
    %2004 = vmatpush.msra.mxu0 %v1945
    %2005 = vmatpush.msra.mxu0 %v1941
    %2006 = vmatpush.msra.mxu0 %v1937
    %2007 = vmatpush.msra.mxu0 %v1933
    %2008 = vmatpush.msra.mxu0 %v1929
    %2009 = vmatmul.f32.gmra.mxu0 %v1923
    %v2010 = vpop.f32.mrf.mxu0
    %v2011 = vadd.f32 0.0, %v2010
    %2012 = vdwg.mxu0
    %2013 = vmatpush.msra.mxu0 %v1990
    %2014 = vmatpush.msra.mxu0 %v1986
    %2015 = vmatpush.msra.mxu0 %v1982
    %2016 = vmatpush.msra.mxu0 %v1978
    %2017 = vmatpush.msra.mxu0 %v1974
    %2018 = vmatpush.msra.mxu0 %v1970
    %2019 = vmatpush.msra.mxu0 %v1966
    %2020 = vmatpush.msra.mxu0 %v1962
    %2021 = vmatpush.msra.mxu0 %v1958
    %2022 = vmatpush.msra.mxu0 %v1954
    %2023 = vmatpush.msra.mxu0 %v1950
    %2024 = vmatpush.msra.mxu0 %v1946
    %2025 = vmatpush.msra.mxu0 %v1942
    %2026 = vmatpush.msra.mxu0 %v1938
    %2027 = vmatpush.msra.mxu0 %v1934
    %2028 = vmatpush.msra.mxu0 %v1930
    %2029 = vmatmul.f32.gmra.mxu0 %v1923
    %v2030 = vpop.f32.mrf.mxu0
    %v2031 = vadd.f32 0.0, %v2030
    %2032 = vdwg.mxu0
    %2033 = vmatpush.msra.mxu0 %v1991
    %2034 = vmatpush.msra.mxu0 %v1987
    %2035 = vmatpush.msra.mxu0 %v1983
    %2036 = vmatpush.msra.mxu0 %v1979
    %2037 = vmatpush.msra.mxu0 %v1975
    %2038 = vmatpush.msra.mxu0 %v1971
    %2039 = vmatpush.msra.mxu0 %v1967
    %2040 = vmatpush.msra.mxu0 %v1963
    %2041 = vmatpush.msra.mxu0 %v1959
    %2042 = vmatpush.msra.mxu0 %v1955
    %2043 = vmatpush.msra.mxu0 %v1951
    %2044 = vmatpush.msra.mxu0 %v1947
    %2045 = vmatpush.msra.mxu0 %v1943
    %2046 = vmatpush.msra.mxu0 %v1939
    %2047 = vmatpush.msra.mxu0 %v1935
    %2048 = vmatpush.msra.mxu0 %v1931
    %2049 = vmatmul.f32.gmra.mxu0 %v1923
    %v2050 = vpop.f32.mrf.mxu0
    %v2051 = vadd.f32 0.0, %v2050
    %2052 = vdwg.mxu0
    %2053 = vmatpush.msra.mxu0 %v1992
    %2054 = vmatpush.msra.mxu0 %v1988
    %2055 = vmatpush.msra.mxu0 %v1984
    %2056 = vmatpush.msra.mxu0 %v1980
    %2057 = vmatpush.msra.mxu0 %v1976
    %2058 = vmatpush.msra.mxu0 %v1972
    %2059 = vmatpush.msra.mxu0 %v1968
    %2060 = vmatpush.msra.mxu0 %v1964
    %2061 = vmatpush.msra.mxu0 %v1960
    %2062 = vmatpush.msra.mxu0 %v1956
    %2063 = vmatpush.msra.mxu0 %v1952
    %2064 = vmatpush.msra.mxu0 %v1948
    %2065 = vmatpush.msra.mxu0 %v1944
    %2066 = vmatpush.msra.mxu0 %v1940
    %2067 = vmatpush.msra.mxu0 %v1936
    %2068 = vmatpush.msra.mxu0 %v1932
    %2069 = vmatmul.f32.gmra.mxu0 %v1923
    %v2070 = vpop.f32.mrf.mxu0
    %v2071 = vadd.f32 0.0, %v2070
    %2072 = vdwg.mxu0
    %v2073 = vadd.f32 %v1925, %v2011
    %v2074 = vadd.f32 %v1926, %v2031
    %v2075 = vadd.f32 %v1927, %v2051
    %v2076 = vadd.f32 %v1928, %v2071
    %v2077 = vxor.u32 %v2073, 2147483648
    %v2078 = vxor.u32 %v2074, 2147483648
    %v2079 = vxor.u32 %v2075, 2147483648
    %v2080 = vmul.f32 %v2077, 1.442695
    %v2081 = vpow.pop %v2080
    %v2082 = vmul.f32 %v2078, 1.442695
    %v2083 = vpow.pop %v2082
    %v2084 = vmul.f32 %v2079, 1.442695
    %v2085 = vpow.pop %v2084
    %v2086 = vadd.f32 %v2081, 1.0
    %v2087 = vadd.f32 %v2083, 1.0
    %v2088 = vadd.f32 %v2085, 1.0
    %v2089 = vrcp.pop %v2086
    %v2090 = vmul.f32 %v2086, %v2089
    %v2091 = vsub.f32 1.0, %v2090
    %v2092 = vmul.f32 %v2089, %v2091
    %v2093 = vadd.f32 %v2089, %v2092
    %vm2094 = vweird.f32 %v2086
    %vm2095 = vweird.f32 %v2089
    %vm2096 = vmor %vm2094, %vm2095
    %v2097 = vsel %vm2096, %v2089, %v2093
    %v2098 = vand.u32 2147483647, %v2086
    %vm2099 = vcmp.eq.f32.partialorder %v2098, 8.507059e+37
    %v2100 = vand.u32 %v2086, 2147483648
    %v2101 = vor.u32 1.1754944e-38, %v2100
    %v2102 = vsel %vm2099, %v2101, %v2097
    %v2103 = vmul.f32 1.0, %v2102
    %v2104 = vrcp.pop %v2087
    %v2105 = vmul.f32 %v2087, %v2104
    %v2106 = vsub.f32 1.0, %v2105
    %v2107 = vmul.f32 %v2104, %v2106
    %v2108 = vadd.f32 %v2104, %v2107
    %vm2109 = vweird.f32 %v2087
    %vm2110 = vweird.f32 %v2104
    %vm2111 = vmor %vm2109, %vm2110
    %v2112 = vsel %vm2111, %v2104, %v2108
    %v2113 = vand.u32 2147483647, %v2087
    %vm2114 = vcmp.eq.f32.partialorder %v2113, 8.507059e+37
    %v2115 = vand.u32 %v2087, 2147483648
    %v2116 = vor.u32 1.1754944e-38, %v2115
    %v2117 = vsel %vm2114, %v2116, %v2112
    %v2118 = vmul.f32 1.0, %v2117
    %v2119 = vrcp.pop %v2088
    %v2120 = vmul.f32 %v2088, %v2119
    %v2121 = vsub.f32 1.0, %v2120
    %v2122 = vmul.f32 %v2119, %v2121
    %v2123 = vadd.f32 %v2119, %v2122
    %vm2124 = vweird.f32 %v2088
    %vm2125 = vweird.f32 %v2119
    %vm2126 = vmor %vm2124, %vm2125
    %v2127 = vsel %vm2126, %v2119, %v2123
    %v2128 = vand.u32 2147483647, %v2088
    %vm2129 = vcmp.eq.f32.partialorder %v2128, 8.507059e+37
    %v2130 = vand.u32 %v2088, 2147483648
    %v2131 = vor.u32 1.1754944e-38, %v2130
    %v2132 = vsel %vm2129, %v2131, %v2127
    %v2133 = vmul.f32 1.0, %v2132
    %v2134 = vtanh.pop %v2076
    %v2135 = vmul.f32 %v2118, %v1921
    %v2136 = vmul.f32 %v2103, %v2134
    %v2137 = vadd.f32 %v2135, %v2136
    %v2138 = vtanh.pop %v2137
    %v2139 = vmul.f32 %v2133, %v2138
    %2140 = vst [vmem:[#allocation3 + $0x38] sm:$0xff] %v2139
    %v2141 = vld [vmem:[#allocation3] sm:$0xff]
    %v2142 = vld [vmem:[#allocation3 + $0x8] sm:$0xff]
    %v2143 = vld [vmem:[#allocation3 + $0x10] sm:$0xff]
    %v2144 = vld [vmem:[#allocation3 + $0x18] sm:$0xff]
    %v2145 = vld [vmem:[#allocation3 + $0x20] sm:$0xff]
    %v2146 = vld [vmem:[#allocation3 + $0x28] sm:$0xff]
    %v2147 = vld [vmem:[#allocation3 + $0x30] sm:$0xff]
    %v2148 = vld [vmem:[#allocation3 + $0x38] sm:$0xff]
    %v2149 = vld [vmem:[#allocation8] sm:$0xff]
    %v2150 = vld [vmem:[#allocation8 + $0x8] sm:$0xff]
    %v2151 = vld [vmem:[#allocation8 + $0x10] sm:$0xff]
    %v2152 = vld [vmem:[#allocation8 + $0x18] sm:$0xff]
    %v2153 = vld [vmem:[#allocation8 + $0x20] sm:$0xff]
    %v2154 = vld [vmem:[#allocation8 + $0x28] sm:$0xff]
    %v2155 = vld [vmem:[#allocation8 + $0x30] sm:$0xff]
    %v2156 = vld [vmem:[#allocation8 + $0x38] sm:$0xff]
    %v2157 = vld [vmem:[#allocation8 + $0x40] sm:$0xff]
    %v2158 = vld [vmem:[#allocation8 + $0x48] sm:$0xff]
    %v2159 = vld [vmem:[#allocation8 + $0x50] sm:$0xff]
    %v2160 = vld [vmem:[#allocation8 + $0x58] sm:$0xff]
    %v2161 = vld [vmem:[#allocation8 + $0x60] sm:$0xff]
    %v2162 = vld [vmem:[#allocation8 + $0x68] sm:$0xff]
    %v2163 = vld [vmem:[#allocation8 + $0x70] sm:$0xff]
    %v2164 = vld [vmem:[#allocation8 + $0x78] sm:$0xff]
    %v2165 = vld [vmem:[#allocation8 + $0x80] sm:$0xff]
    %v2166 = vld [vmem:[#allocation8 + $0x88] sm:$0xff]
    %v2167 = vld [vmem:[#allocation8 + $0x90] sm:$0xff]
    %v2168 = vld [vmem:[#allocation8 + $0x98] sm:$0xff]
    %v2169 = vld [vmem:[#allocation8 + $0xa0] sm:$0xff]
    %v2170 = vld [vmem:[#allocation8 + $0xa8] sm:$0xff]
    %v2171 = vld [vmem:[#allocation8 + $0xb0] sm:$0xff]
    %v2172 = vld [vmem:[#allocation8 + $0xb8] sm:$0xff]
    %v2173 = vld [vmem:[#allocation8 + $0xc0] sm:$0xff]
    %v2174 = vld [vmem:[#allocation8 + $0xc8] sm:$0xff]
    %v2175 = vld [vmem:[#allocation8 + $0xd0] sm:$0xff]
    %v2176 = vld [vmem:[#allocation8 + $0xd8] sm:$0xff]
    %v2177 = vld [vmem:[#allocation8 + $0xe0] sm:$0xff]
    %v2178 = vld [vmem:[#allocation8 + $0xe8] sm:$0xff]
    %v2179 = vld [vmem:[#allocation8 + $0xf0] sm:$0xff]
    %v2180 = vld [vmem:[#allocation8 + $0xf8] sm:$0xff]
    %v2181 = vld [vmem:[#allocation8 + $0x100] sm:$0xff]
    %v2182 = vld [vmem:[#allocation8 + $0x108] sm:$0xff]
    %v2183 = vld [vmem:[#allocation8 + $0x110] sm:$0xff]
    %v2184 = vld [vmem:[#allocation8 + $0x118] sm:$0xff]
    %v2185 = vld [vmem:[#allocation8 + $0x120] sm:$0xff]
    %v2186 = vld [vmem:[#allocation8 + $0x128] sm:$0xff]
    %v2187 = vld [vmem:[#allocation8 + $0x130] sm:$0xff]
    %v2188 = vld [vmem:[#allocation8 + $0x138] sm:$0xff]
    %v2189 = vld [vmem:[#allocation8 + $0x140] sm:$0xff]
    %v2190 = vld [vmem:[#allocation8 + $0x148] sm:$0xff]
    %v2191 = vld [vmem:[#allocation8 + $0x150] sm:$0xff]
    %v2192 = vld [vmem:[#allocation8 + $0x158] sm:$0xff]
    %v2193 = vld [vmem:[#allocation8 + $0x160] sm:$0xff]
    %v2194 = vld [vmem:[#allocation8 + $0x168] sm:$0xff]
    %v2195 = vld [vmem:[#allocation8 + $0x170] sm:$0xff]
    %v2196 = vld [vmem:[#allocation8 + $0x178] sm:$0xff]
    %v2197 = vld [vmem:[#allocation8 + $0x180] sm:$0xff]
    %v2198 = vld [vmem:[#allocation8 + $0x188] sm:$0xff]
    %v2199 = vld [vmem:[#allocation8 + $0x190] sm:$0xff]
    %v2200 = vld [vmem:[#allocation8 + $0x198] sm:$0xff]
    %v2201 = vld [vmem:[#allocation8 + $0x1a0] sm:$0xff]
    %v2202 = vld [vmem:[#allocation8 + $0x1a8] sm:$0xff]
    %v2203 = vld [vmem:[#allocation8 + $0x1b0] sm:$0xff]
    %v2204 = vld [vmem:[#allocation8 + $0x1b8] sm:$0xff]
    %v2205 = vld [vmem:[#allocation8 + $0x1c0] sm:$0xff]
    %v2206 = vld [vmem:[#allocation8 + $0x1c8] sm:$0xff]
    %v2207 = vld [vmem:[#allocation8 + $0x1d0] sm:$0xff]
    %v2208 = vld [vmem:[#allocation8 + $0x1d8] sm:$0xff]
    %v2209 = vld [vmem:[#allocation8 + $0x1e0] sm:$0xff]
    %v2210 = vld [vmem:[#allocation8 + $0x1e8] sm:$0xff]
    %v2211 = vld [vmem:[#allocation8 + $0x1f0] sm:$0xff]
    %v2212 = vld [vmem:[#allocation8 + $0x1f8] sm:$0xff]
    %v2213 = vld [vmem:[%s6] sm:$0xf]
    %v2215 = vperm.slane %v2213, 0
    %v2216 = vperm.slane %v2213, 1
    %v2217 = vperm.slane %v2213, 2
    %v2218 = vperm.slane %v2213, 3
    %2223 = vmatpush.msra.mxu0 %v2209
    %2224 = vmatpush.msra.mxu0 %v2205
    %2225 = vmatpush.msra.mxu0 %v2201
    %2226 = vmatpush.msra.mxu0 %v2197
    %2227 = vmatpush.msra.mxu0 %v2193
    %2228 = vmatpush.msra.mxu0 %v2189
    %2229 = vmatpush.msra.mxu0 %v2185
    %2230 = vmatpush.msra.mxu0 %v2181
    %2231 = vmatpush.msra.mxu0 %v2177
    %2232 = vmatpush.msra.mxu0 %v2173
    %2233 = vmatpush.msra.mxu0 %v2169
    %2234 = vmatpush.msra.mxu0 %v2165
    %2235 = vmatpush.msra.mxu0 %v2161
    %2236 = vmatpush.msra.mxu0 %v2157
    %2237 = vmatpush.msra.mxu0 %v2153
    %2238 = vmatpush.msra.mxu0 %v2149
    %2239 = vmatmul.f32.gmra.mxu0 %v2141
    %v2240 = vpop.f32.mrf.mxu0
    %v2241 = vadd.f32 %v2215, %v2240
    %2242 = vmatmul.f32.gmra.mxu0 %v2142
    %v2243 = vpop.f32.mrf.mxu0
    %v2244 = vadd.f32 %v2215, %v2243
    %2245 = vmatmul.f32.gmra.mxu0 %v2143
    %v2246 = vpop.f32.mrf.mxu0
    %v2247 = vadd.f32 %v2215, %v2246
    %2248 = vmatmul.f32.gmra.mxu0 %v2144
    %v2249 = vpop.f32.mrf.mxu0
    %v2250 = vadd.f32 %v2215, %v2249
    %2251 = vmatmul.f32.gmra.mxu0 %v2145
    %v2252 = vpop.f32.mrf.mxu0
    %v2253 = vadd.f32 %v2215, %v2252
    %2254 = vmatmul.f32.gmra.mxu0 %v2146
    %v2255 = vpop.f32.mrf.mxu0
    %v2256 = vadd.f32 %v2215, %v2255
    %2257 = vmatmul.f32.gmra.mxu0 %v2147
    %v2258 = vpop.f32.mrf.mxu0
    %v2259 = vadd.f32 %v2215, %v2258
    %2260 = vmatmul.f32.gmra.mxu0 %v2148
    %v2261 = vpop.f32.mrf.mxu0
    %v2262 = vadd.f32 %v2215, %v2261
    %2263 = vdwg.mxu0
    %2264 = vmatpush.msra.mxu0 %v2210
    %2265 = vmatpush.msra.mxu0 %v2206
    %2266 = vmatpush.msra.mxu0 %v2202
    %2267 = vmatpush.msra.mxu0 %v2198
    %2268 = vmatpush.msra.mxu0 %v2194
    %2269 = vmatpush.msra.mxu0 %v2190
    %2270 = vmatpush.msra.mxu0 %v2186
    %2271 = vmatpush.msra.mxu0 %v2182
    %2272 = vmatpush.msra.mxu0 %v2178
    %2273 = vmatpush.msra.mxu0 %v2174
    %2274 = vmatpush.msra.mxu0 %v2170
    %2275 = vmatpush.msra.mxu0 %v2166
    %2276 = vmatpush.msra.mxu0 %v2162
    %2277 = vmatpush.msra.mxu0 %v2158
    %2278 = vmatpush.msra.mxu0 %v2154
    %2279 = vmatpush.msra.mxu0 %v2150
    %2280 = vmatmul.f32.gmra.mxu0 %v2141
    %v2281 = vpop.f32.mrf.mxu0
    %v2282 = vadd.f32 %v2216, %v2281
    %2283 = vmatmul.f32.gmra.mxu0 %v2142
    %v2284 = vpop.f32.mrf.mxu0
    %v2285 = vadd.f32 %v2216, %v2284
    %2286 = vmatmul.f32.gmra.mxu0 %v2143
    %v2287 = vpop.f32.mrf.mxu0
    %v2288 = vadd.f32 %v2216, %v2287
    %2289 = vmatmul.f32.gmra.mxu0 %v2144
    %v2290 = vpop.f32.mrf.mxu0
    %v2291 = vadd.f32 %v2216, %v2290
    %2292 = vmatmul.f32.gmra.mxu0 %v2145
    %v2293 = vpop.f32.mrf.mxu0
    %v2294 = vadd.f32 %v2216, %v2293
    %2295 = vmatmul.f32.gmra.mxu0 %v2146
    %v2296 = vpop.f32.mrf.mxu0
    %v2297 = vadd.f32 %v2216, %v2296
    %2298 = vmatmul.f32.gmra.mxu0 %v2147
    %v2299 = vpop.f32.mrf.mxu0
    %v2300 = vadd.f32 %v2216, %v2299
    %2301 = vmatmul.f32.gmra.mxu0 %v2148
    %v2302 = vpop.f32.mrf.mxu0
    %v2303 = vadd.f32 %v2216, %v2302
    %2304 = vdwg.mxu0
    %2305 = vmatpush.msra.mxu0 %v2211
    %2306 = vmatpush.msra.mxu0 %v2207
    %2307 = vmatpush.msra.mxu0 %v2203
    %2308 = vmatpush.msra.mxu0 %v2199
    %2309 = vmatpush.msra.mxu0 %v2195
    %2310 = vmatpush.msra.mxu0 %v2191
    %2311 = vmatpush.msra.mxu0 %v2187
    %2312 = vmatpush.msra.mxu0 %v2183
    %2313 = vmatpush.msra.mxu0 %v2179
    %2314 = vmatpush.msra.mxu0 %v2175
    %2315 = vmatpush.msra.mxu0 %v2171
    %2316 = vmatpush.msra.mxu0 %v2167
    %2317 = vmatpush.msra.mxu0 %v2163
    %2318 = vmatpush.msra.mxu0 %v2159
    %2319 = vmatpush.msra.mxu0 %v2155
    %2320 = vmatpush.msra.mxu0 %v2151
    %2321 = vmatmul.f32.gmra.mxu0 %v2141
    %v2322 = vpop.f32.mrf.mxu0
    %v2323 = vadd.f32 %v2217, %v2322
    %2324 = vmatmul.f32.gmra.mxu0 %v2142
    %v2325 = vpop.f32.mrf.mxu0
    %v2326 = vadd.f32 %v2217, %v2325
    %2327 = vmatmul.f32.gmra.mxu0 %v2143
    %v2328 = vpop.f32.mrf.mxu0
    %v2329 = vadd.f32 %v2217, %v2328
    %2330 = vmatmul.f32.gmra.mxu0 %v2144
    %v2331 = vpop.f32.mrf.mxu0
    %v2332 = vadd.f32 %v2217, %v2331
    %2333 = vmatmul.f32.gmra.mxu0 %v2145
    %v2334 = vpop.f32.mrf.mxu0
    %v2335 = vadd.f32 %v2217, %v2334
    %2336 = vmatmul.f32.gmra.mxu0 %v2146
    %v2337 = vpop.f32.mrf.mxu0
    %v2338 = vadd.f32 %v2217, %v2337
    %2339 = vmatmul.f32.gmra.mxu0 %v2147
    %v2340 = vpop.f32.mrf.mxu0
    %v2341 = vadd.f32 %v2217, %v2340
    %2342 = vmatmul.f32.gmra.mxu0 %v2148
    %v2343 = vpop.f32.mrf.mxu0
    %v2344 = vadd.f32 %v2217, %v2343
    %2345 = vdwg.mxu0
    %2346 = vmatpush.msra.mxu0 %v2212
    %2347 = vmatpush.msra.mxu0 %v2208
    %2348 = vmatpush.msra.mxu0 %v2204
    %2349 = vmatpush.msra.mxu0 %v2200
    %2350 = vmatpush.msra.mxu0 %v2196
    %2351 = vmatpush.msra.mxu0 %v2192
    %2352 = vmatpush.msra.mxu0 %v2188
    %2353 = vmatpush.msra.mxu0 %v2184
    %2354 = vmatpush.msra.mxu0 %v2180
    %2355 = vmatpush.msra.mxu0 %v2176
    %2356 = vmatpush.msra.mxu0 %v2172
    %2357 = vmatpush.msra.mxu0 %v2168
    %2358 = vmatpush.msra.mxu0 %v2164
    %2359 = vmatpush.msra.mxu0 %v2160
    %2360 = vmatpush.msra.mxu0 %v2156
    %2361 = vmatpush.msra.mxu0 %v2152
    %2362 = vmatmul.f32.gmra.mxu0 %v2141
    %v2363 = vpop.f32.mrf.mxu0
    %v2364 = vadd.f32 %v2218, %v2363
    %2365 = vmatmul.f32.gmra.mxu0 %v2142
    %v2366 = vpop.f32.mrf.mxu0
    %v2367 = vadd.f32 %v2218, %v2366
    %2368 = vmatmul.f32.gmra.mxu0 %v2143
    %v2369 = vpop.f32.mrf.mxu0
    %v2370 = vadd.f32 %v2218, %v2369
    %2371 = vmatmul.f32.gmra.mxu0 %v2144
    %v2372 = vpop.f32.mrf.mxu0
    %v2373 = vadd.f32 %v2218, %v2372
    %2374 = vmatmul.f32.gmra.mxu0 %v2145
    %v2375 = vpop.f32.mrf.mxu0
    %v2376 = vadd.f32 %v2218, %v2375
    %2377 = vmatmul.f32.gmra.mxu0 %v2146
    %v2378 = vpop.f32.mrf.mxu0
    %v2379 = vadd.f32 %v2218, %v2378
    %2380 = vmatmul.f32.gmra.mxu0 %v2147
    %v2381 = vpop.f32.mrf.mxu0
    %v2382 = vadd.f32 %v2218, %v2381
    %2383 = vmatmul.f32.gmra.mxu0 %v2148
    %v2384 = vpop.f32.mrf.mxu0
    %v2385 = vadd.f32 %v2218, %v2384
    %2386 = vdwg.mxu0
    %2387 = vst [vmem:[#allocation2] sm:$0xff] %v2241
    %2388 = vst [vmem:[#allocation2 + $0x8] sm:$0xff] %v2282
    %2389 = vst [vmem:[#allocation2 + $0x10] sm:$0xff] %v2323
    %2390 = vst [vmem:[#allocation2 + $0x18] sm:$0xff] %v2364
    %2391 = vst [vmem:[#allocation2 + $0x20] sm:$0xff] %v2244
    %2392 = vst [vmem:[#allocation2 + $0x28] sm:$0xff] %v2285
    %2393 = vst [vmem:[#allocation2 + $0x30] sm:$0xff] %v2326
    %2394 = vst [vmem:[#allocation2 + $0x38] sm:$0xff] %v2367
    %2395 = vst [vmem:[#allocation2 + $0x40] sm:$0xff] %v2247
    %2396 = vst [vmem:[#allocation2 + $0x48] sm:$0xff] %v2288
    %2397 = vst [vmem:[#allocation2 + $0x50] sm:$0xff] %v2329
    %2398 = vst [vmem:[#allocation2 + $0x58] sm:$0xff] %v2370
    %2399 = vst [vmem:[#allocation2 + $0x60] sm:$0xff] %v2250
    %2400 = vst [vmem:[#allocation2 + $0x68] sm:$0xff] %v2291
    %2401 = vst [vmem:[#allocation2 + $0x70] sm:$0xff] %v2332
    %2402 = vst [vmem:[#allocation2 + $0x78] sm:$0xff] %v2373
    %2403 = vst [vmem:[#allocation2 + $0x80] sm:$0xff] %v2253
    %2404 = vst [vmem:[#allocation2 + $0x88] sm:$0xff] %v2294
    %2405 = vst [vmem:[#allocation2 + $0x90] sm:$0xff] %v2335
    %2406 = vst [vmem:[#allocation2 + $0x98] sm:$0xff] %v2376
    %2407 = vst [vmem:[#allocation2 + $0xa0] sm:$0xff] %v2256
    %2408 = vst [vmem:[#allocation2 + $0xa8] sm:$0xff] %v2297
    %2409 = vst [vmem:[#allocation2 + $0xb0] sm:$0xff] %v2338
    %2410 = vst [vmem:[#allocation2 + $0xb8] sm:$0xff] %v2379
    %2411 = vst [vmem:[#allocation2 + $0xc0] sm:$0xff] %v2259
    %2412 = vst [vmem:[#allocation2 + $0xc8] sm:$0xff] %v2300
    %2413 = vst [vmem:[#allocation2 + $0xd0] sm:$0xff] %v2341
    %2414 = vst [vmem:[#allocation2 + $0xd8] sm:$0xff] %v2382
    %2415 = vst [vmem:[#allocation2 + $0xe0] sm:$0xff] %v2262
    %2416 = vst [vmem:[#allocation2 + $0xe8] sm:$0xff] %v2303
    %2417 = vst [vmem:[#allocation2 + $0xf0] sm:$0xff] %v2344
    %2418 = vst [vmem:[#allocation2 + $0xf8] sm:$0xff] %v2385
    %v2419 = vld [vmem:[#allocation2] sm:$0xff]
    %v2420 = vld [vmem:[#allocation2 + $0x8] sm:$0xff]
    %v2421 = vld [vmem:[#allocation2 + $0x10] sm:$0xff]
    %v2422 = vld [vmem:[#allocation2 + $0x18] sm:$0xff]
    %v2423 = vld [vmem:[#allocation9] sm:$0xff]
    %v2424 = vld [vmem:[#allocation9 + $0x8] sm:$0xff]
    %v2425 = vld [vmem:[#allocation9 + $0x10] sm:$0xff]
    %v2426 = vld [vmem:[#allocation9 + $0x18] sm:$0xff]
    %v2427 = vld [vmem:[#allocation9 + $0x20] sm:$0xff]
    %v2428 = vld [vmem:[#allocation9 + $0x28] sm:$0xff]
    %v2429 = vld [vmem:[#allocation9 + $0x30] sm:$0xff]
    %v2430 = vld [vmem:[#allocation9 + $0x38] sm:$0xff]
    %v2431 = vld [vmem:[#allocation9 + $0x40] sm:$0xff]
    %v2432 = vld [vmem:[#allocation9 + $0x48] sm:$0xff]
    %v2433 = vld [vmem:[#allocation9 + $0x50] sm:$0xff]
    %v2434 = vld [vmem:[#allocation9 + $0x58] sm:$0xff]
    %v2435 = vld [vmem:[#allocation9 + $0x60] sm:$0xff]
    %v2436 = vld [vmem:[#allocation9 + $0x68] sm:$0xff]
    %v2437 = vld [vmem:[#allocation9 + $0x70] sm:$0xff]
    %v2438 = vld [vmem:[#allocation9 + $0x78] sm:$0xff]
    %v2439 = vld [vmem:[#allocation9 + $0x80] sm:$0xff]
    %v2440 = vld [vmem:[#allocation9 + $0x88] sm:$0xff]
    %v2441 = vld [vmem:[#allocation9 + $0x90] sm:$0xff]
    %v2442 = vld [vmem:[#allocation9 + $0x98] sm:$0xff]
    %v2443 = vld [vmem:[#allocation9 + $0xa0] sm:$0xff]
    %v2444 = vld [vmem:[#allocation9 + $0xa8] sm:$0xff]
    %v2445 = vld [vmem:[#allocation9 + $0xb0] sm:$0xff]
    %v2446 = vld [vmem:[#allocation9 + $0xb8] sm:$0xff]
    %v2447 = vld [vmem:[#allocation9 + $0xc0] sm:$0xff]
    %v2448 = vld [vmem:[#allocation9 + $0xc8] sm:$0xff]
    %v2449 = vld [vmem:[#allocation9 + $0xd0] sm:$0xff]
    %v2450 = vld [vmem:[#allocation9 + $0xd8] sm:$0xff]
    %v2451 = vld [vmem:[#allocation9 + $0xe0] sm:$0xff]
    %v2452 = vld [vmem:[#allocation9 + $0xe8] sm:$0xff]
    %v2453 = vld [vmem:[#allocation9 + $0xf0] sm:$0xff]
    %v2454 = vld [vmem:[#allocation9 + $0xf8] sm:$0xff]
    %v2455 = vld [vmem:[#allocation9 + $0x100] sm:$0xff]
    %v2456 = vld [vmem:[#allocation9 + $0x108] sm:$0xff]
    %v2457 = vld [vmem:[#allocation9 + $0x110] sm:$0xff]
    %v2458 = vld [vmem:[#allocation9 + $0x118] sm:$0xff]
    %v2459 = vld [vmem:[#allocation9 + $0x120] sm:$0xff]
    %v2460 = vld [vmem:[#allocation9 + $0x128] sm:$0xff]
    %v2461 = vld [vmem:[#allocation9 + $0x130] sm:$0xff]
    %v2462 = vld [vmem:[#allocation9 + $0x138] sm:$0xff]
    %v2463 = vld [vmem:[#allocation9 + $0x140] sm:$0xff]
    %v2464 = vld [vmem:[#allocation9 + $0x148] sm:$0xff]
    %v2465 = vld [vmem:[#allocation9 + $0x150] sm:$0xff]
    %v2466 = vld [vmem:[#allocation9 + $0x158] sm:$0xff]
    %v2467 = vld [vmem:[#allocation9 + $0x160] sm:$0xff]
    %v2468 = vld [vmem:[#allocation9 + $0x168] sm:$0xff]
    %v2469 = vld [vmem:[#allocation9 + $0x170] sm:$0xff]
    %v2470 = vld [vmem:[#allocation9 + $0x178] sm:$0xff]
    %v2471 = vld [vmem:[#allocation9 + $0x180] sm:$0xff]
    %v2472 = vld [vmem:[#allocation9 + $0x188] sm:$0xff]
    %v2473 = vld [vmem:[#allocation9 + $0x190] sm:$0xff]
    %v2474 = vld [vmem:[#allocation9 + $0x198] sm:$0xff]
    %v2475 = vld [vmem:[#allocation9 + $0x1a0] sm:$0xff]
    %v2476 = vld [vmem:[#allocation9 + $0x1a8] sm:$0xff]
    %v2477 = vld [vmem:[#allocation9 + $0x1b0] sm:$0xff]
    %v2478 = vld [vmem:[#allocation9 + $0x1b8] sm:$0xff]
    %v2479 = vld [vmem:[#allocation9 + $0x1c0] sm:$0xff]
    %v2480 = vld [vmem:[#allocation9 + $0x1c8] sm:$0xff]
    %v2481 = vld [vmem:[#allocation9 + $0x1d0] sm:$0xff]
    %v2482 = vld [vmem:[#allocation9 + $0x1d8] sm:$0xff]
    %v2483 = vld [vmem:[#allocation9 + $0x1e0] sm:$0xff]
    %v2484 = vld [vmem:[#allocation9 + $0x1e8] sm:$0xff]
    %v2485 = vld [vmem:[#allocation9 + $0x1f0] sm:$0xff]
    %v2486 = vld [vmem:[#allocation9 + $0x1f8] sm:$0xff]
    %2487 = vmatpush.msra.mxu0 %v2483
    %2488 = vmatpush.msra.mxu0 %v2479
    %2489 = vmatpush.msra.mxu0 %v2475
    %2490 = vmatpush.msra.mxu0 %v2471
    %2491 = vmatpush.msra.mxu0 %v2467
    %2492 = vmatpush.msra.mxu0 %v2463
    %2493 = vmatpush.msra.mxu0 %v2459
    %2494 = vmatpush.msra.mxu0 %v2455
    %2495 = vmatpush.msra.mxu0 %v2451
    %2496 = vmatpush.msra.mxu0 %v2447
    %2497 = vmatpush.msra.mxu0 %v2443
    %2498 = vmatpush.msra.mxu0 %v2439
    %2499 = vmatpush.msra.mxu0 %v2435
    %2500 = vmatpush.msra.mxu0 %v2431
    %2501 = vmatpush.msra.mxu0 %v2427
    %2502 = vmatpush.msra.mxu0 %v2423
    %2503 = vmatmul.f32.gmra.mxu0 0.0
    %v2504 = vpop.f32.mrf.mxu0
    %v2505 = vadd.f32 0.0, %v2504
    %2506 = vdwg.mxu0
    %2507 = vmatpush.msra.mxu0 %v2484
    %2508 = vmatpush.msra.mxu0 %v2480
    %2509 = vmatpush.msra.mxu0 %v2476
    %2510 = vmatpush.msra.mxu0 %v2472
    %2511 = vmatpush.msra.mxu0 %v2468
    %2512 = vmatpush.msra.mxu0 %v2464
    %2513 = vmatpush.msra.mxu0 %v2460
    %2514 = vmatpush.msra.mxu0 %v2456
    %2515 = vmatpush.msra.mxu0 %v2452
    %2516 = vmatpush.msra.mxu0 %v2448
    %2517 = vmatpush.msra.mxu0 %v2444
    %2518 = vmatpush.msra.mxu0 %v2440
    %2519 = vmatpush.msra.mxu0 %v2436
    %2520 = vmatpush.msra.mxu0 %v2432
    %2521 = vmatpush.msra.mxu0 %v2428
    %2522 = vmatpush.msra.mxu0 %v2424
    %2523 = vmatmul.f32.gmra.mxu0 0.0
    %v2524 = vpop.f32.mrf.mxu0
    %v2525 = vadd.f32 0.0, %v2524
    %2526 = vdwg.mxu0
    %2527 = vmatpush.msra.mxu0 %v2485
    %2528 = vmatpush.msra.mxu0 %v2481
    %2529 = vmatpush.msra.mxu0 %v2477
    %2530 = vmatpush.msra.mxu0 %v2473
    %2531 = vmatpush.msra.mxu0 %v2469
    %2532 = vmatpush.msra.mxu0 %v2465
    %2533 = vmatpush.msra.mxu0 %v2461
    %2534 = vmatpush.msra.mxu0 %v2457
    %2535 = vmatpush.msra.mxu0 %v2453
    %2536 = vmatpush.msra.mxu0 %v2449
    %2537 = vmatpush.msra.mxu0 %v2445
    %2538 = vmatpush.msra.mxu0 %v2441
    %2539 = vmatpush.msra.mxu0 %v2437
    %2540 = vmatpush.msra.mxu0 %v2433
    %2541 = vmatpush.msra.mxu0 %v2429
    %2542 = vmatpush.msra.mxu0 %v2425
    %2543 = vmatmul.f32.gmra.mxu0 0.0
    %v2544 = vpop.f32.mrf.mxu0
    %v2545 = vadd.f32 0.0, %v2544
    %2546 = vdwg.mxu0
    %2547 = vmatpush.msra.mxu0 %v2486
    %2548 = vmatpush.msra.mxu0 %v2482
    %2549 = vmatpush.msra.mxu0 %v2478
    %2550 = vmatpush.msra.mxu0 %v2474
    %2551 = vmatpush.msra.mxu0 %v2470
    %2552 = vmatpush.msra.mxu0 %v2466
    %2553 = vmatpush.msra.mxu0 %v2462
    %2554 = vmatpush.msra.mxu0 %v2458
    %2555 = vmatpush.msra.mxu0 %v2454
    %2556 = vmatpush.msra.mxu0 %v2450
    %2557 = vmatpush.msra.mxu0 %v2446
    %2558 = vmatpush.msra.mxu0 %v2442
    %2559 = vmatpush.msra.mxu0 %v2438
    %2560 = vmatpush.msra.mxu0 %v2434
    %2561 = vmatpush.msra.mxu0 %v2430
    %2562 = vmatpush.msra.mxu0 %v2426
    %2563 = vmatmul.f32.gmra.mxu0 0.0
    %v2564 = vpop.f32.mrf.mxu0
    %v2565 = vadd.f32 0.0, %v2564
    %2566 = vdwg.mxu0
    %v2567 = vadd.f32 %v2419, %v2505
    %v2568 = vadd.f32 %v2420, %v2525
    %v2569 = vadd.f32 %v2421, %v2545
    %v2570 = vadd.f32 %v2422, %v2565
    %v2571 = vxor.u32 %v2567, 2147483648
    %v2572 = vxor.u32 %v2568, 2147483648
    %v2573 = vxor.u32 %v2569, 2147483648
    %v2574 = vmul.f32 %v2571, 1.442695
    %v2575 = vpow.pop %v2574
    %v2576 = vmul.f32 %v2572, 1.442695
    %v2577 = vpow.pop %v2576
    %v2578 = vmul.f32 %v2573, 1.442695
    %v2579 = vpow.pop %v2578
    %v2580 = vadd.f32 %v2575, 1.0
    %v2581 = vadd.f32 %v2577, 1.0
    %v2582 = vadd.f32 %v2579, 1.0
    %v2583 = vrcp.pop %v2580
    %v2584 = vmul.f32 %v2580, %v2583
    %v2585 = vsub.f32 1.0, %v2584
    %v2586 = vmul.f32 %v2583, %v2585
    %v2587 = vadd.f32 %v2583, %v2586
    %vm2588 = vweird.f32 %v2580
    %vm2589 = vweird.f32 %v2583
    %vm2590 = vmor %vm2588, %vm2589
    %v2591 = vsel %vm2590, %v2583, %v2587
    %v2592 = vand.u32 2147483647, %v2580
    %vm2593 = vcmp.eq.f32.partialorder %v2592, 8.507059e+37
    %v2594 = vand.u32 %v2580, 2147483648
    %v2595 = vor.u32 1.1754944e-38, %v2594
    %v2596 = vsel %vm2593, %v2595, %v2591
    %v2597 = vmul.f32 1.0, %v2596
    %v2598 = vrcp.pop %v2581
    %v2599 = vmul.f32 %v2581, %v2598
    %v2600 = vsub.f32 1.0, %v2599
    %v2601 = vmul.f32 %v2598, %v2600
    %v2602 = vadd.f32 %v2598, %v2601
    %vm2603 = vweird.f32 %v2581
    %vm2604 = vweird.f32 %v2598
    %vm2605 = vmor %vm2603, %vm2604
    %v2606 = vsel %vm2605, %v2598, %v2602
    %v2607 = vand.u32 2147483647, %v2581
    %vm2608 = vcmp.eq.f32.partialorder %v2607, 8.507059e+37
    %v2609 = vand.u32 %v2581, 2147483648
    %v2610 = vor.u32 1.1754944e-38, %v2609
    %v2611 = vsel %vm2608, %v2610, %v2606
    %v2612 = vmul.f32 1.0, %v2611
    %v2613 = vrcp.pop %v2582
    %v2614 = vmul.f32 %v2582, %v2613
    %v2615 = vsub.f32 1.0, %v2614
    %v2616 = vmul.f32 %v2613, %v2615
    %v2617 = vadd.f32 %v2613, %v2616
    %vm2618 = vweird.f32 %v2582
    %vm2619 = vweird.f32 %v2613
    %vm2620 = vmor %vm2618, %vm2619
    %v2621 = vsel %vm2620, %v2613, %v2617
    %v2622 = vand.u32 2147483647, %v2582
    %vm2623 = vcmp.eq.f32.partialorder %v2622, 8.507059e+37
    %v2624 = vand.u32 %v2582, 2147483648
    %v2625 = vor.u32 1.1754944e-38, %v2624
    %v2626 = vsel %vm2623, %v2625, %v2621
    %v2627 = vmul.f32 1.0, %v2626
    %v2628 = vtanh.pop %v2570
    %v2629 = vmul.f32 %v2612, 0.0
    %v2630 = vmul.f32 %v2597, %v2628
    %v2631 = vadd.f32 %v2629, %v2630
    %v2632 = vtanh.pop %v2631
    %v2633 = vmul.f32 %v2627, %v2632
    %v2634 = vld [vmem:[#allocation2 + $0x20] sm:$0xff]
    %v2635 = vld [vmem:[#allocation2 + $0x28] sm:$0xff]
    %v2636 = vld [vmem:[#allocation2 + $0x30] sm:$0xff]
    %v2637 = vld [vmem:[#allocation2 + $0x38] sm:$0xff]
    %2638 = vmatpush.msra.mxu0 %v2483
    %2639 = vmatpush.msra.mxu0 %v2479
    %2640 = vmatpush.msra.mxu0 %v2475
    %2641 = vmatpush.msra.mxu0 %v2471
    %2642 = vmatpush.msra.mxu0 %v2467
    %2643 = vmatpush.msra.mxu0 %v2463
    %2644 = vmatpush.msra.mxu0 %v2459
    %2645 = vmatpush.msra.mxu0 %v2455
    %2646 = vmatpush.msra.mxu0 %v2451
    %2647 = vmatpush.msra.mxu0 %v2447
    %2648 = vmatpush.msra.mxu0 %v2443
    %2649 = vmatpush.msra.mxu0 %v2439
    %2650 = vmatpush.msra.mxu0 %v2435
    %2651 = vmatpush.msra.mxu0 %v2431
    %2652 = vmatpush.msra.mxu0 %v2427
    %2653 = vmatpush.msra.mxu0 %v2423
    %2654 = vmatmul.f32.gmra.mxu0 %v2633
    %v2655 = vpop.f32.mrf.mxu0
    %v2656 = vadd.f32 0.0, %v2655
    %2657 = vdwg.mxu0
    %2658 = vmatpush.msra.mxu0 %v2484
    %2659 = vmatpush.msra.mxu0 %v2480
    %2660 = vmatpush.msra.mxu0 %v2476
    %2661 = vmatpush.msra.mxu0 %v2472
    %2662 = vmatpush.msra.mxu0 %v2468
    %2663 = vmatpush.msra.mxu0 %v2464
    %2664 = vmatpush.msra.mxu0 %v2460
    %2665 = vmatpush.msra.mxu0 %v2456
    %2666 = vmatpush.msra.mxu0 %v2452
    %2667 = vmatpush.msra.mxu0 %v2448
    %2668 = vmatpush.msra.mxu0 %v2444
    %2669 = vmatpush.msra.mxu0 %v2440
    %2670 = vmatpush.msra.mxu0 %v2436
    %2671 = vmatpush.msra.mxu0 %v2432
    %2672 = vmatpush.msra.mxu0 %v2428
    %2673 = vmatpush.msra.mxu0 %v2424
    %2674 = vmatmul.f32.gmra.mxu0 %v2633
    %v2675 = vpop.f32.mrf.mxu0
    %v2676 = vadd.f32 0.0, %v2675
    %2677 = vdwg.mxu0
    %2678 = vmatpush.msra.mxu0 %v2485
    %2679 = vmatpush.msra.mxu0 %v2481
    %2680 = vmatpush.msra.mxu0 %v2477
    %2681 = vmatpush.msra.mxu0 %v2473
    %2682 = vmatpush.msra.mxu0 %v2469
    %2683 = vmatpush.msra.mxu0 %v2465
    %2684 = vmatpush.msra.mxu0 %v2461
    %2685 = vmatpush.msra.mxu0 %v2457
    %2686 = vmatpush.msra.mxu0 %v2453
    %2687 = vmatpush.msra.mxu0 %v2449
    %2688 = vmatpush.msra.mxu0 %v2445
    %2689 = vmatpush.msra.mxu0 %v2441
    %2690 = vmatpush.msra.mxu0 %v2437
    %2691 = vmatpush.msra.mxu0 %v2433
    %2692 = vmatpush.msra.mxu0 %v2429
    %2693 = vmatpush.msra.mxu0 %v2425
    %2694 = vmatmul.f32.gmra.mxu0 %v2633
    %v2695 = vpop.f32.mrf.mxu0
    %v2696 = vadd.f32 0.0, %v2695
    %2697 = vdwg.mxu0
    %2698 = vmatpush.msra.mxu0 %v2486
    %2699 = vmatpush.msra.mxu0 %v2482
    %2700 = vmatpush.msra.mxu0 %v2478
    %2701 = vmatpush.msra.mxu0 %v2474
    %2702 = vmatpush.msra.mxu0 %v2470
    %2703 = vmatpush.msra.mxu0 %v2466
    %2704 = vmatpush.msra.mxu0 %v2462
    %2705 = vmatpush.msra.mxu0 %v2458
    %2706 = vmatpush.msra.mxu0 %v2454
    %2707 = vmatpush.msra.mxu0 %v2450
    %2708 = vmatpush.msra.mxu0 %v2446
    %2709 = vmatpush.msra.mxu0 %v2442
    %2710 = vmatpush.msra.mxu0 %v2438
    %2711 = vmatpush.msra.mxu0 %v2434
    %2712 = vmatpush.msra.mxu0 %v2430
    %2713 = vmatpush.msra.mxu0 %v2426
    %2714 = vmatmul.f32.gmra.mxu0 %v2633
    %v2715 = vpop.f32.mrf.mxu0
    %v2716 = vadd.f32 0.0, %v2715
    %2717 = vdwg.mxu0
    %v2718 = vadd.f32 %v2634, %v2656
    %v2719 = vadd.f32 %v2635, %v2676
    %v2720 = vadd.f32 %v2636, %v2696
    %v2721 = vadd.f32 %v2637, %v2716
    %v2722 = vxor.u32 %v2718, 2147483648
    %v2723 = vxor.u32 %v2719, 2147483648
    %v2724 = vxor.u32 %v2720, 2147483648
    %v2725 = vmul.f32 %v2722, 1.442695
    %v2726 = vpow.pop %v2725
    %v2727 = vmul.f32 %v2723, 1.442695
    %v2728 = vpow.pop %v2727
    %v2729 = vmul.f32 %v2724, 1.442695
    %v2730 = vpow.pop %v2729
    %v2731 = vadd.f32 %v2726, 1.0
    %v2732 = vadd.f32 %v2728, 1.0
    %v2733 = vadd.f32 %v2730, 1.0
    %v2734 = vrcp.pop %v2731
    %v2735 = vmul.f32 %v2731, %v2734
    %v2736 = vsub.f32 1.0, %v2735
    %v2737 = vmul.f32 %v2734, %v2736
    %v2738 = vadd.f32 %v2734, %v2737
    %vm2739 = vweird.f32 %v2731
    %vm2740 = vweird.f32 %v2734
    %vm2741 = vmor %vm2739, %vm2740
    %v2742 = vsel %vm2741, %v2734, %v2738
    %v2743 = vand.u32 2147483647, %v2731
    %vm2744 = vcmp.eq.f32.partialorder %v2743, 8.507059e+37
    %v2745 = vand.u32 %v2731, 2147483648
    %v2746 = vor.u32 1.1754944e-38, %v2745
    %v2747 = vsel %vm2744, %v2746, %v2742
    %v2748 = vmul.f32 1.0, %v2747
    %v2749 = vrcp.pop %v2732
    %v2750 = vmul.f32 %v2732, %v2749
    %v2751 = vsub.f32 1.0, %v2750
    %v2752 = vmul.f32 %v2749, %v2751
    %v2753 = vadd.f32 %v2749, %v2752
    %vm2754 = vweird.f32 %v2732
    %vm2755 = vweird.f32 %v2749
    %vm2756 = vmor %vm2754, %vm2755
    %v2757 = vsel %vm2756, %v2749, %v2753
    %v2758 = vand.u32 2147483647, %v2732
    %vm2759 = vcmp.eq.f32.partialorder %v2758, 8.507059e+37
    %v2760 = vand.u32 %v2732, 2147483648
    %v2761 = vor.u32 1.1754944e-38, %v2760
    %v2762 = vsel %vm2759, %v2761, %v2757
    %v2763 = vmul.f32 1.0, %v2762
    %v2764 = vrcp.pop %v2733
    %v2765 = vmul.f32 %v2733, %v2764
    %v2766 = vsub.f32 1.0, %v2765
    %v2767 = vmul.f32 %v2764, %v2766
    %v2768 = vadd.f32 %v2764, %v2767
    %vm2769 = vweird.f32 %v2733
    %vm2770 = vweird.f32 %v2764
    %vm2771 = vmor %vm2769, %vm2770
    %v2772 = vsel %vm2771, %v2764, %v2768
    %v2773 = vand.u32 2147483647, %v2733
    %vm2774 = vcmp.eq.f32.partialorder %v2773, 8.507059e+37
    %v2775 = vand.u32 %v2733, 2147483648
    %v2776 = vor.u32 1.1754944e-38, %v2775
    %v2777 = vsel %vm2774, %v2776, %v2772
    %v2778 = vmul.f32 1.0, %v2777
    %v2779 = vtanh.pop %v2721
    %v2780 = vmul.f32 %v2763, %v2631
    %v2781 = vmul.f32 %v2748, %v2779
    %v2782 = vadd.f32 %v2780, %v2781
    %v2783 = vtanh.pop %v2782
    %v2784 = vmul.f32 %v2778, %v2783
    %v2785 = vld [vmem:[#allocation2 + $0x40] sm:$0xff]
    %v2786 = vld [vmem:[#allocation2 + $0x48] sm:$0xff]
    %v2787 = vld [vmem:[#allocation2 + $0x50] sm:$0xff]
    %v2788 = vld [vmem:[#allocation2 + $0x58] sm:$0xff]
    %2789 = vmatpush.msra.mxu0 %v2483
    %2790 = vmatpush.msra.mxu0 %v2479
    %2791 = vmatpush.msra.mxu0 %v2475
    %2792 = vmatpush.msra.mxu0 %v2471
    %2793 = vmatpush.msra.mxu0 %v2467
    %2794 = vmatpush.msra.mxu0 %v2463
    %2795 = vmatpush.msra.mxu0 %v2459
    %2796 = vmatpush.msra.mxu0 %v2455
    %2797 = vmatpush.msra.mxu0 %v2451
    %2798 = vmatpush.msra.mxu0 %v2447
    %2799 = vmatpush.msra.mxu0 %v2443
    %2800 = vmatpush.msra.mxu0 %v2439
    %2801 = vmatpush.msra.mxu0 %v2435
    %2802 = vmatpush.msra.mxu0 %v2431
    %2803 = vmatpush.msra.mxu0 %v2427
    %2804 = vmatpush.msra.mxu0 %v2423
    %2805 = vmatmul.f32.gmra.mxu0 %v2784
    %v2806 = vpop.f32.mrf.mxu0
    %v2807 = vadd.f32 0.0, %v2806
    %2808 = vdwg.mxu0
    %2809 = vmatpush.msra.mxu0 %v2484
    %2810 = vmatpush.msra.mxu0 %v2480
    %2811 = vmatpush.msra.mxu0 %v2476
    %2812 = vmatpush.msra.mxu0 %v2472
    %2813 = vmatpush.msra.mxu0 %v2468
    %2814 = vmatpush.msra.mxu0 %v2464
    %2815 = vmatpush.msra.mxu0 %v2460
    %2816 = vmatpush.msra.mxu0 %v2456
    %2817 = vmatpush.msra.mxu0 %v2452
    %2818 = vmatpush.msra.mxu0 %v2448
    %2819 = vmatpush.msra.mxu0 %v2444
    %2820 = vmatpush.msra.mxu0 %v2440
    %2821 = vmatpush.msra.mxu0 %v2436
    %2822 = vmatpush.msra.mxu0 %v2432
    %2823 = vmatpush.msra.mxu0 %v2428
    %2824 = vmatpush.msra.mxu0 %v2424
    %2825 = vmatmul.f32.gmra.mxu0 %v2784
    %v2826 = vpop.f32.mrf.mxu0
    %v2827 = vadd.f32 0.0, %v2826
    %2828 = vdwg.mxu0
    %2829 = vmatpush.msra.mxu0 %v2485
    %2830 = vmatpush.msra.mxu0 %v2481
    %2831 = vmatpush.msra.mxu0 %v2477
    %2832 = vmatpush.msra.mxu0 %v2473
    %2833 = vmatpush.msra.mxu0 %v2469
    %2834 = vmatpush.msra.mxu0 %v2465
    %2835 = vmatpush.msra.mxu0 %v2461
    %2836 = vmatpush.msra.mxu0 %v2457
    %2837 = vmatpush.msra.mxu0 %v2453
    %2838 = vmatpush.msra.mxu0 %v2449
    %2839 = vmatpush.msra.mxu0 %v2445
    %2840 = vmatpush.msra.mxu0 %v2441
    %2841 = vmatpush.msra.mxu0 %v2437
    %2842 = vmatpush.msra.mxu0 %v2433
    %2843 = vmatpush.msra.mxu0 %v2429
    %2844 = vmatpush.msra.mxu0 %v2425
    %2845 = vmatmul.f32.gmra.mxu0 %v2784
    %v2846 = vpop.f32.mrf.mxu0
    %v2847 = vadd.f32 0.0, %v2846
    %2848 = vdwg.mxu0
    %2849 = vmatpush.msra.mxu0 %v2486
    %2850 = vmatpush.msra.mxu0 %v2482
    %2851 = vmatpush.msra.mxu0 %v2478
    %2852 = vmatpush.msra.mxu0 %v2474
    %2853 = vmatpush.msra.mxu0 %v2470
    %2854 = vmatpush.msra.mxu0 %v2466
    %2855 = vmatpush.msra.mxu0 %v2462
    %2856 = vmatpush.msra.mxu0 %v2458
    %2857 = vmatpush.msra.mxu0 %v2454
    %2858 = vmatpush.msra.mxu0 %v2450
    %2859 = vmatpush.msra.mxu0 %v2446
    %2860 = vmatpush.msra.mxu0 %v2442
    %2861 = vmatpush.msra.mxu0 %v2438
    %2862 = vmatpush.msra.mxu0 %v2434
    %2863 = vmatpush.msra.mxu0 %v2430
    %2864 = vmatpush.msra.mxu0 %v2426
    %2865 = vmatmul.f32.gmra.mxu0 %v2784
    %v2866 = vpop.f32.mrf.mxu0
    %v2867 = vadd.f32 0.0, %v2866
    %2868 = vdwg.mxu0
    %v2869 = vadd.f32 %v2785, %v2807
    %v2870 = vadd.f32 %v2786, %v2827
    %v2871 = vadd.f32 %v2787, %v2847
    %v2872 = vadd.f32 %v2788, %v2867
    %v2873 = vxor.u32 %v2869, 2147483648
    %v2874 = vxor.u32 %v2870, 2147483648
    %v2875 = vxor.u32 %v2871, 2147483648
    %v2876 = vmul.f32 %v2873, 1.442695
    %v2877 = vpow.pop %v2876
    %v2878 = vmul.f32 %v2874, 1.442695
    %v2879 = vpow.pop %v2878
    %v2880 = vmul.f32 %v2875, 1.442695
    %v2881 = vpow.pop %v2880
    %v2882 = vadd.f32 %v2877, 1.0
    %v2883 = vadd.f32 %v2879, 1.0
    %v2884 = vadd.f32 %v2881, 1.0
    %v2885 = vrcp.pop %v2882
    %v2886 = vmul.f32 %v2882, %v2885
    %v2887 = vsub.f32 1.0, %v2886
    %v2888 = vmul.f32 %v2885, %v2887
    %v2889 = vadd.f32 %v2885, %v2888
    %vm2890 = vweird.f32 %v2882
    %vm2891 = vweird.f32 %v2885
    %vm2892 = vmor %vm2890, %vm2891
    %v2893 = vsel %vm2892, %v2885, %v2889
    %v2894 = vand.u32 2147483647, %v2882
    %vm2895 = vcmp.eq.f32.partialorder %v2894, 8.507059e+37
    %v2896 = vand.u32 %v2882, 2147483648
    %v2897 = vor.u32 1.1754944e-38, %v2896
    %v2898 = vsel %vm2895, %v2897, %v2893
    %v2899 = vmul.f32 1.0, %v2898
    %v2900 = vrcp.pop %v2883
    %v2901 = vmul.f32 %v2883, %v2900
    %v2902 = vsub.f32 1.0, %v2901
    %v2903 = vmul.f32 %v2900, %v2902
    %v2904 = vadd.f32 %v2900, %v2903
    %vm2905 = vweird.f32 %v2883
    %vm2906 = vweird.f32 %v2900
    %vm2907 = vmor %vm2905, %vm2906
    %v2908 = vsel %vm2907, %v2900, %v2904
    %v2909 = vand.u32 2147483647, %v2883
    %vm2910 = vcmp.eq.f32.partialorder %v2909, 8.507059e+37
    %v2911 = vand.u32 %v2883, 2147483648
    %v2912 = vor.u32 1.1754944e-38, %v2911
    %v2913 = vsel %vm2910, %v2912, %v2908
    %v2914 = vmul.f32 1.0, %v2913
    %v2915 = vrcp.pop %v2884
    %v2916 = vmul.f32 %v2884, %v2915
    %v2917 = vsub.f32 1.0, %v2916
    %v2918 = vmul.f32 %v2915, %v2917
    %v2919 = vadd.f32 %v2915, %v2918
    %vm2920 = vweird.f32 %v2884
    %vm2921 = vweird.f32 %v2915
    %vm2922 = vmor %vm2920, %vm2921
    %v2923 = vsel %vm2922, %v2915, %v2919
    %v2924 = vand.u32 2147483647, %v2884
    %vm2925 = vcmp.eq.f32.partialorder %v2924, 8.507059e+37
    %v2926 = vand.u32 %v2884, 2147483648
    %v2927 = vor.u32 1.1754944e-38, %v2926
    %v2928 = vsel %vm2925, %v2927, %v2923
    %v2929 = vmul.f32 1.0, %v2928
    %v2930 = vtanh.pop %v2872
    %v2931 = vmul.f32 %v2914, %v2782
    %v2932 = vmul.f32 %v2899, %v2930
    %v2933 = vadd.f32 %v2931, %v2932
    %v2934 = vtanh.pop %v2933
    %v2935 = vmul.f32 %v2929, %v2934
    %v2936 = vld [vmem:[#allocation2 + $0x60] sm:$0xff]
    %v2937 = vld [vmem:[#allocation2 + $0x68] sm:$0xff]
    %v2938 = vld [vmem:[#allocation2 + $0x70] sm:$0xff]
    %v2939 = vld [vmem:[#allocation2 + $0x78] sm:$0xff]
    %2940 = vmatpush.msra.mxu0 %v2483
    %2941 = vmatpush.msra.mxu0 %v2479
    %2942 = vmatpush.msra.mxu0 %v2475
    %2943 = vmatpush.msra.mxu0 %v2471
    %2944 = vmatpush.msra.mxu0 %v2467
    %2945 = vmatpush.msra.mxu0 %v2463
    %2946 = vmatpush.msra.mxu0 %v2459
    %2947 = vmatpush.msra.mxu0 %v2455
    %2948 = vmatpush.msra.mxu0 %v2451
    %2949 = vmatpush.msra.mxu0 %v2447
    %2950 = vmatpush.msra.mxu0 %v2443
    %2951 = vmatpush.msra.mxu0 %v2439
    %2952 = vmatpush.msra.mxu0 %v2435
    %2953 = vmatpush.msra.mxu0 %v2431
    %2954 = vmatpush.msra.mxu0 %v2427
    %2955 = vmatpush.msra.mxu0 %v2423
    %2956 = vmatmul.f32.gmra.mxu0 %v2935
    %v2957 = vpop.f32.mrf.mxu0
    %v2958 = vadd.f32 0.0, %v2957
    %2959 = vdwg.mxu0
    %2960 = vmatpush.msra.mxu0 %v2484
    %2961 = vmatpush.msra.mxu0 %v2480
    %2962 = vmatpush.msra.mxu0 %v2476
    %2963 = vmatpush.msra.mxu0 %v2472
    %2964 = vmatpush.msra.mxu0 %v2468
    %2965 = vmatpush.msra.mxu0 %v2464
    %2966 = vmatpush.msra.mxu0 %v2460
    %2967 = vmatpush.msra.mxu0 %v2456
    %2968 = vmatpush.msra.mxu0 %v2452
    %2969 = vmatpush.msra.mxu0 %v2448
    %2970 = vmatpush.msra.mxu0 %v2444
    %2971 = vmatpush.msra.mxu0 %v2440
    %2972 = vmatpush.msra.mxu0 %v2436
    %2973 = vmatpush.msra.mxu0 %v2432
    %2974 = vmatpush.msra.mxu0 %v2428
    %2975 = vmatpush.msra.mxu0 %v2424
    %2976 = vmatmul.f32.gmra.mxu0 %v2935
    %v2977 = vpop.f32.mrf.mxu0
    %v2978 = vadd.f32 0.0, %v2977
    %2979 = vdwg.mxu0
    %2980 = vmatpush.msra.mxu0 %v2485
    %2981 = vmatpush.msra.mxu0 %v2481
    %2982 = vmatpush.msra.mxu0 %v2477
    %2983 = vmatpush.msra.mxu0 %v2473
    %2984 = vmatpush.msra.mxu0 %v2469
    %2985 = vmatpush.msra.mxu0 %v2465
    %2986 = vmatpush.msra.mxu0 %v2461
    %2987 = vmatpush.msra.mxu0 %v2457
    %2988 = vmatpush.msra.mxu0 %v2453
    %2989 = vmatpush.msra.mxu0 %v2449
    %2990 = vmatpush.msra.mxu0 %v2445
    %2991 = vmatpush.msra.mxu0 %v2441
    %2992 = vmatpush.msra.mxu0 %v2437
    %2993 = vmatpush.msra.mxu0 %v2433
    %2994 = vmatpush.msra.mxu0 %v2429
    %2995 = vmatpush.msra.mxu0 %v2425
    %2996 = vmatmul.f32.gmra.mxu0 %v2935
    %v2997 = vpop.f32.mrf.mxu0
    %v2998 = vadd.f32 0.0, %v2997
    %2999 = vdwg.mxu0
    %3000 = vmatpush.msra.mxu0 %v2486
    %3001 = vmatpush.msra.mxu0 %v2482
    %3002 = vmatpush.msra.mxu0 %v2478
    %3003 = vmatpush.msra.mxu0 %v2474
    %3004 = vmatpush.msra.mxu0 %v2470
    %3005 = vmatpush.msra.mxu0 %v2466
    %3006 = vmatpush.msra.mxu0 %v2462
    %3007 = vmatpush.msra.mxu0 %v2458
    %3008 = vmatpush.msra.mxu0 %v2454
    %3009 = vmatpush.msra.mxu0 %v2450
    %3010 = vmatpush.msra.mxu0 %v2446
    %3011 = vmatpush.msra.mxu0 %v2442
    %3012 = vmatpush.msra.mxu0 %v2438
    %3013 = vmatpush.msra.mxu0 %v2434
    %3014 = vmatpush.msra.mxu0 %v2430
    %3015 = vmatpush.msra.mxu0 %v2426
    %3016 = vmatmul.f32.gmra.mxu0 %v2935
    %v3017 = vpop.f32.mrf.mxu0
    %v3018 = vadd.f32 0.0, %v3017
    %3019 = vdwg.mxu0
    %v3020 = vadd.f32 %v2936, %v2958
    %v3021 = vadd.f32 %v2937, %v2978
    %v3022 = vadd.f32 %v2938, %v2998
    %v3023 = vadd.f32 %v2939, %v3018
    %v3024 = vxor.u32 %v3020, 2147483648
    %v3025 = vxor.u32 %v3021, 2147483648
    %v3026 = vxor.u32 %v3022, 2147483648
    %v3027 = vmul.f32 %v3024, 1.442695
    %v3028 = vpow.pop %v3027
    %v3029 = vmul.f32 %v3025, 1.442695
    %v3030 = vpow.pop %v3029
    %v3031 = vmul.f32 %v3026, 1.442695
    %v3032 = vpow.pop %v3031
    %v3033 = vadd.f32 %v3028, 1.0
    %v3034 = vadd.f32 %v3030, 1.0
    %v3035 = vadd.f32 %v3032, 1.0
    %v3036 = vrcp.pop %v3033
    %v3037 = vmul.f32 %v3033, %v3036
    %v3038 = vsub.f32 1.0, %v3037
    %v3039 = vmul.f32 %v3036, %v3038
    %v3040 = vadd.f32 %v3036, %v3039
    %vm3041 = vweird.f32 %v3033
    %vm3042 = vweird.f32 %v3036
    %vm3043 = vmor %vm3041, %vm3042
    %v3044 = vsel %vm3043, %v3036, %v3040
    %v3045 = vand.u32 2147483647, %v3033
    %vm3046 = vcmp.eq.f32.partialorder %v3045, 8.507059e+37
    %v3047 = vand.u32 %v3033, 2147483648
    %v3048 = vor.u32 1.1754944e-38, %v3047
    %v3049 = vsel %vm3046, %v3048, %v3044
    %v3050 = vmul.f32 1.0, %v3049
    %v3051 = vrcp.pop %v3034
    %v3052 = vmul.f32 %v3034, %v3051
    %v3053 = vsub.f32 1.0, %v3052
    %v3054 = vmul.f32 %v3051, %v3053
    %v3055 = vadd.f32 %v3051, %v3054
    %vm3056 = vweird.f32 %v3034
    %vm3057 = vweird.f32 %v3051
    %vm3058 = vmor %vm3056, %vm3057
    %v3059 = vsel %vm3058, %v3051, %v3055
    %v3060 = vand.u32 2147483647, %v3034
    %vm3061 = vcmp.eq.f32.partialorder %v3060, 8.507059e+37
    %v3062 = vand.u32 %v3034, 2147483648
    %v3063 = vor.u32 1.1754944e-38, %v3062
    %v3064 = vsel %vm3061, %v3063, %v3059
    %v3065 = vmul.f32 1.0, %v3064
    %v3066 = vrcp.pop %v3035
    %v3067 = vmul.f32 %v3035, %v3066
    %v3068 = vsub.f32 1.0, %v3067
    %v3069 = vmul.f32 %v3066, %v3068
    %v3070 = vadd.f32 %v3066, %v3069
    %vm3071 = vweird.f32 %v3035
    %vm3072 = vweird.f32 %v3066
    %vm3073 = vmor %vm3071, %vm3072
    %v3074 = vsel %vm3073, %v3066, %v3070
    %v3075 = vand.u32 2147483647, %v3035
    %vm3076 = vcmp.eq.f32.partialorder %v3075, 8.507059e+37
    %v3077 = vand.u32 %v3035, 2147483648
    %v3078 = vor.u32 1.1754944e-38, %v3077
    %v3079 = vsel %vm3076, %v3078, %v3074
    %v3080 = vmul.f32 1.0, %v3079
    %v3081 = vtanh.pop %v3023
    %v3082 = vmul.f32 %v3065, %v2933
    %v3083 = vmul.f32 %v3050, %v3081
    %v3084 = vadd.f32 %v3082, %v3083
    %v3085 = vtanh.pop %v3084
    %v3086 = vmul.f32 %v3080, %v3085
    %v3087 = vld [vmem:[#allocation2 + $0x80] sm:$0xff]
    %v3088 = vld [vmem:[#allocation2 + $0x88] sm:$0xff]
    %v3089 = vld [vmem:[#allocation2 + $0x90] sm:$0xff]
    %v3090 = vld [vmem:[#allocation2 + $0x98] sm:$0xff]
    %3091 = vmatpush.msra.mxu0 %v2483
    %3092 = vmatpush.msra.mxu0 %v2479
    %3093 = vmatpush.msra.mxu0 %v2475
    %3094 = vmatpush.msra.mxu0 %v2471
    %3095 = vmatpush.msra.mxu0 %v2467
    %3096 = vmatpush.msra.mxu0 %v2463
    %3097 = vmatpush.msra.mxu0 %v2459
    %3098 = vmatpush.msra.mxu0 %v2455
    %3099 = vmatpush.msra.mxu0 %v2451
    %3100 = vmatpush.msra.mxu0 %v2447
    %3101 = vmatpush.msra.mxu0 %v2443
    %3102 = vmatpush.msra.mxu0 %v2439
    %3103 = vmatpush.msra.mxu0 %v2435
    %3104 = vmatpush.msra.mxu0 %v2431
    %3105 = vmatpush.msra.mxu0 %v2427
    %3106 = vmatpush.msra.mxu0 %v2423
    %3107 = vmatmul.f32.gmra.mxu0 %v3086
    %v3108 = vpop.f32.mrf.mxu0
    %v3109 = vadd.f32 0.0, %v3108
    %3110 = vdwg.mxu0
    %3111 = vmatpush.msra.mxu0 %v2484
    %3112 = vmatpush.msra.mxu0 %v2480
    %3113 = vmatpush.msra.mxu0 %v2476
    %3114 = vmatpush.msra.mxu0 %v2472
    %3115 = vmatpush.msra.mxu0 %v2468
    %3116 = vmatpush.msra.mxu0 %v2464
    %3117 = vmatpush.msra.mxu0 %v2460
    %3118 = vmatpush.msra.mxu0 %v2456
    %3119 = vmatpush.msra.mxu0 %v2452
    %3120 = vmatpush.msra.mxu0 %v2448
    %3121 = vmatpush.msra.mxu0 %v2444
    %3122 = vmatpush.msra.mxu0 %v2440
    %3123 = vmatpush.msra.mxu0 %v2436
    %3124 = vmatpush.msra.mxu0 %v2432
    %3125 = vmatpush.msra.mxu0 %v2428
    %3126 = vmatpush.msra.mxu0 %v2424
    %3127 = vmatmul.f32.gmra.mxu0 %v3086
    %v3128 = vpop.f32.mrf.mxu0
    %v3129 = vadd.f32 0.0, %v3128
    %3130 = vdwg.mxu0
    %3131 = vmatpush.msra.mxu0 %v2485
    %3132 = vmatpush.msra.mxu0 %v2481
    %3133 = vmatpush.msra.mxu0 %v2477
    %3134 = vmatpush.msra.mxu0 %v2473
    %3135 = vmatpush.msra.mxu0 %v2469
    %3136 = vmatpush.msra.mxu0 %v2465
    %3137 = vmatpush.msra.mxu0 %v2461
    %3138 = vmatpush.msra.mxu0 %v2457
    %3139 = vmatpush.msra.mxu0 %v2453
    %3140 = vmatpush.msra.mxu0 %v2449
    %3141 = vmatpush.msra.mxu0 %v2445
    %3142 = vmatpush.msra.mxu0 %v2441
    %3143 = vmatpush.msra.mxu0 %v2437
    %3144 = vmatpush.msra.mxu0 %v2433
    %3145 = vmatpush.msra.mxu0 %v2429
    %3146 = vmatpush.msra.mxu0 %v2425
    %3147 = vmatmul.f32.gmra.mxu0 %v3086
    %v3148 = vpop.f32.mrf.mxu0
    %v3149 = vadd.f32 0.0, %v3148
    %3150 = vdwg.mxu0
    %3151 = vmatpush.msra.mxu0 %v2486
    %3152 = vmatpush.msra.mxu0 %v2482
    %3153 = vmatpush.msra.mxu0 %v2478
    %3154 = vmatpush.msra.mxu0 %v2474
    %3155 = vmatpush.msra.mxu0 %v2470
    %3156 = vmatpush.msra.mxu0 %v2466
    %3157 = vmatpush.msra.mxu0 %v2462
    %3158 = vmatpush.msra.mxu0 %v2458
    %3159 = vmatpush.msra.mxu0 %v2454
    %3160 = vmatpush.msra.mxu0 %v2450
    %3161 = vmatpush.msra.mxu0 %v2446
    %3162 = vmatpush.msra.mxu0 %v2442
    %3163 = vmatpush.msra.mxu0 %v2438
    %3164 = vmatpush.msra.mxu0 %v2434
    %3165 = vmatpush.msra.mxu0 %v2430
    %3166 = vmatpush.msra.mxu0 %v2426
    %3167 = vmatmul.f32.gmra.mxu0 %v3086
    %v3168 = vpop.f32.mrf.mxu0
    %v3169 = vadd.f32 0.0, %v3168
    %3170 = vdwg.mxu0
    %v3171 = vadd.f32 %v3087, %v3109
    %v3172 = vadd.f32 %v3088, %v3129
    %v3173 = vadd.f32 %v3089, %v3149
    %v3174 = vadd.f32 %v3090, %v3169
    %v3175 = vxor.u32 %v3171, 2147483648
    %v3176 = vxor.u32 %v3172, 2147483648
    %v3177 = vxor.u32 %v3173, 2147483648
    %v3178 = vmul.f32 %v3175, 1.442695
    %v3179 = vpow.pop %v3178
    %v3180 = vmul.f32 %v3176, 1.442695
    %v3181 = vpow.pop %v3180
    %v3182 = vmul.f32 %v3177, 1.442695
    %v3183 = vpow.pop %v3182
    %v3184 = vadd.f32 %v3179, 1.0
    %v3185 = vadd.f32 %v3181, 1.0
    %v3186 = vadd.f32 %v3183, 1.0
    %v3187 = vrcp.pop %v3184
    %v3188 = vmul.f32 %v3184, %v3187
    %v3189 = vsub.f32 1.0, %v3188
    %v3190 = vmul.f32 %v3187, %v3189
    %v3191 = vadd.f32 %v3187, %v3190
    %vm3192 = vweird.f32 %v3184
    %vm3193 = vweird.f32 %v3187
    %vm3194 = vmor %vm3192, %vm3193
    %v3195 = vsel %vm3194, %v3187, %v3191
    %v3196 = vand.u32 2147483647, %v3184
    %vm3197 = vcmp.eq.f32.partialorder %v3196, 8.507059e+37
    %v3198 = vand.u32 %v3184, 2147483648
    %v3199 = vor.u32 1.1754944e-38, %v3198
    %v3200 = vsel %vm3197, %v3199, %v3195
    %v3201 = vmul.f32 1.0, %v3200
    %v3202 = vrcp.pop %v3185
    %v3203 = vmul.f32 %v3185, %v3202
    %v3204 = vsub.f32 1.0, %v3203
    %v3205 = vmul.f32 %v3202, %v3204
    %v3206 = vadd.f32 %v3202, %v3205
    %vm3207 = vweird.f32 %v3185
    %vm3208 = vweird.f32 %v3202
    %vm3209 = vmor %vm3207, %vm3208
    %v3210 = vsel %vm3209, %v3202, %v3206
    %v3211 = vand.u32 2147483647, %v3185
    %vm3212 = vcmp.eq.f32.partialorder %v3211, 8.507059e+37
    %v3213 = vand.u32 %v3185, 2147483648
    %v3214 = vor.u32 1.1754944e-38, %v3213
    %v3215 = vsel %vm3212, %v3214, %v3210
    %v3216 = vmul.f32 1.0, %v3215
    %v3217 = vrcp.pop %v3186
    %v3218 = vmul.f32 %v3186, %v3217
    %v3219 = vsub.f32 1.0, %v3218
    %v3220 = vmul.f32 %v3217, %v3219
    %v3221 = vadd.f32 %v3217, %v3220
    %vm3222 = vweird.f32 %v3186
    %vm3223 = vweird.f32 %v3217
    %vm3224 = vmor %vm3222, %vm3223
    %v3225 = vsel %vm3224, %v3217, %v3221
    %v3226 = vand.u32 2147483647, %v3186
    %vm3227 = vcmp.eq.f32.partialorder %v3226, 8.507059e+37
    %v3228 = vand.u32 %v3186, 2147483648
    %v3229 = vor.u32 1.1754944e-38, %v3228
    %v3230 = vsel %vm3227, %v3229, %v3225
    %v3231 = vmul.f32 1.0, %v3230
    %v3232 = vtanh.pop %v3174
    %v3233 = vmul.f32 %v3216, %v3084
    %v3234 = vmul.f32 %v3201, %v3232
    %v3235 = vadd.f32 %v3233, %v3234
    %v3236 = vtanh.pop %v3235
    %v3237 = vmul.f32 %v3231, %v3236
    %v3238 = vld [vmem:[#allocation2 + $0xa0] sm:$0xff]
    %v3239 = vld [vmem:[#allocation2 + $0xa8] sm:$0xff]
    %v3240 = vld [vmem:[#allocation2 + $0xb0] sm:$0xff]
    %v3241 = vld [vmem:[#allocation2 + $0xb8] sm:$0xff]
    %3242 = vmatpush.msra.mxu0 %v2483
    %3243 = vmatpush.msra.mxu0 %v2479
    %3244 = vmatpush.msra.mxu0 %v2475
    %3245 = vmatpush.msra.mxu0 %v2471
    %3246 = vmatpush.msra.mxu0 %v2467
    %3247 = vmatpush.msra.mxu0 %v2463
    %3248 = vmatpush.msra.mxu0 %v2459
    %3249 = vmatpush.msra.mxu0 %v2455
    %3250 = vmatpush.msra.mxu0 %v2451
    %3251 = vmatpush.msra.mxu0 %v2447
    %3252 = vmatpush.msra.mxu0 %v2443
    %3253 = vmatpush.msra.mxu0 %v2439
    %3254 = vmatpush.msra.mxu0 %v2435
    %3255 = vmatpush.msra.mxu0 %v2431
    %3256 = vmatpush.msra.mxu0 %v2427
    %3257 = vmatpush.msra.mxu0 %v2423
    %3258 = vmatmul.f32.gmra.mxu0 %v3237
    %v3259 = vpop.f32.mrf.mxu0
    %v3260 = vadd.f32 0.0, %v3259
    %3261 = vdwg.mxu0
    %3262 = vmatpush.msra.mxu0 %v2484
    %3263 = vmatpush.msra.mxu0 %v2480
    %3264 = vmatpush.msra.mxu0 %v2476
    %3265 = vmatpush.msra.mxu0 %v2472
    %3266 = vmatpush.msra.mxu0 %v2468
    %3267 = vmatpush.msra.mxu0 %v2464
    %3268 = vmatpush.msra.mxu0 %v2460
    %3269 = vmatpush.msra.mxu0 %v2456
    %3270 = vmatpush.msra.mxu0 %v2452
    %3271 = vmatpush.msra.mxu0 %v2448
    %3272 = vmatpush.msra.mxu0 %v2444
    %3273 = vmatpush.msra.mxu0 %v2440
    %3274 = vmatpush.msra.mxu0 %v2436
    %3275 = vmatpush.msra.mxu0 %v2432
    %3276 = vmatpush.msra.mxu0 %v2428
    %3277 = vmatpush.msra.mxu0 %v2424
    %3278 = vmatmul.f32.gmra.mxu0 %v3237
    %v3279 = vpop.f32.mrf.mxu0
    %v3280 = vadd.f32 0.0, %v3279
    %3281 = vdwg.mxu0
    %3282 = vmatpush.msra.mxu0 %v2485
    %3283 = vmatpush.msra.mxu0 %v2481
    %3284 = vmatpush.msra.mxu0 %v2477
    %3285 = vmatpush.msra.mxu0 %v2473
    %3286 = vmatpush.msra.mxu0 %v2469
    %3287 = vmatpush.msra.mxu0 %v2465
    %3288 = vmatpush.msra.mxu0 %v2461
    %3289 = vmatpush.msra.mxu0 %v2457
    %3290 = vmatpush.msra.mxu0 %v2453
    %3291 = vmatpush.msra.mxu0 %v2449
    %3292 = vmatpush.msra.mxu0 %v2445
    %3293 = vmatpush.msra.mxu0 %v2441
    %3294 = vmatpush.msra.mxu0 %v2437
    %3295 = vmatpush.msra.mxu0 %v2433
    %3296 = vmatpush.msra.mxu0 %v2429
    %3297 = vmatpush.msra.mxu0 %v2425
    %3298 = vmatmul.f32.gmra.mxu0 %v3237
    %v3299 = vpop.f32.mrf.mxu0
    %v3300 = vadd.f32 0.0, %v3299
    %3301 = vdwg.mxu0
    %3302 = vmatpush.msra.mxu0 %v2486
    %3303 = vmatpush.msra.mxu0 %v2482
    %3304 = vmatpush.msra.mxu0 %v2478
    %3305 = vmatpush.msra.mxu0 %v2474
    %3306 = vmatpush.msra.mxu0 %v2470
    %3307 = vmatpush.msra.mxu0 %v2466
    %3308 = vmatpush.msra.mxu0 %v2462
    %3309 = vmatpush.msra.mxu0 %v2458
    %3310 = vmatpush.msra.mxu0 %v2454
    %3311 = vmatpush.msra.mxu0 %v2450
    %3312 = vmatpush.msra.mxu0 %v2446
    %3313 = vmatpush.msra.mxu0 %v2442
    %3314 = vmatpush.msra.mxu0 %v2438
    %3315 = vmatpush.msra.mxu0 %v2434
    %3316 = vmatpush.msra.mxu0 %v2430
    %3317 = vmatpush.msra.mxu0 %v2426
    %3318 = vmatmul.f32.gmra.mxu0 %v3237
    %v3319 = vpop.f32.mrf.mxu0
    %v3320 = vadd.f32 0.0, %v3319
    %3321 = vdwg.mxu0
    %v3322 = vadd.f32 %v3238, %v3260
    %v3323 = vadd.f32 %v3239, %v3280
    %v3324 = vadd.f32 %v3240, %v3300
    %v3325 = vadd.f32 %v3241, %v3320
    %v3326 = vxor.u32 %v3322, 2147483648
    %v3327 = vxor.u32 %v3323, 2147483648
    %v3328 = vxor.u32 %v3324, 2147483648
    %v3329 = vmul.f32 %v3326, 1.442695
    %v3330 = vpow.pop %v3329
    %v3331 = vmul.f32 %v3327, 1.442695
    %v3332 = vpow.pop %v3331
    %v3333 = vmul.f32 %v3328, 1.442695
    %v3334 = vpow.pop %v3333
    %v3335 = vadd.f32 %v3330, 1.0
    %v3336 = vadd.f32 %v3332, 1.0
    %v3337 = vadd.f32 %v3334, 1.0
    %v3338 = vrcp.pop %v3335
    %v3339 = vmul.f32 %v3335, %v3338
    %v3340 = vsub.f32 1.0, %v3339
    %v3341 = vmul.f32 %v3338, %v3340
    %v3342 = vadd.f32 %v3338, %v3341
    %vm3343 = vweird.f32 %v3335
    %vm3344 = vweird.f32 %v3338
    %vm3345 = vmor %vm3343, %vm3344
    %v3346 = vsel %vm3345, %v3338, %v3342
    %v3347 = vand.u32 2147483647, %v3335
    %vm3348 = vcmp.eq.f32.partialorder %v3347, 8.507059e+37
    %v3349 = vand.u32 %v3335, 2147483648
    %v3350 = vor.u32 1.1754944e-38, %v3349
    %v3351 = vsel %vm3348, %v3350, %v3346
    %v3352 = vmul.f32 1.0, %v3351
    %v3353 = vrcp.pop %v3336
    %v3354 = vmul.f32 %v3336, %v3353
    %v3355 = vsub.f32 1.0, %v3354
    %v3356 = vmul.f32 %v3353, %v3355
    %v3357 = vadd.f32 %v3353, %v3356
    %vm3358 = vweird.f32 %v3336
    %vm3359 = vweird.f32 %v3353
    %vm3360 = vmor %vm3358, %vm3359
    %v3361 = vsel %vm3360, %v3353, %v3357
    %v3362 = vand.u32 2147483647, %v3336
    %vm3363 = vcmp.eq.f32.partialorder %v3362, 8.507059e+37
    %v3364 = vand.u32 %v3336, 2147483648
    %v3365 = vor.u32 1.1754944e-38, %v3364
    %v3366 = vsel %vm3363, %v3365, %v3361
    %v3367 = vmul.f32 1.0, %v3366
    %v3368 = vrcp.pop %v3337
    %v3369 = vmul.f32 %v3337, %v3368
    %v3370 = vsub.f32 1.0, %v3369
    %v3371 = vmul.f32 %v3368, %v3370
    %v3372 = vadd.f32 %v3368, %v3371
    %vm3373 = vweird.f32 %v3337
    %vm3374 = vweird.f32 %v3368
    %vm3375 = vmor %vm3373, %vm3374
    %v3376 = vsel %vm3375, %v3368, %v3372
    %v3377 = vand.u32 2147483647, %v3337
    %vm3378 = vcmp.eq.f32.partialorder %v3377, 8.507059e+37
    %v3379 = vand.u32 %v3337, 2147483648
    %v3380 = vor.u32 1.1754944e-38, %v3379
    %v3381 = vsel %vm3378, %v3380, %v3376
    %v3382 = vmul.f32 1.0, %v3381
    %v3383 = vtanh.pop %v3325
    %v3384 = vmul.f32 %v3367, %v3235
    %v3385 = vmul.f32 %v3352, %v3383
    %v3386 = vadd.f32 %v3384, %v3385
    %v3387 = vtanh.pop %v3386
    %v3388 = vmul.f32 %v3382, %v3387
    %v3389 = vld [vmem:[#allocation2 + $0xc0] sm:$0xff]
    %v3390 = vld [vmem:[#allocation2 + $0xc8] sm:$0xff]
    %v3391 = vld [vmem:[#allocation2 + $0xd0] sm:$0xff]
    %v3392 = vld [vmem:[#allocation2 + $0xd8] sm:$0xff]
    %3393 = vmatpush.msra.mxu0 %v2483
    %3394 = vmatpush.msra.mxu0 %v2479
    %3395 = vmatpush.msra.mxu0 %v2475
    %3396 = vmatpush.msra.mxu0 %v2471
    %3397 = vmatpush.msra.mxu0 %v2467
    %3398 = vmatpush.msra.mxu0 %v2463
    %3399 = vmatpush.msra.mxu0 %v2459
    %3400 = vmatpush.msra.mxu0 %v2455
    %3401 = vmatpush.msra.mxu0 %v2451
    %3402 = vmatpush.msra.mxu0 %v2447
    %3403 = vmatpush.msra.mxu0 %v2443
    %3404 = vmatpush.msra.mxu0 %v2439
    %3405 = vmatpush.msra.mxu0 %v2435
    %3406 = vmatpush.msra.mxu0 %v2431
    %3407 = vmatpush.msra.mxu0 %v2427
    %3408 = vmatpush.msra.mxu0 %v2423
    %3409 = vmatmul.f32.gmra.mxu0 %v3388
    %v3410 = vpop.f32.mrf.mxu0
    %v3411 = vadd.f32 0.0, %v3410
    %3412 = vdwg.mxu0
    %3413 = vmatpush.msra.mxu0 %v2484
    %3414 = vmatpush.msra.mxu0 %v2480
    %3415 = vmatpush.msra.mxu0 %v2476
    %3416 = vmatpush.msra.mxu0 %v2472
    %3417 = vmatpush.msra.mxu0 %v2468
    %3418 = vmatpush.msra.mxu0 %v2464
    %3419 = vmatpush.msra.mxu0 %v2460
    %3420 = vmatpush.msra.mxu0 %v2456
    %3421 = vmatpush.msra.mxu0 %v2452
    %3422 = vmatpush.msra.mxu0 %v2448
    %3423 = vmatpush.msra.mxu0 %v2444
    %3424 = vmatpush.msra.mxu0 %v2440
    %3425 = vmatpush.msra.mxu0 %v2436
    %3426 = vmatpush.msra.mxu0 %v2432
    %3427 = vmatpush.msra.mxu0 %v2428
    %3428 = vmatpush.msra.mxu0 %v2424
    %3429 = vmatmul.f32.gmra.mxu0 %v3388
    %v3430 = vpop.f32.mrf.mxu0
    %v3431 = vadd.f32 0.0, %v3430
    %3432 = vdwg.mxu0
    %3433 = vmatpush.msra.mxu0 %v2485
    %3434 = vmatpush.msra.mxu0 %v2481
    %3435 = vmatpush.msra.mxu0 %v2477
    %3436 = vmatpush.msra.mxu0 %v2473
    %3437 = vmatpush.msra.mxu0 %v2469
    %3438 = vmatpush.msra.mxu0 %v2465
    %3439 = vmatpush.msra.mxu0 %v2461
    %3440 = vmatpush.msra.mxu0 %v2457
    %3441 = vmatpush.msra.mxu0 %v2453
    %3442 = vmatpush.msra.mxu0 %v2449
    %3443 = vmatpush.msra.mxu0 %v2445
    %3444 = vmatpush.msra.mxu0 %v2441
    %3445 = vmatpush.msra.mxu0 %v2437
    %3446 = vmatpush.msra.mxu0 %v2433
    %3447 = vmatpush.msra.mxu0 %v2429
    %3448 = vmatpush.msra.mxu0 %v2425
    %3449 = vmatmul.f32.gmra.mxu0 %v3388
    %v3450 = vpop.f32.mrf.mxu0
    %v3451 = vadd.f32 0.0, %v3450
    %3452 = vdwg.mxu0
    %3453 = vmatpush.msra.mxu0 %v2486
    %3454 = vmatpush.msra.mxu0 %v2482
    %3455 = vmatpush.msra.mxu0 %v2478
    %3456 = vmatpush.msra.mxu0 %v2474
    %3457 = vmatpush.msra.mxu0 %v2470
    %3458 = vmatpush.msra.mxu0 %v2466
    %3459 = vmatpush.msra.mxu0 %v2462
    %3460 = vmatpush.msra.mxu0 %v2458
    %3461 = vmatpush.msra.mxu0 %v2454
    %3462 = vmatpush.msra.mxu0 %v2450
    %3463 = vmatpush.msra.mxu0 %v2446
    %3464 = vmatpush.msra.mxu0 %v2442
    %3465 = vmatpush.msra.mxu0 %v2438
    %3466 = vmatpush.msra.mxu0 %v2434
    %3467 = vmatpush.msra.mxu0 %v2430
    %3468 = vmatpush.msra.mxu0 %v2426
    %3469 = vmatmul.f32.gmra.mxu0 %v3388
    %v3470 = vpop.f32.mrf.mxu0
    %v3471 = vadd.f32 0.0, %v3470
    %3472 = vdwg.mxu0
    %v3473 = vadd.f32 %v3389, %v3411
    %v3474 = vadd.f32 %v3390, %v3431
    %v3475 = vadd.f32 %v3391, %v3451
    %v3476 = vadd.f32 %v3392, %v3471
    %v3477 = vxor.u32 %v3473, 2147483648
    %v3478 = vxor.u32 %v3474, 2147483648
    %v3479 = vxor.u32 %v3475, 2147483648
    %v3480 = vmul.f32 %v3477, 1.442695
    %v3481 = vpow.pop %v3480
    %v3482 = vmul.f32 %v3478, 1.442695
    %v3483 = vpow.pop %v3482
    %v3484 = vmul.f32 %v3479, 1.442695
    %v3485 = vpow.pop %v3484
    %v3486 = vadd.f32 %v3481, 1.0
    %v3487 = vadd.f32 %v3483, 1.0
    %v3488 = vadd.f32 %v3485, 1.0
    %v3489 = vrcp.pop %v3486
    %v3490 = vmul.f32 %v3486, %v3489
    %v3491 = vsub.f32 1.0, %v3490
    %v3492 = vmul.f32 %v3489, %v3491
    %v3493 = vadd.f32 %v3489, %v3492
    %vm3494 = vweird.f32 %v3486
    %vm3495 = vweird.f32 %v3489
    %vm3496 = vmor %vm3494, %vm3495
    %v3497 = vsel %vm3496, %v3489, %v3493
    %v3498 = vand.u32 2147483647, %v3486
    %vm3499 = vcmp.eq.f32.partialorder %v3498, 8.507059e+37
    %v3500 = vand.u32 %v3486, 2147483648
    %v3501 = vor.u32 1.1754944e-38, %v3500
    %v3502 = vsel %vm3499, %v3501, %v3497
    %v3503 = vmul.f32 1.0, %v3502
    %v3504 = vrcp.pop %v3487
    %v3505 = vmul.f32 %v3487, %v3504
    %v3506 = vsub.f32 1.0, %v3505
    %v3507 = vmul.f32 %v3504, %v3506
    %v3508 = vadd.f32 %v3504, %v3507
    %vm3509 = vweird.f32 %v3487
    %vm3510 = vweird.f32 %v3504
    %vm3511 = vmor %vm3509, %vm3510
    %v3512 = vsel %vm3511, %v3504, %v3508
    %v3513 = vand.u32 2147483647, %v3487
    %vm3514 = vcmp.eq.f32.partialorder %v3513, 8.507059e+37
    %v3515 = vand.u32 %v3487, 2147483648
    %v3516 = vor.u32 1.1754944e-38, %v3515
    %v3517 = vsel %vm3514, %v3516, %v3512
    %v3518 = vmul.f32 1.0, %v3517
    %v3519 = vrcp.pop %v3488
    %v3520 = vmul.f32 %v3488, %v3519
    %v3521 = vsub.f32 1.0, %v3520
    %v3522 = vmul.f32 %v3519, %v3521
    %v3523 = vadd.f32 %v3519, %v3522
    %vm3524 = vweird.f32 %v3488
    %vm3525 = vweird.f32 %v3519
    %vm3526 = vmor %vm3524, %vm3525
    %v3527 = vsel %vm3526, %v3519, %v3523
    %v3528 = vand.u32 2147483647, %v3488
    %vm3529 = vcmp.eq.f32.partialorder %v3528, 8.507059e+37
    %v3530 = vand.u32 %v3488, 2147483648
    %v3531 = vor.u32 1.1754944e-38, %v3530
    %v3532 = vsel %vm3529, %v3531, %v3527
    %v3533 = vmul.f32 1.0, %v3532
    %v3534 = vtanh.pop %v3476
    %v3535 = vmul.f32 %v3518, %v3386
    %v3536 = vmul.f32 %v3503, %v3534
    %v3537 = vadd.f32 %v3535, %v3536
    %v3538 = vtanh.pop %v3537
    %v3539 = vmul.f32 %v3533, %v3538
    %v3540 = vld [vmem:[#allocation2 + $0xe0] sm:$0xff]
    %v3541 = vld [vmem:[#allocation2 + $0xe8] sm:$0xff]
    %v3542 = vld [vmem:[#allocation2 + $0xf0] sm:$0xff]
    %v3543 = vld [vmem:[#allocation2 + $0xf8] sm:$0xff]
    %3544 = vmatpush.msra.mxu0 %v2483
    %3545 = vmatpush.msra.mxu0 %v2479
    %3546 = vmatpush.msra.mxu0 %v2475
    %3547 = vmatpush.msra.mxu0 %v2471
    %3548 = vmatpush.msra.mxu0 %v2467
    %3549 = vmatpush.msra.mxu0 %v2463
    %3550 = vmatpush.msra.mxu0 %v2459
    %3551 = vmatpush.msra.mxu0 %v2455
    %3552 = vmatpush.msra.mxu0 %v2451
    %3553 = vmatpush.msra.mxu0 %v2447
    %3554 = vmatpush.msra.mxu0 %v2443
    %3555 = vmatpush.msra.mxu0 %v2439
    %3556 = vmatpush.msra.mxu0 %v2435
    %3557 = vmatpush.msra.mxu0 %v2431
    %3558 = vmatpush.msra.mxu0 %v2427
    %3559 = vmatpush.msra.mxu0 %v2423
    %3560 = vmatmul.f32.gmra.mxu0 %v3539
    %v3561 = vpop.f32.mrf.mxu0
    %v3562 = vadd.f32 0.0, %v3561
    %3563 = vdwg.mxu0
    %3564 = vmatpush.msra.mxu0 %v2484
    %3565 = vmatpush.msra.mxu0 %v2480
    %3566 = vmatpush.msra.mxu0 %v2476
    %3567 = vmatpush.msra.mxu0 %v2472
    %3568 = vmatpush.msra.mxu0 %v2468
    %3569 = vmatpush.msra.mxu0 %v2464
    %3570 = vmatpush.msra.mxu0 %v2460
    %3571 = vmatpush.msra.mxu0 %v2456
    %3572 = vmatpush.msra.mxu0 %v2452
    %3573 = vmatpush.msra.mxu0 %v2448
    %3574 = vmatpush.msra.mxu0 %v2444
    %3575 = vmatpush.msra.mxu0 %v2440
    %3576 = vmatpush.msra.mxu0 %v2436
    %3577 = vmatpush.msra.mxu0 %v2432
    %3578 = vmatpush.msra.mxu0 %v2428
    %3579 = vmatpush.msra.mxu0 %v2424
    %3580 = vmatmul.f32.gmra.mxu0 %v3539
    %v3581 = vpop.f32.mrf.mxu0
    %v3582 = vadd.f32 0.0, %v3581
    %3583 = vdwg.mxu0
    %3584 = vmatpush.msra.mxu0 %v2485
    %3585 = vmatpush.msra.mxu0 %v2481
    %3586 = vmatpush.msra.mxu0 %v2477
    %3587 = vmatpush.msra.mxu0 %v2473
    %3588 = vmatpush.msra.mxu0 %v2469
    %3589 = vmatpush.msra.mxu0 %v2465
    %3590 = vmatpush.msra.mxu0 %v2461
    %3591 = vmatpush.msra.mxu0 %v2457
    %3592 = vmatpush.msra.mxu0 %v2453
    %3593 = vmatpush.msra.mxu0 %v2449
    %3594 = vmatpush.msra.mxu0 %v2445
    %3595 = vmatpush.msra.mxu0 %v2441
    %3596 = vmatpush.msra.mxu0 %v2437
    %3597 = vmatpush.msra.mxu0 %v2433
    %3598 = vmatpush.msra.mxu0 %v2429
    %3599 = vmatpush.msra.mxu0 %v2425
    %3600 = vmatmul.f32.gmra.mxu0 %v3539
    %v3601 = vpop.f32.mrf.mxu0
    %v3602 = vadd.f32 0.0, %v3601
    %3603 = vdwg.mxu0
    %3604 = vmatpush.msra.mxu0 %v2486
    %3605 = vmatpush.msra.mxu0 %v2482
    %3606 = vmatpush.msra.mxu0 %v2478
    %3607 = vmatpush.msra.mxu0 %v2474
    %3608 = vmatpush.msra.mxu0 %v2470
    %3609 = vmatpush.msra.mxu0 %v2466
    %3610 = vmatpush.msra.mxu0 %v2462
    %3611 = vmatpush.msra.mxu0 %v2458
    %3612 = vmatpush.msra.mxu0 %v2454
    %3613 = vmatpush.msra.mxu0 %v2450
    %3614 = vmatpush.msra.mxu0 %v2446
    %3615 = vmatpush.msra.mxu0 %v2442
    %3616 = vmatpush.msra.mxu0 %v2438
    %3617 = vmatpush.msra.mxu0 %v2434
    %3618 = vmatpush.msra.mxu0 %v2430
    %3619 = vmatpush.msra.mxu0 %v2426
    %3620 = vmatmul.f32.gmra.mxu0 %v3539
    %v3621 = vpop.f32.mrf.mxu0
    %v3622 = vadd.f32 0.0, %v3621
    %3623 = vdwg.mxu0
    %v3624 = vadd.f32 %v3540, %v3562
    %v3625 = vadd.f32 %v3541, %v3582
    %v3626 = vadd.f32 %v3542, %v3602
    %v3627 = vadd.f32 %v3543, %v3622
    %v3628 = vxor.u32 %v3624, 2147483648
    %v3629 = vxor.u32 %v3625, 2147483648
    %v3630 = vxor.u32 %v3626, 2147483648
    %v3631 = vmul.f32 %v3628, 1.442695
    %v3632 = vpow.pop %v3631
    %v3633 = vmul.f32 %v3629, 1.442695
    %v3634 = vpow.pop %v3633
    %v3635 = vmul.f32 %v3630, 1.442695
    %v3636 = vpow.pop %v3635
    %v3637 = vadd.f32 %v3632, 1.0
    %v3638 = vadd.f32 %v3634, 1.0
    %v3639 = vadd.f32 %v3636, 1.0
    %v3640 = vrcp.pop %v3637
    %v3641 = vmul.f32 %v3637, %v3640
    %v3642 = vsub.f32 1.0, %v3641
    %v3643 = vmul.f32 %v3640, %v3642
    %v3644 = vadd.f32 %v3640, %v3643
    %vm3645 = vweird.f32 %v3637
    %vm3646 = vweird.f32 %v3640
    %vm3647 = vmor %vm3645, %vm3646
    %v3648 = vsel %vm3647, %v3640, %v3644
    %v3649 = vand.u32 2147483647, %v3637
    %vm3650 = vcmp.eq.f32.partialorder %v3649, 8.507059e+37
    %v3651 = vand.u32 %v3637, 2147483648
    %v3652 = vor.u32 1.1754944e-38, %v3651
    %v3653 = vsel %vm3650, %v3652, %v3648
    %v3654 = vmul.f32 1.0, %v3653
    %v3655 = vrcp.pop %v3638
    %v3656 = vmul.f32 %v3638, %v3655
    %v3657 = vsub.f32 1.0, %v3656
    %v3658 = vmul.f32 %v3655, %v3657
    %v3659 = vadd.f32 %v3655, %v3658
    %vm3660 = vweird.f32 %v3638
    %vm3661 = vweird.f32 %v3655
    %vm3662 = vmor %vm3660, %vm3661
    %v3663 = vsel %vm3662, %v3655, %v3659
    %v3664 = vand.u32 2147483647, %v3638
    %vm3665 = vcmp.eq.f32.partialorder %v3664, 8.507059e+37
    %v3666 = vand.u32 %v3638, 2147483648
    %v3667 = vor.u32 1.1754944e-38, %v3666
    %v3668 = vsel %vm3665, %v3667, %v3663
    %v3669 = vmul.f32 1.0, %v3668
    %v3670 = vrcp.pop %v3639
    %v3671 = vmul.f32 %v3639, %v3670
    %v3672 = vsub.f32 1.0, %v3671
    %v3673 = vmul.f32 %v3670, %v3672
    %v3674 = vadd.f32 %v3670, %v3673
    %vm3675 = vweird.f32 %v3639
    %vm3676 = vweird.f32 %v3670
    %vm3677 = vmor %vm3675, %vm3676
    %v3678 = vsel %vm3677, %v3670, %v3674
    %v3679 = vand.u32 2147483647, %v3639
    %vm3680 = vcmp.eq.f32.partialorder %v3679, 8.507059e+37
    %v3681 = vand.u32 %v3639, 2147483648
    %v3682 = vor.u32 1.1754944e-38, %v3681
    %v3683 = vsel %vm3680, %v3682, %v3678
    %v3684 = vmul.f32 1.0, %v3683
    %v3685 = vtanh.pop %v3627
    %v3686 = vmul.f32 %v3669, %v3537
    %v3687 = vmul.f32 %v3654, %v3685
    %v3688 = vadd.f32 %v3686, %v3687
    %v3689 = vtanh.pop %v3688
    %v3690 = vmul.f32 %v3684, %v3689
    %3691 = vst [vmem:[%s12] sm:$0xff] %v2139
    %3692 = vst [vmem:[%s12 + $0x8] sm:$0xff] %v3690
    %3693 = vst [vmem:[%s13] sm:$0xff] %v2137
    %3694 = vst [vmem:[%s13 + $0x8] sm:$0xff] %v3688
    %v3695 = vld [vmem:[#allocation11] sm:$0xff]
    %v3696 = vld [vmem:[#allocation11 + $0x8] sm:$0xff]
    %v3697 = vld [vmem:[#allocation11 + $0x10] sm:$0xff]
    %v3698 = vld [vmem:[#allocation11 + $0x18] sm:$0xff]
    %v3699 = vld [vmem:[#allocation11 + $0x20] sm:$0xff]
    %v3700 = vld [vmem:[#allocation11 + $0x28] sm:$0xff]
    %v3701 = vld [vmem:[#allocation11 + $0x30] sm:$0xff]
    %v3702 = vld [vmem:[#allocation11 + $0x38] sm:$0xff]
    %v3703 = vld [vmem:[#allocation11 + $0x40] sm:$0xff]
    %v3704 = vld [vmem:[#allocation11 + $0x48] sm:$0xff]
    %v3705 = vld [vmem:[#allocation11 + $0x50] sm:$0xff]
    %v3706 = vld [vmem:[#allocation11 + $0x58] sm:$0xff]
    %v3707 = vld [vmem:[#allocation11 + $0x60] sm:$0xff]
    %v3708 = vld [vmem:[#allocation11 + $0x68] sm:$0xff]
    %v3709 = vld [vmem:[#allocation11 + $0x70] sm:$0xff]
    %v3710 = vld [vmem:[#allocation11 + $0x78] sm:$0xff]
    %v3711 = vld [vmem:[%s8] sm:$0x1]
    %v3713 = vperm.slane %v3711, 0
    %3715 = vmatpush.msra.mxu0 %v3710
    %3716 = vmatpush.msra.mxu0 %v3709
    %3717 = vmatpush.msra.mxu0 %v3708
    %3718 = vmatpush.msra.mxu0 %v3707
    %3719 = vmatpush.msra.mxu0 %v3706
    %3720 = vmatpush.msra.mxu0 %v3705
    %3721 = vmatpush.msra.mxu0 %v3704
    %3722 = vmatpush.msra.mxu0 %v3703
    %3723 = vmatpush.msra.mxu0 %v3702
    %3724 = vmatpush.msra.mxu0 %v3701
    %3725 = vmatpush.msra.mxu0 %v3700
    %3726 = vmatpush.msra.mxu0 %v3699
    %3727 = vmatpush.msra.mxu0 %v3698
    %3728 = vmatpush.msra.mxu0 %v3697
    %3729 = vmatpush.msra.mxu0 %v3696
    %3730 = vmatpush.msra.mxu0 %v3695
    %3731 = vmatmul.f32.gmra.mxu0 %v3690
    %v3732 = vpop.f32.mrf.mxu0
    %v3733 = vadd.f32 %v3713, %v3732
    %3734 = vdwg.mxu0
    %v3735 = vmax.f32 %v3733, 0.0
    %v3736 = vld [vmem:[#allocation12] sm:$0xff]
    %v3737 = vld [vmem:[#allocation12 + $0x8] sm:$0xff]
    %v3738 = vld [vmem:[#allocation12 + $0x10] sm:$0xff]
    %v3739 = vld [vmem:[#allocation12 + $0x18] sm:$0xff]
    %v3740 = vld [vmem:[#allocation12 + $0x20] sm:$0xff]
    %v3741 = vld [vmem:[#allocation12 + $0x28] sm:$0xff]
    %v3742 = vld [vmem:[#allocation12 + $0x30] sm:$0xff]
    %v3743 = vld [vmem:[#allocation12 + $0x38] sm:$0xff]
    %v3744 = vld [vmem:[#allocation12 + $0x40] sm:$0xff]
    %v3745 = vld [vmem:[#allocation12 + $0x48] sm:$0xff]
    %v3746 = vld [vmem:[#allocation12 + $0x50] sm:$0xff]
    %v3747 = vld [vmem:[#allocation12 + $0x58] sm:$0xff]
    %v3748 = vld [vmem:[#allocation12 + $0x60] sm:$0xff]
    %v3749 = vld [vmem:[#allocation12 + $0x68] sm:$0xff]
    %v3750 = vld [vmem:[#allocation12 + $0x70] sm:$0xff]
    %v3751 = vld [vmem:[#allocation12 + $0x78] sm:$0xff]
    %v3752 = vld [vmem:[%s10] sm:$0x1]
    %v3754 = vperm.slane %v3752, 0
    %3756 = vmatpush.msra.mxu0 %v3751
    %3757 = vmatpush.msra.mxu0 %v3750
    %3758 = vmatpush.msra.mxu0 %v3749
    %3759 = vmatpush.msra.mxu0 %v3748
    %3760 = vmatpush.msra.mxu0 %v3747
    %3761 = vmatpush.msra.mxu0 %v3746
    %3762 = vmatpush.msra.mxu0 %v3745
    %3763 = vmatpush.msra.mxu0 %v3744
    %3764 = vmatpush.msra.mxu0 %v3743
    %3765 = vmatpush.msra.mxu0 %v3742
    %3766 = vmatpush.msra.mxu0 %v3741
    %3767 = vmatpush.msra.mxu0 %v3740
    %3768 = vmatpush.msra.mxu0 %v3739
    %3769 = vmatpush.msra.mxu0 %v3738
    %3770 = vmatpush.msra.mxu0 %v3737
    %3771 = vmatpush.msra.mxu0 %v3736
    %3772 = vmatmul.f32.gmra.mxu0 %v3735
    %v3773 = vpop.f32.mrf.mxu0
    %v3774 = vadd.f32 %v3754, %v3773
    %3775 = vdwg.mxu0
    %3776 = vst [vmem:[%s11] sm:$0xff] %v3774
    // Predicated region
    $region70: #{lstm_motion_predictor_forward.1} parent=1 // pred_check
      _
    $region71: #{lstm_motion_predictor_forward.1} parent=1 // pred_check_branch
      %3778 = sbr.rel (0) target = $region73
    $region72: #{lstm_motion_predictor_forward.1} parent=1 // pred_region
      _
    $region73: #{lstm_motion_predictor_forward.1} parent=1 // pred_fallthru
      _
    // Predicated region
    $region74: #{lstm_motion_predictor_forward.1} parent=1 // pred_check
      _
    $region75: #{lstm_motion_predictor_forward.1} parent=1 // pred_check_branch
      %3780 = sbr.rel (0) target = $region77
    $region76: #{lstm_motion_predictor_forward.1} parent=1 // pred_region
      _
    $region77: #{lstm_motion_predictor_forward.1} parent=1 // pred_fallthru
      _
    // Predicated region
    $region78: #{lstm_motion_predictor_forward.1} parent=1 // pred_check
      _
    $region79: #{lstm_motion_predictor_forward.1} parent=1 // pred_check_branch
      %3782 = sbr.rel (0) target = $region81
    $region80: #{lstm_motion_predictor_forward.1} parent=1 // pred_region
      _
    $region81: #{lstm_motion_predictor_forward.1} parent=1 // pred_fallthru
      _
    // Predicated region
    $region82: #{lstm_motion_predictor_forward.1} parent=1 // pred_check
      _
    $region83: #{lstm_motion_predictor_forward.1} parent=1 // pred_check_branch
      %3784 = sbr.rel (0) target = $region85
    $region84: #{lstm_motion_predictor_forward.1} parent=1 // pred_region
      _
    $region85: #{lstm_motion_predictor_forward.1} parent=1 // pred_fallthru
      _
    // Predicated region
    $region86: #{lstm_motion_predictor_forward.1} parent=1 // pred_check
      _
    $region87: #{lstm_motion_predictor_forward.1} parent=1 // pred_check_branch
      %3786 = sbr.rel (0) target = $region89
    $region88: #{lstm_motion_predictor_forward.1} parent=1 // pred_region
      _
    $region89: #{lstm_motion_predictor_forward.1} parent=1 // pred_fallthru
      _
    // Predicated region
    $region90: #{lstm_motion_predictor_forward.1} parent=1 // pred_check
      _
    $region91: #{lstm_motion_predictor_forward.1} parent=1 // pred_check_branch
      %3788 = sbr.rel (0) target = $region93
    $region92: #{lstm_motion_predictor_forward.1} parent=1 // pred_region
      _
    $region93: #{lstm_motion_predictor_forward.1} parent=1 // pred_fallthru
      _
    %3789 = vsyncpa [#allocation5], 1
    %3790 = vsyncpa [#allocation7], 1
    %3791 = vsyncpa [#allocation10], 1
    %3792 = vsyncpa [#allocation13], 1

</llo_original>
